<compile_context>
chip_gen: v6e
topology: v6e:2x2x1
jax: 0.10.0
libtpu: 0.0.40
codegen_flags: <defaults>
</compile_context>

<pallas_src>
import functools

import jax
import jax.numpy as jnp
from jax.experimental import pallas as pl
from jax.experimental.pallas import tpu as pltpu

ACT_DTYPE = jnp.bfloat16        # activations & weights on the MXU path
PARAM_F32 = jnp.float32         # LN gains / biases / matmul biases
VMEM_LIMIT_BYTES = 40 * 1024 * 1024   # explicit scoped-VMEM budget (v7x safe)


def _tile(dim, target):
    """Largest multiple-of-8 divisor of `dim` that is <= target.

    Returns the full dim if dim <= target.  Never silently returns the whole
    axis for large non-divisible dims unless no multiple-of-8 divisor exists.
    """
    if dim <= target:
        return dim
    t = (target // 8) * 8
    while t >= 8:
        if dim % t == 0:
            return t
        t -= 8
    # TODO(synk): pad + mask the ragged tail instead of whole-dim fallback.
    return dim


# ----------------------------- Pallas kernels -----------------------------

def _ln_stats(x, eps):
    """One-pass mean/var (sum + sum-of-squares) -> normalized x (f32)."""
    n = x.shape[-1]
    s1 = jnp.sum(x, axis=-1, keepdims=True)
    s2 = jnp.sum(x * x, axis=-1, keepdims=True)
    mu = s1 * (1.0 / n)
    var = jnp.maximum(s2 * (1.0 / n) - mu * mu, 0.0)
    return (x - mu) * jax.lax.rsqrt(var + eps)


def _ln_matmul_kernel(x_ref, g_ref, b_ref, w_ref, bias_ref, o_ref, *, eps, act):
    """y = act(LayerNorm(x) @ W + bias).  LN once per row tile (weight is the
    full (K, N) block, so there is no output-column axis to recompute over)."""
    x = x_ref[...].astype(jnp.float32)                        # (tm, K)
    xn = _ln_stats(x, eps)
    xn = (xn * g_ref[...] + b_ref[...]).astype(w_ref.dtype)   # bf16 for MXU
    y = jnp.dot(xn, w_ref[...], preferred_element_type=jnp.float32) + bias_ref[...]
    if act == "relu":
        y = jnp.maximum(y, 0.0)
    o_ref[...] = y.astype(o_ref.dtype)


def fused_ln_matmul(x, g, b, w, bias, *, act=None, eps=1e-6):
    """LayerNorm fused into the consuming matmul; weight-stationary.

    x:(M,K), w:(K,N).  Grid only over M; the (K,N) weight block has a constant
    index_map so it is DMA'd from HBM exactly once and stays VMEM-resident.
    """
    M, K = x.shape
    N = w.shape[1]
    tm = _tile(M, 256)            # tm<=256 keeps v7x (64 MiB VMEM) comfortable
    # TODO(synk): pipeline_mode=pl.Buffered(1) on the constant weight spec
    # would drop its second (unused) double buffer for extra VMEM headroom.
    return pl.pallas_call(
        functools.partial(_ln_matmul_kernel, eps=eps, act=act),
        out_shape=jax.ShapeDtypeStruct((M, N), x.dtype),
        grid=(M // tm,),
        in_specs=[pl.BlockSpec((tm, K), lambda i: (i, 0)),
                  pl.BlockSpec((1, K), lambda i: (0, 0)),
                  pl.BlockSpec((1, K), lambda i: (0, 0)),
                  pl.BlockSpec((K, N), lambda i: (0, 0)),    # resident weight
                  pl.BlockSpec((1, N), lambda i: (0, 0))],
        out_specs=pl.BlockSpec((tm, N), lambda i: (i, 0)),
        compiler_params=pltpu.CompilerParams(
            dimension_semantics=("parallel",),
            vmem_limit_bytes=VMEM_LIMIT_BYTES),
    )(x, g.reshape(1, K), b.reshape(1, K), w, bias.reshape(1, N))


def _matmul_res_kernel(*refs, with_ln, eps):
    """y = x @ W + bias + residual [; y = LayerNorm(y)] — single K block."""
    if with_ln:
        x_ref, w_ref, bias_ref, r_ref, g_ref, b_ref, o_ref = refs
    else:
        x_ref, w_ref, bias_ref, r_ref, o_ref = refs
        g_ref = b_ref = None
    y = jnp.dot(x_ref[...], w_ref[...], preferred_element_type=jnp.float32)
    y = y + bias_ref[...] + r_ref[...].astype(jnp.float32)
    if with_ln:
        y = _ln_stats(y, eps) * g_ref[...] + b_ref[...]
    o_ref[...] = y.astype(o_ref.dtype)


def matmul_bias_residual(x, w, bias, res, *, final_ln=None, eps=1e-6):
    """Residual add (and optional final LayerNorm) fused into the producing
    matmul; weight-stationary (full (K,N) weight resident, grid over M only).
    x:(M,K) w:(K,N) res:(M,N)."""
    M, K = x.shape
    N = w.shape[1]
    tm = _tile(M, 256)
    with_ln = final_ln is not None
    in_specs = [pl.BlockSpec((tm, K), lambda i: (i, 0)),
                pl.BlockSpec((K, N), lambda i: (0, 0)),       # resident weight
                pl.BlockSpec((1, N), lambda i: (0, 0)),
                pl.BlockSpec((tm, N), lambda i: (i, 0))]
    args = [x, w, bias.reshape(1, N), res]
    if with_ln:
        g, b = final_ln
        in_specs += [pl.BlockSpec((1, N), lambda i: (0, 0)),
                     pl.BlockSpec((1, N), lambda i: (0, 0))]
        args += [g.reshape(1, N), b.reshape(1, N)]
    return pl.pallas_call(
        functools.partial(_matmul_res_kernel, with_ln=with_ln, eps=eps),
        out_shape=jax.ShapeDtypeStruct((M, N), res.dtype),
        grid=(M // tm,),
        in_specs=in_specs,
        out_specs=pl.BlockSpec((tm, N), lambda i: (i, 0)),
        compiler_params=pltpu.CompilerParams(
            dimension_semantics=("parallel",),
            vmem_limit_bytes=VMEM_LIMIT_BYTES),
    )(*args)


def _mha_kernel(*refs, hp, dh, scale, has_mask):
    """Softmax attention for one (batch, head-block, query-tile).

    Heads are packed along the lane axis (>=128, up to 256 lanes) so the
    output store is lane-dense; q/k/v arrive as column slices of the fused QKV
    tensor (no transposes).  Each head's PV result is written directly into
    its column range of the output block — no concatenate temporary."""
    if has_mask:
        q_ref, k_ref, v_ref, mask_ref, o_ref = refs
    else:
        q_ref, k_ref, v_ref, o_ref = refs
        mask_ref = None

    q = q_ref[0]                      # (tq, hbw) bf16
    k = k_ref[0]                      # (S,  hbw) bf16
    v = v_ref[0]

    for h in range(hp):
        lo = h * dh
        qh, kh, vh = q[:, lo:lo + dh], k[:, lo:lo + dh], v[:, lo:lo + dh]
        s = jax.lax.dot_general(qh, kh, (((1,), (1,)), ((), ())),
                                preferred_element_type=jnp.float32) * scale
        if mask_ref is not None:
            s = s + mask_ref[0]                        # (1, S) additive bias
        m = jnp.max(s, axis=-1, keepdims=True)
        e = jnp.exp(s - m)
        denom = jnp.sum(e, axis=-1, keepdims=True)
        p = e * pl.reciprocal(denom, approx=True)      # EUP, free slot
        o_h = jnp.dot(p.astype(vh.dtype), vh, preferred_element_type=jnp.float32)
        o_ref[0, :, lo:lo + dh] = o_h.astype(o_ref.dtype)


def attention(qkv, mask_bias, *, n_heads, d_model, scale, target_lanes=256):
    """qkv: (B, S, 3*D) packed projections.  mask_bias: (B, 1, S) f32 or None.

    Heads packed to up to `target_lanes` (=256 for v6e/v7x MXU width; 128 is
    already optimal on v5e).  Query axis tiled to keep the (tq, S) score block
    near register-resident."""
    B, S, _ = qkv.shape
    dh = d_model // n_heads
    hp = 1
    while (hp < n_heads and hp * 2 * dh <= target_lanes
           and n_heads % (hp * 2) == 0):
        hp *= 2
    hbw = hp * dh
    assert hbw % 128 == 0, f"head-block width {hbw} must be a multiple of 128"
    nhb = n_heads // hp
    k_off = d_model // hbw
    v_off = 2 * d_model // hbw
    tq = _tile(S, 256)
    n_sq = S // tq

    in_specs = [pl.BlockSpec((1, tq, hbw), lambda b, j, sq: (b, sq, j)),
                pl.BlockSpec((1, S, hbw), lambda b, j, sq: (b, 0, k_off + j)),
                pl.BlockSpec((1, S, hbw), lambda b, j, sq: (b, 0, v_off + j))]
    args = [qkv, qkv, qkv]
    if mask_bias is not None:
        in_specs.append(pl.BlockSpec((1, 1, S), lambda b, j, sq: (b, 0, 0)))
        args.append(mask_bias)

    return pl.pallas_call(
        functools.partial(_mha_kernel, hp=hp, dh=dh, scale=scale,
                          has_mask=mask_bias is not None),
        out_shape=jax.ShapeDtypeStruct((B, S, d_model), qkv.dtype),
        grid=(B, nhb, n_sq),           # sq innermost -> K/V blocks reused
        in_specs=in_specs,
        out_specs=pl.BlockSpec((1, tq, hbw), lambda b, j, sq: (b, sq, j)),
        compiler_params=pltpu.CompilerParams(
            dimension_semantics=("parallel", "parallel", "parallel"),
            vmem_limit_bytes=VMEM_LIMIT_BYTES),
    )(*args)


def _vis_embed_kernel(vf_ref, wf_ref, bf_ref, bx_ref, wp_ref, bp_ref,
                      g_ref, b_ref, o_ref, *, eps, pos_dim):
    """LayerNorm(feat @ Wf + bf + box-proj + bp) fused in one kernel.
    The K=pos_dim(=4) box projection runs as VPU broadcast FMAs (no tiny MXU
    matmul); box coordinates stay in f32 to preserve precision."""
    h = (jnp.dot(vf_ref[...], wf_ref[...], preferred_element_type=jnp.float32)
         + bf_ref[...] + bp_ref[...])
    bx = bx_ref[...]                       # (tm, Pd) f32
    wp = wp_ref[...]                       # (Pd, D)  f32
    for pi in range(pos_dim):
        h = h + bx[:, pi:pi + 1] * wp[pi:pi + 1, :]
    y = _ln_stats(h, eps)
    o_ref[...] = (y * g_ref[...] + b_ref[...]).astype(o_ref.dtype)


def visual_embedding(vis_feat, boxes, p):
    # TODO(synk): exact VisualEmbedding definition (area feature, obj-id
    # embeddings, ...) is not in the provided source; approximated as
    # feat-proj + box-proj + LayerNorm, fully fused in one kernel.
    B, Nb, Fd = vis_feat.shape
    Pd = boxes.shape[-1]
    D = p['w_feat'].shape[1]
    M = B * Nb
    vf = vis_feat.reshape(M, Fd).astype(ACT_DTYPE)
    bx = boxes.reshape(M, Pd).astype(jnp.float32)      # keep boxes in f32
    tm = _tile(M, 256)
    out = pl.pallas_call(
        functools.partial(_vis_embed_kernel, eps=1e-6, pos_dim=Pd),
        out_shape=jax.ShapeDtypeStruct((M, D), ACT_DTYPE),
        grid=(M // tm,),
        in_specs=[pl.BlockSpec((tm, Fd), lambda i: (i, 0)),
                  pl.BlockSpec((Fd, D), lambda i: (0, 0)),
                  pl.BlockSpec((1, D), lambda i: (0, 0)),
                  pl.BlockSpec((tm, Pd), lambda i: (i, 0)),
                  pl.BlockSpec((Pd, D), lambda i: (0, 0)),
                  pl.BlockSpec((1, D), lambda i: (0, 0)),
                  pl.BlockSpec((1, D), lambda i: (0, 0)),
                  pl.BlockSpec((1, D), lambda i: (0, 0))],
        out_specs=pl.BlockSpec((tm, D), lambda i: (i, 0)),
        compiler_params=pltpu.CompilerParams(
            dimension_semantics=("parallel",),
            vmem_limit_bytes=VMEM_LIMIT_BYTES),
    )(vf, p['w_feat'], p['b_feat'].reshape(1, D),
      bx, p['w_pos'], p['b_pos'].reshape(1, D),
      p['ln_g'].reshape(1, D), p['ln_b'].reshape(1, D))
    return out.reshape(B, Nb, D)


# ------------------------------ model pieces ------------------------------

def encoder_block(x, mask_bias, p, n_heads, final_ln=None):
    """Pre-LN transformer block.  LN fused into the QKV / FFN-in matmuls,
    residuals fused into the out-proj / FFN-out matmuls; `final_ln` (if given)
    is fused into the FFN-out epilogue (used for the encoder's last block)."""
    B, S, D = x.shape
    dh = D // n_heads
    xf = x.reshape(B * S, D)

    # LN1 + fused QKV projection  (one (D, 3D) matmul instead of three)
    qkv = fused_ln_matmul(xf, p['ln1_g'], p['ln1_b'], p['w_qkv'], p['b_qkv'])
    qkv = qkv.reshape(B, S, 3 * D)

    attn = attention(qkv, mask_bias, n_heads=n_heads, d_model=D,
                     scale=1.0 / (dh ** 0.5))                    # (B, S, D)

    # out-projection with fused residual add
    xf = matmul_bias_residual(attn.reshape(B * S, D), p['wo'], p['bo'], xf)

    # LN2 + FFN-in (fused ReLU), then FFN-out with fused residual (+final LN)
    h = fused_ln_matmul(xf, p['ln2_g'], p['ln2_b'], p['w1'], p['b1'], act="relu")
    xf = matmul_bias_residual(h, p['w2'], p['b2'], xf, final_ln=final_ln)
    return xf.reshape(B, S, D)


def encoder_wrapper_forward(params, input_ids, attention_mask,
                            vis_feat, boxes, *, n_passages, n_heads):
    # --- FiD reshape: (bsz, total_len) -> (bsz * n_passages, passage_len) ---
    bsz, total_length = input_ids.shape
    passage_length = total_length // n_passages
    ids = input_ids.reshape(bsz * n_passages, passage_length)
    mask = attention_mask.reshape(bsz * n_passages,
                                  passage_length).astype(jnp.float32)
    mask_bias = ((1.0 - mask) * -1e9).reshape(bsz * n_passages, 1,
                                              passage_length)

    # --- text (T5-like) encoder ---
    h = params['embed'][ids]                   # glue: token-embedding gather
    n_layers = len(params['enc_layers'])
    for li, lp in enumerate(params['enc_layers']):
        fin = ((params['enc_final_g'], params['enc_final_b'])
               if li == n_layers - 1 else None)       # final LN fused in here
        h = encoder_block(h, mask_bias, lp, n_heads, final_ln=fin)
    BP, S, D = h.shape
    text_out = h.reshape(bsz, n_passages * passage_length, D)

    # --- visual branch (mask-free attention variant, no bias array) ---
    visual_emb = visual_embedding(vis_feat, boxes, params['vis_emb'])
    for bp in params['vis_blocks']:
        visual_emb = encoder_block(visual_emb, None, bp, n_heads)

    # --- concat visual tokens in front of all passage tokens (dim=1) ---
    # TODO(synk): write both branches directly into the concatenated buffer via
    # out_spec row offsets / input_output_aliases instead of this XLA concat.
    return jnp.concatenate([visual_emb, text_out], axis=1)


# ----------------------------- parameter init -----------------------------

def _w(key, shape, scale=0.02, dtype=ACT_DTYPE):
    return (jax.random.normal(key, shape, jnp.float32) * scale).astype(dtype)


def _block_params(key, d_model, d_ff):
    ks = jax.random.split(key, 4)
    return {
        'w_qkv': _w(ks[0], (d_model, 3 * d_model)),
        'b_qkv': jnp.zeros((3 * d_model,), PARAM_F32),
        'wo': _w(ks[1], (d_model, d_model)),
        'bo': jnp.zeros((d_model,), PARAM_F32),
        'w1': _w(ks[2], (d_model, d_ff)),
        'b1': jnp.zeros((d_ff,), PARAM_F32),
        'w2': _w(ks[3], (d_ff, d_model)),
        'b2': jnp.zeros((d_model,), PARAM_F32),
        'ln1_g': jnp.ones((d_model,), PARAM_F32),
        'ln1_b': jnp.zeros((d_model,), PARAM_F32),
        'ln2_g': jnp.ones((d_model,), PARAM_F32),
        'ln2_b': jnp.zeros((d_model,), PARAM_F32),
    }


def init_params(key, *, vocab, d_model, d_ff, feat_dim, pos_dim,
                n_enc_layers, n_vis_blocks):
    keys = jax.random.split(key, 3 + n_enc_layers + n_vis_blocks)
    return {
        'embed': _w(keys[0], (vocab, d_model)),
        'enc_final_g': jnp.ones((d_model,), PARAM_F32),
        'enc_final_b': jnp.zeros((d_model,), PARAM_F32),
        'vis_emb': {
            'w_feat': _w(keys[1], (feat_dim, d_model)),
            'b_feat': jnp.zeros((d_model,), PARAM_F32),
            'w_pos': _w(keys[2], (pos_dim, d_model), dtype=PARAM_F32),  # VPU path
            'b_pos': jnp.zeros((d_model,), PARAM_F32),
            'ln_g': jnp.ones((d_model,), PARAM_F32),
            'ln_b': jnp.zeros((d_model,), PARAM_F32),
        },
        'enc_layers': [_block_params(keys[3 + i], d_model, d_ff)
                       for i in range(n_enc_layers)],
        'vis_blocks': [_block_params(keys[3 + n_enc_layers + i], d_model, d_ff)
                       for i in range(n_vis_blocks)],
    }


# ----------------------------------- main ----------------------------------

if __name__ == "__main__":
    # Small synthetic config (module uses d_model=1024 / n_block=9; scaled
    # down here for a quick deterministic smoke run).
    D_MODEL = 128
    N_HEADS = 4
    D_FF = 256
    VOCAB = 64
    N_ENC_LAYERS = 2
    N_VIS_BLOCKS = 2           # stands in for opt.n_block
    FEAT_DIM = 64              # stands in for opt.t5_feat_dim
    POS_DIM = 4                # stands in for opt.t5_pos_dim
    BSZ = 2
    N_PASSAGES = 2
    PASSAGE_LEN = 8
    N_BOXES = 8

    key = jax.random.PRNGKey(0)
    kp, k1, k2, k3 = jax.random.split(key, 4)

    params = init_params(kp, vocab=VOCAB, d_model=D_MODEL, d_ff=D_FF,
                         feat_dim=FEAT_DIM, pos_dim=POS_DIM,
                         n_enc_layers=N_ENC_LAYERS, n_vis_blocks=N_VIS_BLOCKS)

    input_ids = jax.random.randint(k1, (BSZ, N_PASSAGES * PASSAGE_LEN),
                                   0, VOCAB, dtype=jnp.int32)
    attention_mask = jnp.ones((BSZ, N_PASSAGES * PASSAGE_LEN), jnp.int32)
    vis_feat = jax.random.normal(k2, (BSZ, N_BOXES, FEAT_DIM), jnp.float32)
    boxes = jax.random.uniform(k3, (BSZ, N_BOXES, POS_DIM), jnp.float32)

    fwd = jax.jit(functools.partial(encoder_wrapper_forward,
                                    n_passages=N_PASSAGES, n_heads=N_HEADS))
    out = fwd(params, input_ids, attention_mask, vis_feat, boxes)
    out = jax.block_until_ready(out)

    expected = (BSZ, N_BOXES + N_PASSAGES * PASSAGE_LEN, D_MODEL)
    assert out.shape == expected, (out.shape, expected)
    assert bool(jnp.all(jnp.isfinite(out.astype(jnp.float32))))
    print("KERNEL_OK")
</pallas_src>

<mosaic_0001>
module attributes {stable_mosaic.version = 11 : i64} {
  func.func @_ln_matmul_kernel(%arg0: i32, %arg1: memref<32x128xbf16, #tpu.memory_space<vmem>>, %arg2: memref<1x128xf32, #tpu.memory_space<vmem>>, %arg3: memref<1x128xf32, #tpu.memory_space<vmem>>, %arg4: memref<128x384xbf16, #tpu.memory_space<vmem>>, %arg5: memref<1x384xf32, #tpu.memory_space<vmem>>, %arg6: memref<32x384xbf16, #tpu.memory_space<vmem>>) attributes {dimension_semantics = [#tpu.dimension_semantics<parallel>], iteration_bounds = array<i64: 1>, scalar_prefetch = 0 : i64, scratch_operands = 0 : i64, tpu.core_type = #tpu.core_type<tc>, window_params = [{transform_indices = @transform_0, window_bounds = array<i64: 32, 128>}, {pipeline_mode = #tpu.pipeline_mode<synchronous>, transform_indices = @transform_1, window_bounds = array<i64: 1, 128>}, {pipeline_mode = #tpu.pipeline_mode<synchronous>, transform_indices = @transform_2, window_bounds = array<i64: 1, 128>}, {pipeline_mode = #tpu.pipeline_mode<synchronous>, transform_indices = @transform_3, window_bounds = array<i64: 128, 384>}, {pipeline_mode = #tpu.pipeline_mode<synchronous>, transform_indices = @transform_4, window_bounds = array<i64: 1, 384>}, {transform_indices = @transform_5, window_bounds = array<i64: 32, 384>}]} {
    %c0 = arith.constant 0 : index
    %c0_0 = arith.constant 0 : index
    %0 = vector.load %arg1[%c0, %c0_0] : memref<32x128xbf16, #tpu.memory_space<vmem>>, vector<32x128xbf16>
    %1 = arith.extf %0 : vector<32x128xbf16> to vector<32x128xf32>
    %cst = arith.constant dense<0.000000e+00> : vector<32xf32>
    %2 = vector.multi_reduction <add>, %1, %cst [1] : vector<32x128xf32> to vector<32xf32>
    %3 = vector.shape_cast %2 : vector<32xf32> to vector<32x1xf32>
    %4 = arith.mulf %1, %1 : vector<32x128xf32>
    %cst_1 = arith.constant dense<0.000000e+00> : vector<32xf32>
    %5 = vector.multi_reduction <add>, %4, %cst_1 [1] : vector<32x128xf32> to vector<32xf32>
    %6 = vector.shape_cast %5 : vector<32xf32> to vector<32x1xf32>
    %cst_2 = arith.constant 7.812500e-03 : f32
    %7 = vector.broadcast %cst_2 : f32 to vector<32x1xf32>
    %8 = arith.mulf %3, %7 : vector<32x1xf32>
    %cst_3 = arith.constant 7.812500e-03 : f32
    %9 = vector.broadcast %cst_3 : f32 to vector<32x1xf32>
    %10 = arith.mulf %6, %9 : vector<32x1xf32>
    %11 = arith.mulf %8, %8 : vector<32x1xf32>
    %12 = arith.subf %10, %11 : vector<32x1xf32>
    %cst_4 = arith.constant 0.000000e+00 : f32
    %13 = vector.broadcast %cst_4 : f32 to vector<32x1xf32>
    %14 = arith.maximumf %12, %13 : vector<32x1xf32>
    %15 = vector.broadcast %8 : vector<32x1xf32> to vector<32x128xf32>
    %16 = arith.subf %1, %15 : vector<32x128xf32>
    %cst_5 = arith.constant 9.99999997E-7 : f32
    %17 = vector.broadcast %cst_5 : f32 to vector<32x1xf32>
    %18 = arith.addf %14, %17 : vector<32x1xf32>
    %19 = math.rsqrt %18 : vector<32x1xf32>
    %20 = vector.broadcast %19 : vector<32x1xf32> to vector<32x128xf32>
    %21 = arith.mulf %16, %20 : vector<32x128xf32>
    %c0_6 = arith.constant 0 : index
    %c0_7 = arith.constant 0 : index
    %22 = vector.load %arg2[%c0_6, %c0_7] : memref<1x128xf32, #tpu.memory_space<vmem>>, vector<1x128xf32>
    %23 = vector.broadcast %22 : vector<1x128xf32> to vector<32x128xf32>
    %24 = arith.mulf %21, %23 : vector<32x128xf32>
    %c0_8 = arith.constant 0 : index
    %c0_9 = arith.constant 0 : index
    %25 = vector.load %arg3[%c0_8, %c0_9] : memref<1x128xf32, #tpu.memory_space<vmem>>, vector<1x128xf32>
    %26 = vector.broadcast %25 : vector<1x128xf32> to vector<32x128xf32>
    %27 = arith.addf %24, %26 : vector<32x128xf32>
    %28 = arith.truncf %27 : vector<32x128xf32> to vector<32x128xbf16>
    %c0_10 = arith.constant 0 : index
    %c0_11 = arith.constant 0 : index
    %29 = vector.load %arg4[%c0_10, %c0_11] : memref<128x384xbf16, #tpu.memory_space<vmem>>, vector<128x384xbf16>
    %cst_12 = arith.constant dense<0.000000e+00> : vector<32x384xf32>
    %30 = tpu.matmul %28, %29, %cst_12 {dimension_numbers = #tpu.dot_dimension_numbers<[1], [0], [0], [1], [0, 0, 1, 1], [], []>} : vector<32x128xbf16>, vector<128x384xbf16>, vector<32x384xf32> -> vector<32x384xf32>
    %c0_13 = arith.constant 0 : index
    %c0_14 = arith.constant 0 : index
    %31 = vector.load %arg5[%c0_13, %c0_14] : memref<1x384xf32, #tpu.memory_space<vmem>>, vector<1x384xf32>
    %32 = vector.broadcast %31 : vector<1x384xf32> to vector<32x384xf32>
    %33 = arith.addf %30, %32 : vector<32x384xf32>
    %34 = arith.truncf %33 : vector<32x384xf32> to vector<32x384xbf16>
    %c0_15 = arith.constant 0 : index
    %c0_16 = arith.constant 0 : index
    %35 = vector.load %arg6[%c0_15, %c0_16] : memref<32x384xbf16, #tpu.memory_space<vmem>>, vector<32x384xbf16>
    tpu.vector_store %arg6[%c0_15, %c0_16], %34 {strides = array<i32>} : memref<32x384xbf16, #tpu.memory_space<vmem>>, vector<32x384xbf16>,
    return
  }
  func.func @transform_0(%arg0: i32) -> (i32, i32) {
    %c0_i32 = arith.constant 0 : i32
    %c0_i32_0 = arith.constant 0 : i32
    return %arg0, %c0_i32 : i32, i32
  }
  func.func @transform_1(%arg0: i32) -> (i32, i32) {
    %c0_i32 = arith.constant 0 : i32
    %c0_i32_0 = arith.constant 0 : i32
    %c0_i32_1 = arith.constant 0 : i32
    return %c0_i32, %c0_i32_0 : i32, i32
  }
  func.func @transform_2(%arg0: i32) -> (i32, i32) {
    %c0_i32 = arith.constant 0 : i32
    %c0_i32_0 = arith.constant 0 : i32
    %c0_i32_1 = arith.constant 0 : i32
    return %c0_i32, %c0_i32_0 : i32, i32
  }
  func.func @transform_3(%arg0: i32) -> (i32, i32) {
    %c0_i32 = arith.constant 0 : i32
    %c0_i32_0 = arith.constant 0 : i32
    %c0_i32_1 = arith.constant 0 : i32
    return %c0_i32, %c0_i32_0 : i32, i32
  }
  func.func @transform_4(%arg0: i32) -> (i32, i32) {
    %c0_i32 = arith.constant 0 : i32
    %c0_i32_0 = arith.constant 0 : i32
    %c0_i32_1 = arith.constant 0 : i32
    return %c0_i32, %c0_i32_0 : i32, i32
  }
  func.func @transform_5(%arg0: i32) -> (i32, i32) {
    %c0_i32 = arith.constant 0 : i32
    %c0_i32_0 = arith.constant 0 : i32
    return %arg0, %c0_i32 : i32, i32
  }
}

module attributes {stable_mosaic.version = 11 : i64} {
  func.func @_mha_kernel(%arg0: i32, %arg1: i32, %arg2: i32, %arg3: memref<1x8x128xbf16, #tpu.memory_space<vmem>>, %arg4: memref<1x8x128xbf16, #tpu.memory_space<vmem>>, %arg5: memref<1x8x128xbf16, #tpu.memory_space<vmem>>, %arg6: memref<1x1x8xf32, #tpu.memory_space<vmem>>, %arg7: memref<1x8x128xbf16, #tpu.memory_space<vmem>>) attributes {dimension_semantics = [#tpu.dimension_semantics<parallel>, #tpu.dimension_semantics<parallel>, #tpu.dimension_semantics<parallel>], iteration_bounds = array<i64: 4, 1, 1>, scalar_prefetch = 0 : i64, scratch_operands = 0 : i64, tpu.core_type = #tpu.core_type<tc>, window_params = [{transform_indices = @transform_0, window_bounds = array<i64: 1, 8, 128>}, {transform_indices = @transform_1, window_bounds = array<i64: 1, 8, 128>}, {transform_indices = @transform_2, window_bounds = array<i64: 1, 8, 128>}, {transform_indices = @transform_3, window_bounds = array<i64: 1, 1, 8>}, {transform_indices = @transform_4, window_bounds = array<i64: 1, 8, 128>}]} {
    %c0 = arith.constant 0 : index
    %c0_0 = arith.constant 0 : index
    %c0_1 = arith.constant 0 : index
    %0 = vector.load %arg3[%c0, %c0_0, %c0_1] : memref<1x8x128xbf16, #tpu.memory_space<vmem>>, vector<1x8x128xbf16>
    %1 = vector.shape_cast %0 : vector<1x8x128xbf16> to vector<8x128xbf16>
    %c0_2 = arith.constant 0 : index
    %c0_3 = arith.constant 0 : index
    %c0_4 = arith.constant 0 : index
    %2 = vector.load %arg4[%c0_2, %c0_3, %c0_4] : memref<1x8x128xbf16, #tpu.memory_space<vmem>>, vector<1x8x128xbf16>
    %3 = vector.shape_cast %2 : vector<1x8x128xbf16> to vector<8x128xbf16>
    %c0_5 = arith.constant 0 : index
    %c0_6 = arith.constant 0 : index
    %c0_7 = arith.constant 0 : index
    %4 = vector.load %arg5[%c0_5, %c0_6, %c0_7] : memref<1x8x128xbf16, #tpu.memory_space<vmem>>, vector<1x8x128xbf16>
    %5 = vector.shape_cast %4 : vector<1x8x128xbf16> to vector<8x128xbf16>
    %6 = vector.extract_strided_slice %1 {offsets = [0, 0], sizes = [8, 32], strides = [1, 1]} : vector<8x128xbf16> to vector<8x32xbf16>
    %7 = vector.extract_strided_slice %3 {offsets = [0, 0], sizes = [8, 32], strides = [1, 1]} : vector<8x128xbf16> to vector<8x32xbf16>
    %8 = vector.extract_strided_slice %5 {offsets = [0, 0], sizes = [8, 32], strides = [1, 1]} : vector<8x128xbf16> to vector<8x32xbf16>
    %cst = arith.constant dense<0.000000e+00> : vector<8x8xf32>
    %9 = tpu.matmul %6, %7, %cst {dimension_numbers = #tpu.dot_dimension_numbers<[1], [1], [0], [0], [0, 0, 1, 0], [], []>} : vector<8x32xbf16>, vector<8x32xbf16>, vector<8x8xf32> -> vector<8x8xf32>
    %cst_8 = arith.constant 0.176776692 : f32
    %10 = vector.broadcast %cst_8 : f32 to vector<8x8xf32>
    %11 = arith.mulf %9, %10 : vector<8x8xf32>
    %c0_9 = arith.constant 0 : index
    %c0_10 = arith.constant 0 : index
    %c0_11 = arith.constant 0 : index
    %12 = vector.load %arg6[%c0_9, %c0_10, %c0_11] : memref<1x1x8xf32, #tpu.memory_space<vmem>>, vector<1x1x8xf32>
    %13 = vector.shape_cast %12 : vector<1x1x8xf32> to vector<1x8xf32>
    %14 = vector.broadcast %13 : vector<1x8xf32> to vector<8x8xf32>
    %15 = arith.addf %11, %14 : vector<8x8xf32>
    %cst_12 = arith.constant dense<0xFF800000> : vector<8xf32>
    %16 = vector.multi_reduction <maximumf>, %15, %cst_12 [1] : vector<8x8xf32> to vector<8xf32>
    %17 = vector.shape_cast %16 : vector<8xf32> to vector<8x1xf32>
    %18 = vector.broadcast %17 : vector<8x1xf32> to vector<8x8xf32>
    %19 = arith.subf %15, %18 : vector<8x8xf32>
    %20 = math.exp %19 : vector<8x8xf32>
    %cst_13 = arith.constant dense<0.000000e+00> : vector<8xf32>
    %21 = vector.multi_reduction <add>, %20, %cst_13 [1] : vector<8x8xf32> to vector<8xf32>
    %22 = vector.shape_cast %21 : vector<8xf32> to vector<8x1xf32>
    %23 = tpu.reciprocal %22 {approx = true} : vector<8x1xf32> -> vector<8x1xf32>
    %24 = vector.broadcast %23 : vector<8x1xf32> to vector<8x8xf32>
    %25 = arith.mulf %20, %24 : vector<8x8xf32>
    %26 = arith.truncf %25 : vector<8x8xf32> to vector<8x8xbf16>
    %cst_14 = arith.constant dense<0.000000e+00> : vector<8x32xf32>
    %27 = tpu.matmul %26, %8, %cst_14 {dimension_numbers = #tpu.dot_dimension_numbers<[1], [0], [0], [1], [0, 0, 1, 1], [], []>} : vector<8x8xbf16>, vector<8x32xbf16>, vector<8x32xf32> -> vector<8x32xf32>
    %28 = arith.truncf %27 : vector<8x32xf32> to vector<8x32xbf16>
    %c0_15 = arith.constant 0 : index
    %c0_16 = arith.constant 0 : index
    %c0_17 = arith.constant 0 : index
    %29 = vector.load %arg7[%c0_15, %c0_16, %c0_17] : memref<1x8x128xbf16, #tpu.memory_space<vmem>>, vector<1x8x32xbf16>
    %30 = vector.shape_cast %29 : vector<1x8x32xbf16> to vector<8x32xbf16>
    %31 = vector.shape_cast %28 : vector<8x32xbf16> to vector<1x8x32xbf16>
    tpu.vector_store %arg7[%c0_15, %c0_16, %c0_17], %31 {strides = array<i32>} : memref<1x8x128xbf16, #tpu.memory_space<vmem>>, vector<1x8x32xbf16>,
    %32 = vector.extract_strided_slice %1 {offsets = [0, 32], sizes = [8, 32], strides = [1, 1]} : vector<8x128xbf16> to vector<8x32xbf16>
    %33 = vector.extract_strided_slice %3 {offsets = [0, 32], sizes = [8, 32], strides = [1, 1]} : vector<8x128xbf16> to vector<8x32xbf16>
    %34 = vector.extract_strided_slice %5 {offsets = [0, 32], sizes = [8, 32], strides = [1, 1]} : vector<8x128xbf16> to vector<8x32xbf16>
    %cst_18 = arith.constant dense<0.000000e+00> : vector<8x8xf32>
    %35 = tpu.matmul %32, %33, %cst_18 {dimension_numbers = #tpu.dot_dimension_numbers<[1], [1], [0], [0], [0, 0, 1, 0], [], []>} : vector<8x32xbf16>, vector<8x32xbf16>, vector<8x8xf32> -> vector<8x8xf32>
    %cst_19 = arith.constant 0.176776692 : f32
    %36 = vector.broadcast %cst_19 : f32 to vector<8x8xf32>
    %37 = arith.mulf %35, %36 : vector<8x8xf32>
    %c0_20 = arith.constant 0 : index
    %c0_21 = arith.constant 0 : index
    %c0_22 = arith.constant 0 : index
    %38 = vector.load %arg6[%c0_20, %c0_21, %c0_22] : memref<1x1x8xf32, #tpu.memory_space<vmem>>, vector<1x1x8xf32>
    %39 = vector.shape_cast %38 : vector<1x1x8xf32> to vector<1x8xf32>
    %40 = vector.broadcast %39 : vector<1x8xf32> to vector<8x8xf32>
    %41 = arith.addf %37, %40 : vector<8x8xf32>
    %cst_23 = arith.constant dense<0xFF800000> : vector<8xf32>
    %42 = vector.multi_reduction <maximumf>, %41, %cst_23 [1] : vector<8x8xf32> to vector<8xf32>
    %43 = vector.shape_cast %42 : vector<8xf32> to vector<8x1xf32>
    %44 = vector.broadcast %43 : vector<8x1xf32> to vector<8x8xf32>
    %45 = arith.subf %41, %44 : vector<8x8xf32>
    %46 = math.exp %45 : vector<8x8xf32>
    %cst_24 = arith.constant dense<0.000000e+00> : vector<8xf32>
    %47 = vector.multi_reduction <add>, %46, %cst_24 [1] : vector<8x8xf32> to vector<8xf32>
    %48 = vector.shape_cast %47 : vector<8xf32> to vector<8x1xf32>
    %49 = tpu.reciprocal %48 {approx = true} : vector<8x1xf32> -> vector<8x1xf32>
    %50 = vector.broadcast %49 : vector<8x1xf32> to vector<8x8xf32>
    %51 = arith.mulf %46, %50 : vector<8x8xf32>
    %52 = arith.truncf %51 : vector<8x8xf32> to vector<8x8xbf16>
    %cst_25 = arith.constant dense<0.000000e+00> : vector<8x32xf32>
    %53 = tpu.matmul %52, %34, %cst_25 {dimension_numbers = #tpu.dot_dimension_numbers<[1], [0], [0], [1], [0, 0, 1, 1], [], []>} : vector<8x8xbf16>, vector<8x32xbf16>, vector<8x32xf32> -> vector<8x32xf32>
    %54 = arith.truncf %53 : vector<8x32xf32> to vector<8x32xbf16>
    %c0_26 = arith.constant 0 : index
    %c0_27 = arith.constant 0 : index
    %c32 = arith.constant 32 : index
    %55 = vector.load %arg7[%c0_26, %c0_27, %c32] : memref<1x8x128xbf16, #tpu.memory_space<vmem>>, vector<1x8x32xbf16>
    %56 = vector.shape_cast %55 : vector<1x8x32xbf16> to vector<8x32xbf16>
    %57 = vector.shape_cast %54 : vector<8x32xbf16> to vector<1x8x32xbf16>
    tpu.vector_store %arg7[%c0_26, %c0_27, %c32], %57 {strides = array<i32>} : memref<1x8x128xbf16, #tpu.memory_space<vmem>>, vector<1x8x32xbf16>,
    %58 = vector.extract_strided_slice %1 {offsets = [0, 64], sizes = [8, 32], strides = [1, 1]} : vector<8x128xbf16> to vector<8x32xbf16>
    %59 = vector.extract_strided_slice %3 {offsets = [0, 64], sizes = [8, 32], strides = [1, 1]} : vector<8x128xbf16> to vector<8x32xbf16>
    %60 = vector.extract_strided_slice %5 {offsets = [0, 64], sizes = [8, 32], strides = [1, 1]} : vector<8x128xbf16> to vector<8x32xbf16>
    %cst_28 = arith.constant dense<0.000000e+00> : vector<8x8xf32>
    %61 = tpu.matmul %58, %59, %cst_28 {dimension_numbers = #tpu.dot_dimension_numbers<[1], [1], [0], [0], [0, 0, 1, 0], [], []>} : vector<8x32xbf16>, vector<8x32xbf16>, vector<8x8xf32> -> vector<8x8xf32>
    %cst_29 = arith.constant 0.176776692 : f32
    %62 = vector.broadcast %cst_29 : f32 to vector<8x8xf32>
    %63 = arith.mulf %61, %62 : vector<8x8xf32>
    %c0_30 = arith.constant 0 : index
    %c0_31 = arith.constant 0 : index
    %c0_32 = arith.constant 0 : index
    %64 = vector.load %arg6[%c0_30, %c0_31, %c0_32] : memref<1x1x8xf32, #tpu.memory_space<vmem>>, vector<1x1x8xf32>
    %65 = vector.shape_cast %64 : vector<1x1x8xf32> to vector<1x8xf32>
    %66 = vector.broadcast %65 : vector<1x8xf32> to vector<8x8xf32>
    %67 = arith.addf %63, %66 : vector<8x8xf32>
    %cst_33 = arith.constant dense<0xFF800000> : vector<8xf32>
    %68 = vector.multi_reduction <maximumf>, %67, %cst_33 [1] : vector<8x8xf32> to vector<8xf32>
    %69 = vector.shape_cast %68 : vector<8xf32> to vector<8x1xf32>
    %70 = vector.broadcast %69 : vector<8x1xf32> to vector<8x8xf32>
    %71 = arith.subf %67, %70 : vector<8x8xf32>
    %72 = math.exp %71 : vector<8x8xf32>
    %cst_34 = arith.constant dense<0.000000e+00> : vector<8xf32>
    %73 = vector.multi_reduction <add>, %72, %cst_34 [1] : vector<8x8xf32> to vector<8xf32>
    %74 = vector.shape_cast %73 : vector<8xf32> to vector<8x1xf32>
    %75 = tpu.reciprocal %74 {approx = true} : vector<8x1xf32> -> vector<8x1xf32>
    %76 = vector.broadcast %75 : vector<8x1xf32> to vector<8x8xf32>
    %77 = arith.mulf %72, %76 : vector<8x8xf32>
    %78 = arith.truncf %77 : vector<8x8xf32> to vector<8x8xbf16>
    %cst_35 = arith.constant dense<0.000000e+00> : vector<8x32xf32>
    %79 = tpu.matmul %78, %60, %cst_35 {dimension_numbers = #tpu.dot_dimension_numbers<[1], [0], [0], [1], [0, 0, 1, 1], [], []>} : vector<8x8xbf16>, vector<8x32xbf16>, vector<8x32xf32> -> vector<8x32xf32>
    %80 = arith.truncf %79 : vector<8x32xf32> to vector<8x32xbf16>
    %c0_36 = arith.constant 0 : index
    %c0_37 = arith.constant 0 : index
    %c64 = arith.constant 64 : index
    %81 = vector.load %arg7[%c0_36, %c0_37, %c64] : memref<1x8x128xbf16, #tpu.memory_space<vmem>>, vector<1x8x32xbf16>
    %82 = vector.shape_cast %81 : vector<1x8x32xbf16> to vector<8x32xbf16>
    %83 = vector.shape_cast %80 : vector<8x32xbf16> to vector<1x8x32xbf16>
    tpu.vector_store %arg7[%c0_36, %c0_37, %c64], %83 {strides = array<i32>} : memref<1x8x128xbf16, #tpu.memory_space<vmem>>, vector<1x8x32xbf16>,
    %84 = vector.extract_strided_slice %1 {offsets = [0, 96], sizes = [8, 32], strides = [1, 1]} : vector<8x128xbf16> to vector<8x32xbf16>
    %85 = vector.extract_strided_slice %3 {offsets = [0, 96], sizes = [8, 32], strides = [1, 1]} : vector<8x128xbf16> to vector<8x32xbf16>
    %86 = vector.extract_strided_slice %5 {offsets = [0, 96], sizes = [8, 32], strides = [1, 1]} : vector<8x128xbf16> to vector<8x32xbf16>
    %cst_38 = arith.constant dense<0.000000e+00> : vector<8x8xf32>
    %87 = tpu.matmul %84, %85, %cst_38 {dimension_numbers = #tpu.dot_dimension_numbers<[1], [1], [0], [0], [0, 0, 1, 0], [], []>} : vector<8x32xbf16>, vector<8x32xbf16>, vector<8x8xf32> -> vector<8x8xf32>
    %cst_39 = arith.constant 0.176776692 : f32
    %88 = vector.broadcast %cst_39 : f32 to vector<8x8xf32>
    %89 = arith.mulf %87, %88 : vector<8x8xf32>
    %c0_40 = arith.constant 0 : index
    %c0_41 = arith.constant 0 : index
    %c0_42 = arith.constant 0 : index
    %90 = vector.load %arg6[%c0_40, %c0_41, %c0_42] : memref<1x1x8xf32, #tpu.memory_space<vmem>>, vector<1x1x8xf32>
    %91 = vector.shape_cast %90 : vector<1x1x8xf32> to vector<1x8xf32>
    %92 = vector.broadcast %91 : vector<1x8xf32> to vector<8x8xf32>
    %93 = arith.addf %89, %92 : vector<8x8xf32>
    %cst_43 = arith.constant dense<0xFF800000> : vector<8xf32>
    %94 = vector.multi_reduction <maximumf>, %93, %cst_43 [1] : vector<8x8xf32> to vector<8xf32>
    %95 = vector.shape_cast %94 : vector<8xf32> to vector<8x1xf32>
    %96 = vector.broadcast %95 : vector<8x1xf32> to vector<8x8xf32>
    %97 = arith.subf %93, %96 : vector<8x8xf32>
    %98 = math.exp %97 : vector<8x8xf32>
    %cst_44 = arith.constant dense<0.000000e+00> : vector<8xf32>
    %99 = vector.multi_reduction <add>, %98, %cst_44 [1] : vector<8x8xf32> to vector<8xf32>
    %100 = vector.shape_cast %99 : vector<8xf32> to vector<8x1xf32>
    %101 = tpu.reciprocal %100 {approx = true} : vector<8x1xf32> -> vector<8x1xf32>
    %102 = vector.broadcast %101 : vector<8x1xf32> to vector<8x8xf32>
    %103 = arith.mulf %98, %102 : vector<8x8xf32>
    %104 = arith.truncf %103 : vector<8x8xf32> to vector<8x8xbf16>
    %cst_45 = arith.constant dense<0.000000e+00> : vector<8x32xf32>
    %105 = tpu.matmul %104, %86, %cst_45 {dimension_numbers = #tpu.dot_dimension_numbers<[1], [0], [0], [1], [0, 0, 1, 1], [], []>} : vector<8x8xbf16>, vector<8x32xbf16>, vector<8x32xf32> -> vector<8x32xf32>
    %106 = arith.truncf %105 : vector<8x32xf32> to vector<8x32xbf16>
    %c0_46 = arith.constant 0 : index
    %c0_47 = arith.constant 0 : index
    %c96 = arith.constant 96 : index
    %107 = vector.load %arg7[%c0_46, %c0_47, %c96] : memref<1x8x128xbf16, #tpu.memory_space<vmem>>, vector<1x8x32xbf16>
    %108 = vector.shape_cast %107 : vector<1x8x32xbf16> to vector<8x32xbf16>
    %109 = vector.shape_cast %106 : vector<8x32xbf16> to vector<1x8x32xbf16>
    tpu.vector_store %arg7[%c0_46, %c0_47, %c96], %109 {strides = array<i32>} : memref<1x8x128xbf16, #tpu.memory_space<vmem>>, vector<1x8x32xbf16>,
    return
  }
  func.func @transform_0(%arg0: i32, %arg1: i32, %arg2: i32) -> (i32, i32, i32) {
    %c0_i32 = arith.constant 0 : i32
    return %arg0, %arg2, %arg1 : i32, i32, i32
  }
  func.func @transform_1(%arg0: i32, %arg1: i32, %arg2: i32) -> (i32, i32, i32) {
    %c1_i32 = arith.constant 1 : i32
    %0 = arith.addi %c1_i32, %arg1 : i32
    %c0_i32 = arith.constant 0 : i32
    %c0_i32_0 = arith.constant 0 : i32
    return %arg0, %c0_i32, %0 : i32, i32, i32
  }
  func.func @transform_2(%arg0: i32, %arg1: i32, %arg2: i32) -> (i32, i32, i32) {
    %c2_i32 = arith.constant 2 : i32
    %0 = arith.addi %c2_i32, %arg1 : i32
    %c0_i32 = arith.constant 0 : i32
    %c0_i32_0 = arith.constant 0 : i32
    return %arg0, %c0_i32, %0 : i32, i32, i32
  }
  func.func @transform_3(%arg0: i32, %arg1: i32, %arg2: i32) -> (i32, i32, i32) {
    %c0_i32 = arith.constant 0 : i32
    %c0_i32_0 = arith.constant 0 : i32
    %c0_i32_1 = arith.constant 0 : i32
    return %arg0, %c0_i32, %c0_i32_0 : i32, i32, i32
  }
  func.func @transform_4(%arg0: i32, %arg1: i32, %arg2: i32) -> (i32, i32, i32) {
    %c0_i32 = arith.constant 0 : i32
    return %arg0, %arg2, %arg1 : i32, i32, i32
  }
}

module attributes {stable_mosaic.version = 11 : i64} {
  func.func @_matmul_res_kernel(%arg0: i32, %arg1: memref<32x128xbf16, #tpu.memory_space<vmem>>, %arg2: memref<128x128xbf16, #tpu.memory_space<vmem>>, %arg3: memref<1x128xf32, #tpu.memory_space<vmem>>, %arg4: memref<32x128xbf16, #tpu.memory_space<vmem>>, %arg5: memref<32x128xbf16, #tpu.memory_space<vmem>>) attributes {dimension_semantics = [#tpu.dimension_semantics<parallel>], iteration_bounds = array<i64: 1>, scalar_prefetch = 0 : i64, scratch_operands = 0 : i64, tpu.core_type = #tpu.core_type<tc>, window_params = [{transform_indices = @transform_0, window_bounds = array<i64: 32, 128>}, {pipeline_mode = #tpu.pipeline_mode<synchronous>, transform_indices = @transform_1, window_bounds = array<i64: 128, 128>}, {pipeline_mode = #tpu.pipeline_mode<synchronous>, transform_indices = @transform_2, window_bounds = array<i64: 1, 128>}, {transform_indices = @transform_3, window_bounds = array<i64: 32, 128>}, {transform_indices = @transform_4, window_bounds = array<i64: 32, 128>}]} {
    %c0 = arith.constant 0 : index
    %c0_0 = arith.constant 0 : index
    %0 = vector.load %arg1[%c0, %c0_0] : memref<32x128xbf16, #tpu.memory_space<vmem>>, vector<32x128xbf16>
    %c0_1 = arith.constant 0 : index
    %c0_2 = arith.constant 0 : index
    %1 = vector.load %arg2[%c0_1, %c0_2] : memref<128x128xbf16, #tpu.memory_space<vmem>>, vector<128x128xbf16>
    %cst = arith.constant dense<0.000000e+00> : vector<32x128xf32>
    %2 = tpu.matmul %0, %1, %cst {dimension_numbers = #tpu.dot_dimension_numbers<[1], [0], [0], [1], [0, 0, 1, 1], [], []>} : vector<32x128xbf16>, vector<128x128xbf16>, vector<32x128xf32> -> vector<32x128xf32>
    %c0_3 = arith.constant 0 : index
    %c0_4 = arith.constant 0 : index
    %3 = vector.load %arg3[%c0_3, %c0_4] : memref<1x128xf32, #tpu.memory_space<vmem>>, vector<1x128xf32>
    %4 = vector.broadcast %3 : vector<1x128xf32> to vector<32x128xf32>
    %5 = arith.addf %2, %4 : vector<32x128xf32>
    %c0_5 = arith.constant 0 : index
    %c0_6 = arith.constant 0 : index
    %6 = vector.load %arg4[%c0_5, %c0_6] : memref<32x128xbf16, #tpu.memory_space<vmem>>, vector<32x128xbf16>
    %7 = arith.extf %6 : vector<32x128xbf16> to vector<32x128xf32>
    %8 = arith.addf %5, %7 : vector<32x128xf32>
    %9 = arith.truncf %8 : vector<32x128xf32> to vector<32x128xbf16>
    %c0_7 = arith.constant 0 : index
    %c0_8 = arith.constant 0 : index
    %10 = vector.load %arg5[%c0_7, %c0_8] : memref<32x128xbf16, #tpu.memory_space<vmem>>, vector<32x128xbf16>
    tpu.vector_store %arg5[%c0_7, %c0_8], %9 {strides = array<i32>} : memref<32x128xbf16, #tpu.memory_space<vmem>>, vector<32x128xbf16>,
    return
  }
  func.func @transform_0(%arg0: i32) -> (i32, i32) {
    %c0_i32 = arith.constant 0 : i32
    %c0_i32_0 = arith.constant 0 : i32
    return %arg0, %c0_i32 : i32, i32
  }
  func.func @transform_1(%arg0: i32) -> (i32, i32) {
    %c0_i32 = arith.constant 0 : i32
    %c0_i32_0 = arith.constant 0 : i32
    %c0_i32_1 = arith.constant 0 : i32
    return %c0_i32, %c0_i32_0 : i32, i32
  }
  func.func @transform_2(%arg0: i32) -> (i32, i32) {
    %c0_i32 = arith.constant 0 : i32
    %c0_i32_0 = arith.constant 0 : i32
    %c0_i32_1 = arith.constant 0 : i32
    return %c0_i32, %c0_i32_0 : i32, i32
  }
  func.func @transform_3(%arg0: i32) -> (i32, i32) {
    %c0_i32 = arith.constant 0 : i32
    %c0_i32_0 = arith.constant 0 : i32
    return %arg0, %c0_i32 : i32, i32
  }
  func.func @transform_4(%arg0: i32) -> (i32, i32) {
    %c0_i32 = arith.constant 0 : i32
    %c0_i32_0 = arith.constant 0 : i32
    return %arg0, %c0_i32 : i32, i32
  }
}

module attributes {stable_mosaic.version = 11 : i64} {
  func.func @_ln_matmul_kernel(%arg0: i32, %arg1: memref<32x128xbf16, #tpu.memory_space<vmem>>, %arg2: memref<1x128xf32, #tpu.memory_space<vmem>>, %arg3: memref<1x128xf32, #tpu.memory_space<vmem>>, %arg4: memref<128x256xbf16, #tpu.memory_space<vmem>>, %arg5: memref<1x256xf32, #tpu.memory_space<vmem>>, %arg6: memref<32x256xbf16, #tpu.memory_space<vmem>>) attributes {dimension_semantics = [#tpu.dimension_semantics<parallel>], iteration_bounds = array<i64: 1>, scalar_prefetch = 0 : i64, scratch_operands = 0 : i64, tpu.core_type = #tpu.core_type<tc>, window_params = [{transform_indices = @transform_0, window_bounds = array<i64: 32, 128>}, {pipeline_mode = #tpu.pipeline_mode<synchronous>, transform_indices = @transform_1, window_bounds = array<i64: 1, 128>}, {pipeline_mode = #tpu.pipeline_mode<synchronous>, transform_indices = @transform_2, window_bounds = array<i64: 1, 128>}, {pipeline_mode = #tpu.pipeline_mode<synchronous>, transform_indices = @transform_3, window_bounds = array<i64: 128, 256>}, {pipeline_mode = #tpu.pipeline_mode<synchronous>, transform_indices = @transform_4, window_bounds = array<i64: 1, 256>}, {transform_indices = @transform_5, window_bounds = array<i64: 32, 256>}]} {
    %c0 = arith.constant 0 : index
    %c0_0 = arith.constant 0 : index
    %0 = vector.load %arg1[%c0, %c0_0] : memref<32x128xbf16, #tpu.memory_space<vmem>>, vector<32x128xbf16>
    %1 = arith.extf %0 : vector<32x128xbf16> to vector<32x128xf32>
    %cst = arith.constant dense<0.000000e+00> : vector<32xf32>
    %2 = vector.multi_reduction <add>, %1, %cst [1] : vector<32x128xf32> to vector<32xf32>
    %3 = vector.shape_cast %2 : vector<32xf32> to vector<32x1xf32>
    %4 = arith.mulf %1, %1 : vector<32x128xf32>
    %cst_1 = arith.constant dense<0.000000e+00> : vector<32xf32>
    %5 = vector.multi_reduction <add>, %4, %cst_1 [1] : vector<32x128xf32> to vector<32xf32>
    %6 = vector.shape_cast %5 : vector<32xf32> to vector<32x1xf32>
    %cst_2 = arith.constant 7.812500e-03 : f32
    %7 = vector.broadcast %cst_2 : f32 to vector<32x1xf32>
    %8 = arith.mulf %3, %7 : vector<32x1xf32>
    %cst_3 = arith.constant 7.812500e-03 : f32
    %9 = vector.broadcast %cst_3 : f32 to vector<32x1xf32>
    %10 = arith.mulf %6, %9 : vector<32x1xf32>
    %11 = arith.mulf %8, %8 : vector<32x1xf32>
    %12 = arith.subf %10, %11 : vector<32x1xf32>
    %cst_4 = arith.constant 0.000000e+00 : f32
    %13 = vector.broadcast %cst_4 : f32 to vector<32x1xf32>
    %14 = arith.maximumf %12, %13 : vector<32x1xf32>
    %15 = vector.broadcast %8 : vector<32x1xf32> to vector<32x128xf32>
    %16 = arith.subf %1, %15 : vector<32x128xf32>
    %cst_5 = arith.constant 9.99999997E-7 : f32
    %17 = vector.broadcast %cst_5 : f32 to vector<32x1xf32>
    %18 = arith.addf %14, %17 : vector<32x1xf32>
    %19 = math.rsqrt %18 : vector<32x1xf32>
    %20 = vector.broadcast %19 : vector<32x1xf32> to vector<32x128xf32>
    %21 = arith.mulf %16, %20 : vector<32x128xf32>
    %c0_6 = arith.constant 0 : index
    %c0_7 = arith.constant 0 : index
    %22 = vector.load %arg2[%c0_6, %c0_7] : memref<1x128xf32, #tpu.memory_space<vmem>>, vector<1x128xf32>
    %23 = vector.broadcast %22 : vector<1x128xf32> to vector<32x128xf32>
    %24 = arith.mulf %21, %23 : vector<32x128xf32>
    %c0_8 = arith.constant 0 : index
    %c0_9 = arith.constant 0 : index
    %25 = vector.load %arg3[%c0_8, %c0_9] : memref<1x128xf32, #tpu.memory_space<vmem>>, vector<1x128xf32>
    %26 = vector.broadcast %25 : vector<1x128xf32> to vector<32x128xf32>
    %27 = arith.addf %24, %26 : vector<32x128xf32>
    %28 = arith.truncf %27 : vector<32x128xf32> to vector<32x128xbf16>
    %c0_10 = arith.constant 0 : index
    %c0_11 = arith.constant 0 : index
    %29 = vector.load %arg4[%c0_10, %c0_11] : memref<128x256xbf16, #tpu.memory_space<vmem>>, vector<128x256xbf16>
    %cst_12 = arith.constant dense<0.000000e+00> : vector<32x256xf32>
    %30 = tpu.matmul %28, %29, %cst_12 {dimension_numbers = #tpu.dot_dimension_numbers<[1], [0], [0], [1], [0, 0, 1, 1], [], []>} : vector<32x128xbf16>, vector<128x256xbf16>, vector<32x256xf32> -> vector<32x256xf32>
    %c0_13 = arith.constant 0 : index
    %c0_14 = arith.constant 0 : index
    %31 = vector.load %arg5[%c0_13, %c0_14] : memref<1x256xf32, #tpu.memory_space<vmem>>, vector<1x256xf32>
    %32 = vector.broadcast %31 : vector<1x256xf32> to vector<32x256xf32>
    %33 = arith.addf %30, %32 : vector<32x256xf32>
    %cst_15 = arith.constant 0.000000e+00 : f32
    %34 = vector.broadcast %cst_15 : f32 to vector<32x256xf32>
    %35 = arith.maximumf %33, %34 : vector<32x256xf32>
    %36 = arith.truncf %35 : vector<32x256xf32> to vector<32x256xbf16>
    %c0_16 = arith.constant 0 : index
    %c0_17 = arith.constant 0 : index
    %37 = vector.load %arg6[%c0_16, %c0_17] : memref<32x256xbf16, #tpu.memory_space<vmem>>, vector<32x256xbf16>
    tpu.vector_store %arg6[%c0_16, %c0_17], %36 {strides = array<i32>} : memref<32x256xbf16, #tpu.memory_space<vmem>>, vector<32x256xbf16>,
    return
  }
  func.func @transform_0(%arg0: i32) -> (i32, i32) {
    %c0_i32 = arith.constant 0 : i32
    %c0_i32_0 = arith.constant 0 : i32
    return %arg0, %c0_i32 : i32, i32
  }
  func.func @transform_1(%arg0: i32) -> (i32, i32) {
    %c0_i32 = arith.constant 0 : i32
    %c0_i32_0 = arith.constant 0 : i32
    %c0_i32_1 = arith.constant 0 : i32
    return %c0_i32, %c0_i32_0 : i32, i32
  }
  func.func @transform_2(%arg0: i32) -> (i32, i32) {
    %c0_i32 = arith.constant 0 : i32
    %c0_i32_0 = arith.constant 0 : i32
    %c0_i32_1 = arith.constant 0 : i32
    return %c0_i32, %c0_i32_0 : i32, i32
  }
  func.func @transform_3(%arg0: i32) -> (i32, i32) {
    %c0_i32 = arith.constant 0 : i32
    %c0_i32_0 = arith.constant 0 : i32
    %c0_i32_1 = arith.constant 0 : i32
    return %c0_i32, %c0_i32_0 : i32, i32
  }
  func.func @transform_4(%arg0: i32) -> (i32, i32) {
    %c0_i32 = arith.constant 0 : i32
    %c0_i32_0 = arith.constant 0 : i32
    %c0_i32_1 = arith.constant 0 : i32
    return %c0_i32, %c0_i32_0 : i32, i32
  }
  func.func @transform_5(%arg0: i32) -> (i32, i32) {
    %c0_i32 = arith.constant 0 : i32
    %c0_i32_0 = arith.constant 0 : i32
    return %arg0, %c0_i32 : i32, i32
  }
}

module attributes {stable_mosaic.version = 11 : i64} {
  func.func @_matmul_res_kernel(%arg0: i32, %arg1: memref<32x256xbf16, #tpu.memory_space<vmem>>, %arg2: memref<256x128xbf16, #tpu.memory_space<vmem>>, %arg3: memref<1x128xf32, #tpu.memory_space<vmem>>, %arg4: memref<32x128xbf16, #tpu.memory_space<vmem>>, %arg5: memref<32x128xbf16, #tpu.memory_space<vmem>>) attributes {dimension_semantics = [#tpu.dimension_semantics<parallel>], iteration_bounds = array<i64: 1>, scalar_prefetch = 0 : i64, scratch_operands = 0 : i64, tpu.core_type = #tpu.core_type<tc>, window_params = [{transform_indices = @transform_0, window_bounds = array<i64: 32, 256>}, {pipeline_mode = #tpu.pipeline_mode<synchronous>, transform_indices = @transform_1, window_bounds = array<i64: 256, 128>}, {pipeline_mode = #tpu.pipeline_mode<synchronous>, transform_indices = @transform_2, window_bounds = array<i64: 1, 128>}, {transform_indices = @transform_3, window_bounds = array<i64: 32, 128>}, {transform_indices = @transform_4, window_bounds = array<i64: 32, 128>}]} {
    %c0 = arith.constant 0 : index
    %c0_0 = arith.constant 0 : index
    %0 = vector.load %arg1[%c0, %c0_0] : memref<32x256xbf16, #tpu.memory_space<vmem>>, vector<32x256xbf16>
    %c0_1 = arith.constant 0 : index
    %c0_2 = arith.constant 0 : index
    %1 = vector.load %arg2[%c0_1, %c0_2] : memref<256x128xbf16, #tpu.memory_space<vmem>>, vector<256x128xbf16>
    %cst = arith.constant dense<0.000000e+00> : vector<32x128xf32>
    %2 = tpu.matmul %0, %1, %cst {dimension_numbers = #tpu.dot_dimension_numbers<[1], [0], [0], [1], [0, 0, 1, 1], [], []>} : vector<32x256xbf16>, vector<256x128xbf16>, vector<32x128xf32> -> vector<32x128xf32>
    %c0_3 = arith.constant 0 : index
    %c0_4 = arith.constant 0 : index
    %3 = vector.load %arg3[%c0_3, %c0_4] : memref<1x128xf32, #tpu.memory_space<vmem>>, vector<1x128xf32>
    %4 = vector.broadcast %3 : vector<1x128xf32> to vector<32x128xf32>
    %5 = arith.addf %2, %4 : vector<32x128xf32>
    %c0_5 = arith.constant 0 : index
    %c0_6 = arith.constant 0 : index
    %6 = vector.load %arg4[%c0_5, %c0_6] : memref<32x128xbf16, #tpu.memory_space<vmem>>, vector<32x128xbf16>
    %7 = arith.extf %6 : vector<32x128xbf16> to vector<32x128xf32>
    %8 = arith.addf %5, %7 : vector<32x128xf32>
    %9 = arith.truncf %8 : vector<32x128xf32> to vector<32x128xbf16>
    %c0_7 = arith.constant 0 : index
    %c0_8 = arith.constant 0 : index
    %10 = vector.load %arg5[%c0_7, %c0_8] : memref<32x128xbf16, #tpu.memory_space<vmem>>, vector<32x128xbf16>
    tpu.vector_store %arg5[%c0_7, %c0_8], %9 {strides = array<i32>} : memref<32x128xbf16, #tpu.memory_space<vmem>>, vector<32x128xbf16>,
    return
  }
  func.func @transform_0(%arg0: i32) -> (i32, i32) {
    %c0_i32 = arith.constant 0 : i32
    %c0_i32_0 = arith.constant 0 : i32
    return %arg0, %c0_i32 : i32, i32
  }
  func.func @transform_1(%arg0: i32) -> (i32, i32) {
    %c0_i32 = arith.constant 0 : i32
    %c0_i32_0 = arith.constant 0 : i32
    %c0_i32_1 = arith.constant 0 : i32
    return %c0_i32, %c0_i32_0 : i32, i32
  }
  func.func @transform_2(%arg0: i32) -> (i32, i32) {
    %c0_i32 = arith.constant 0 : i32
    %c0_i32_0 = arith.constant 0 : i32
    %c0_i32_1 = arith.constant 0 : i32
    return %c0_i32, %c0_i32_0 : i32, i32
  }
  func.func @transform_3(%arg0: i32) -> (i32, i32) {
    %c0_i32 = arith.constant 0 : i32
    %c0_i32_0 = arith.constant 0 : i32
    return %arg0, %c0_i32 : i32, i32
  }
  func.func @transform_4(%arg0: i32) -> (i32, i32) {
    %c0_i32 = arith.constant 0 : i32
    %c0_i32_0 = arith.constant 0 : i32
    return %arg0, %c0_i32 : i32, i32
  }
}

module attributes {stable_mosaic.version = 11 : i64} {
  func.func @_matmul_res_kernel(%arg0: i32, %arg1: memref<32x256xbf16, #tpu.memory_space<vmem>>, %arg2: memref<256x128xbf16, #tpu.memory_space<vmem>>, %arg3: memref<1x128xf32, #tpu.memory_space<vmem>>, %arg4: memref<32x128xbf16, #tpu.memory_space<vmem>>, %arg5: memref<1x128xf32, #tpu.memory_space<vmem>>, %arg6: memref<1x128xf32, #tpu.memory_space<vmem>>, %arg7: memref<32x128xbf16, #tpu.memory_space<vmem>>) attributes {dimension_semantics = [#tpu.dimension_semantics<parallel>], iteration_bounds = array<i64: 1>, scalar_prefetch = 0 : i64, scratch_operands = 0 : i64, tpu.core_type = #tpu.core_type<tc>, window_params = [{transform_indices = @transform_0, window_bounds = array<i64: 32, 256>}, {pipeline_mode = #tpu.pipeline_mode<synchronous>, transform_indices = @transform_1, window_bounds = array<i64: 256, 128>}, {pipeline_mode = #tpu.pipeline_mode<synchronous>, transform_indices = @transform_2, window_bounds = array<i64: 1, 128>}, {transform_indices = @transform_3, window_bounds = array<i64: 32, 128>}, {pipeline_mode = #tpu.pipeline_mode<synchronous>, transform_indices = @transform_4, window_bounds = array<i64: 1, 128>}, {pipeline_mode = #tpu.pipeline_mode<synchronous>, transform_indices = @transform_5, window_bounds = array<i64: 1, 128>}, {transform_indices = @transform_6, window_bounds = array<i64: 32, 128>}]} {
    %c0 = arith.constant 0 : index
    %c0_0 = arith.constant 0 : index
    %0 = vector.load %arg1[%c0, %c0_0] : memref<32x256xbf16, #tpu.memory_space<vmem>>, vector<32x256xbf16>
    %c0_1 = arith.constant 0 : index
    %c0_2 = arith.constant 0 : index
    %1 = vector.load %arg2[%c0_1, %c0_2] : memref<256x128xbf16, #tpu.memory_space<vmem>>, vector<256x128xbf16>
    %cst = arith.constant dense<0.000000e+00> : vector<32x128xf32>
    %2 = tpu.matmul %0, %1, %cst {dimension_numbers = #tpu.dot_dimension_numbers<[1], [0], [0], [1], [0, 0, 1, 1], [], []>} : vector<32x256xbf16>, vector<256x128xbf16>, vector<32x128xf32> -> vector<32x128xf32>
    %c0_3 = arith.constant 0 : index
    %c0_4 = arith.constant 0 : index
    %3 = vector.load %arg3[%c0_3, %c0_4] : memref<1x128xf32, #tpu.memory_space<vmem>>, vector<1x128xf32>
    %4 = vector.broadcast %3 : vector<1x128xf32> to vector<32x128xf32>
    %5 = arith.addf %2, %4 : vector<32x128xf32>
    %c0_5 = arith.constant 0 : index
    %c0_6 = arith.constant 0 : index
    %6 = vector.load %arg4[%c0_5, %c0_6] : memref<32x128xbf16, #tpu.memory_space<vmem>>, vector<32x128xbf16>
    %7 = arith.extf %6 : vector<32x128xbf16> to vector<32x128xf32>
    %8 = arith.addf %5, %7 : vector<32x128xf32>
    %cst_7 = arith.constant dense<0.000000e+00> : vector<32xf32>
    %9 = vector.multi_reduction <add>, %8, %cst_7 [1] : vector<32x128xf32> to vector<32xf32>
    %10 = vector.shape_cast %9 : vector<32xf32> to vector<32x1xf32>
    %11 = arith.mulf %8, %8 : vector<32x128xf32>
    %cst_8 = arith.constant dense<0.000000e+00> : vector<32xf32>
    %12 = vector.multi_reduction <add>, %11, %cst_8 [1] : vector<32x128xf32> to vector<32xf32>
    %13 = vector.shape_cast %12 : vector<32xf32> to vector<32x1xf32>
    %cst_9 = arith.constant 7.812500e-03 : f32
    %14 = vector.broadcast %cst_9 : f32 to vector<32x1xf32>
    %15 = arith.mulf %10, %14 : vector<32x1xf32>
    %cst_10 = arith.constant 7.812500e-03 : f32
    %16 = vector.broadcast %cst_10 : f32 to vector<32x1xf32>
    %17 = arith.mulf %13, %16 : vector<32x1xf32>
    %18 = arith.mulf %15, %15 : vector<32x1xf32>
    %19 = arith.subf %17, %18 : vector<32x1xf32>
    %cst_11 = arith.constant 0.000000e+00 : f32
    %20 = vector.broadcast %cst_11 : f32 to vector<32x1xf32>
    %21 = arith.maximumf %19, %20 : vector<32x1xf32>
    %22 = vector.broadcast %15 : vector<32x1xf32> to vector<32x128xf32>
    %23 = arith.subf %8, %22 : vector<32x128xf32>
    %cst_12 = arith.constant 9.99999997E-7 : f32
    %24 = vector.broadcast %cst_12 : f32 to vector<32x1xf32>
    %25 = arith.addf %21, %24 : vector<32x1xf32>
    %26 = math.rsqrt %25 : vector<32x1xf32>
    %27 = vector.broadcast %26 : vector<32x1xf32> to vector<32x128xf32>
    %28 = arith.mulf %23, %27 : vector<32x128xf32>
    %c0_13 = arith.constant 0 : index
    %c0_14 = arith.constant 0 : index
    %29 = vector.load %arg5[%c0_13, %c0_14] : memref<1x128xf32, #tpu.memory_space<vmem>>, vector<1x128xf32>
    %30 = vector.broadcast %29 : vector<1x128xf32> to vector<32x128xf32>
    %31 = arith.mulf %28, %30 : vector<32x128xf32>
    %c0_15 = arith.constant 0 : index
    %c0_16 = arith.constant 0 : index
    %32 = vector.load %arg6[%c0_15, %c0_16] : memref<1x128xf32, #tpu.memory_space<vmem>>, vector<1x128xf32>
    %33 = vector.broadcast %32 : vector<1x128xf32> to vector<32x128xf32>
    %34 = arith.addf %31, %33 : vector<32x128xf32>
    %35 = arith.truncf %34 : vector<32x128xf32> to vector<32x128xbf16>
    %c0_17 = arith.constant 0 : index
    %c0_18 = arith.constant 0 : index
    %36 = vector.load %arg7[%c0_17, %c0_18] : memref<32x128xbf16, #tpu.memory_space<vmem>>, vector<32x128xbf16>
    tpu.vector_store %arg7[%c0_17, %c0_18], %35 {strides = array<i32>} : memref<32x128xbf16, #tpu.memory_space<vmem>>, vector<32x128xbf16>,
    return
  }
  func.func @transform_0(%arg0: i32) -> (i32, i32) {
    %c0_i32 = arith.constant 0 : i32
    %c0_i32_0 = arith.constant 0 : i32
    return %arg0, %c0_i32 : i32, i32
  }
  func.func @transform_1(%arg0: i32) -> (i32, i32) {
    %c0_i32 = arith.constant 0 : i32
    %c0_i32_0 = arith.constant 0 : i32
    %c0_i32_1 = arith.constant 0 : i32
    return %c0_i32, %c0_i32_0 : i32, i32
  }
  func.func @transform_2(%arg0: i32) -> (i32, i32) {
    %c0_i32 = arith.constant 0 : i32
    %c0_i32_0 = arith.constant 0 : i32
    %c0_i32_1 = arith.constant 0 : i32
    return %c0_i32, %c0_i32_0 : i32, i32
  }
  func.func @transform_3(%arg0: i32) -> (i32, i32) {
    %c0_i32 = arith.constant 0 : i32
    %c0_i32_0 = arith.constant 0 : i32
    return %arg0, %c0_i32 : i32, i32
  }
  func.func @transform_4(%arg0: i32) -> (i32, i32) {
    %c0_i32 = arith.constant 0 : i32
    %c0_i32_0 = arith.constant 0 : i32
    %c0_i32_1 = arith.constant 0 : i32
    return %c0_i32, %c0_i32_0 : i32, i32
  }
  func.func @transform_5(%arg0: i32) -> (i32, i32) {
    %c0_i32 = arith.constant 0 : i32
    %c0_i32_0 = arith.constant 0 : i32
    %c0_i32_1 = arith.constant 0 : i32
    return %c0_i32, %c0_i32_0 : i32, i32
  }
  func.func @transform_6(%arg0: i32) -> (i32, i32) {
    %c0_i32 = arith.constant 0 : i32
    %c0_i32_0 = arith.constant 0 : i32
    return %arg0, %c0_i32 : i32, i32
  }
}

module attributes {stable_mosaic.version = 11 : i64} {
  func.func @_vis_embed_kernel(%arg0: i32, %arg1: memref<16x64xbf16, #tpu.memory_space<vmem>>, %arg2: memref<64x128xbf16, #tpu.memory_space<vmem>>, %arg3: memref<1x128xf32, #tpu.memory_space<vmem>>, %arg4: memref<16x4xf32, #tpu.memory_space<vmem>>, %arg5: memref<4x128xf32, #tpu.memory_space<vmem>>, %arg6: memref<1x128xf32, #tpu.memory_space<vmem>>, %arg7: memref<1x128xf32, #tpu.memory_space<vmem>>, %arg8: memref<1x128xf32, #tpu.memory_space<vmem>>, %arg9: memref<16x128xbf16, #tpu.memory_space<vmem>>) attributes {dimension_semantics = [#tpu.dimension_semantics<parallel>], iteration_bounds = array<i64: 1>, scalar_prefetch = 0 : i64, scratch_operands = 0 : i64, tpu.core_type = #tpu.core_type<tc>, window_params = [{transform_indices = @transform_0, window_bounds = array<i64: 16, 64>}, {pipeline_mode = #tpu.pipeline_mode<synchronous>, transform_indices = @transform_1, window_bounds = array<i64: 64, 128>}, {pipeline_mode = #tpu.pipeline_mode<synchronous>, transform_indices = @transform_2, window_bounds = array<i64: 1, 128>}, {transform_indices = @transform_3, window_bounds = array<i64: 16, 4>}, {pipeline_mode = #tpu.pipeline_mode<synchronous>, transform_indices = @transform_4, window_bounds = array<i64: 4, 128>}, {pipeline_mode = #tpu.pipeline_mode<synchronous>, transform_indices = @transform_5, window_bounds = array<i64: 1, 128>}, {pipeline_mode = #tpu.pipeline_mode<synchronous>, transform_indices = @transform_6, window_bounds = array<i64: 1, 128>}, {pipeline_mode = #tpu.pipeline_mode<synchronous>, transform_indices = @transform_7, window_bounds = array<i64: 1, 128>}, {transform_indices = @transform_8, window_bounds = array<i64: 16, 128>}]} {
    %c0 = arith.constant 0 : index
    %c0_0 = arith.constant 0 : index
    %0 = vector.load %arg1[%c0, %c0_0] : memref<16x64xbf16, #tpu.memory_space<vmem>>, vector<16x64xbf16>
    %c0_1 = arith.constant 0 : index
    %c0_2 = arith.constant 0 : index
    %1 = vector.load %arg2[%c0_1, %c0_2] : memref<64x128xbf16, #tpu.memory_space<vmem>>, vector<64x128xbf16>
    %cst = arith.constant dense<0.000000e+00> : vector<16x128xf32>
    %2 = tpu.matmul %0, %1, %cst {dimension_numbers = #tpu.dot_dimension_numbers<[1], [0], [0], [1], [0, 0, 1, 1], [], []>} : vector<16x64xbf16>, vector<64x128xbf16>, vector<16x128xf32> -> vector<16x128xf32>
    %c0_3 = arith.constant 0 : index
    %c0_4 = arith.constant 0 : index
    %3 = vector.load %arg3[%c0_3, %c0_4] : memref<1x128xf32, #tpu.memory_space<vmem>>, vector<1x128xf32>
    %4 = vector.broadcast %3 : vector<1x128xf32> to vector<16x128xf32>
    %5 = arith.addf %2, %4 : vector<16x128xf32>
    %c0_5 = arith.constant 0 : index
    %c0_6 = arith.constant 0 : index
    %6 = vector.load %arg6[%c0_5, %c0_6] : memref<1x128xf32, #tpu.memory_space<vmem>>, vector<1x128xf32>
    %7 = vector.broadcast %6 : vector<1x128xf32> to vector<16x128xf32>
    %8 = arith.addf %5, %7 : vector<16x128xf32>
    %c0_7 = arith.constant 0 : index
    %c0_8 = arith.constant 0 : index
    %9 = vector.load %arg4[%c0_7, %c0_8] : memref<16x4xf32, #tpu.memory_space<vmem>>, vector<16x4xf32>
    %c0_9 = arith.constant 0 : index
    %c0_10 = arith.constant 0 : index
    %10 = vector.load %arg5[%c0_9, %c0_10] : memref<4x128xf32, #tpu.memory_space<vmem>>, vector<4x128xf32>
    %11 = vector.extract_strided_slice %9 {offsets = [0, 0], sizes = [16, 1], strides = [1, 1]} : vector<16x4xf32> to vector<16x1xf32>
    %12 = vector.extract_strided_slice %10 {offsets = [0, 0], sizes = [1, 128], strides = [1, 1]} : vector<4x128xf32> to vector<1x128xf32>
    %13 = vector.broadcast %11 : vector<16x1xf32> to vector<16x128xf32>
    %14 = vector.broadcast %12 : vector<1x128xf32> to vector<16x128xf32>
    %15 = arith.mulf %13, %14 : vector<16x128xf32>
    %16 = arith.addf %8, %15 : vector<16x128xf32>
    %17 = vector.extract_strided_slice %9 {offsets = [0, 1], sizes = [16, 1], strides = [1, 1]} : vector<16x4xf32> to vector<16x1xf32>
    %18 = vector.extract_strided_slice %10 {offsets = [1, 0], sizes = [1, 128], strides = [1, 1]} : vector<4x128xf32> to vector<1x128xf32>
    %19 = vector.broadcast %17 : vector<16x1xf32> to vector<16x128xf32>
    %20 = vector.broadcast %18 : vector<1x128xf32> to vector<16x128xf32>
    %21 = arith.mulf %19, %20 : vector<16x128xf32>
    %22 = arith.addf %16, %21 : vector<16x128xf32>
    %23 = vector.extract_strided_slice %9 {offsets = [0, 2], sizes = [16, 1], strides = [1, 1]} : vector<16x4xf32> to vector<16x1xf32>
    %24 = vector.extract_strided_slice %10 {offsets = [2, 0], sizes = [1, 128], strides = [1, 1]} : vector<4x128xf32> to vector<1x128xf32>
    %25 = vector.broadcast %23 : vector<16x1xf32> to vector<16x128xf32>
    %26 = vector.broadcast %24 : vector<1x128xf32> to vector<16x128xf32>
    %27 = arith.mulf %25, %26 : vector<16x128xf32>
    %28 = arith.addf %22, %27 : vector<16x128xf32>
    %29 = vector.extract_strided_slice %9 {offsets = [0, 3], sizes = [16, 1], strides = [1, 1]} : vector<16x4xf32> to vector<16x1xf32>
    %30 = vector.extract_strided_slice %10 {offsets = [3, 0], sizes = [1, 128], strides = [1, 1]} : vector<4x128xf32> to vector<1x128xf32>
    %31 = vector.broadcast %29 : vector<16x1xf32> to vector<16x128xf32>
    %32 = vector.broadcast %30 : vector<1x128xf32> to vector<16x128xf32>
    %33 = arith.mulf %31, %32 : vector<16x128xf32>
    %34 = arith.addf %28, %33 : vector<16x128xf32>
    %cst_11 = arith.constant dense<0.000000e+00> : vector<16xf32>
    %35 = vector.multi_reduction <add>, %34, %cst_11 [1] : vector<16x128xf32> to vector<16xf32>
    %36 = vector.shape_cast %35 : vector<16xf32> to vector<16x1xf32>
    %37 = arith.mulf %34, %34 : vector<16x128xf32>
    %cst_12 = arith.constant dense<0.000000e+00> : vector<16xf32>
    %38 = vector.multi_reduction <add>, %37, %cst_12 [1] : vector<16x128xf32> to vector<16xf32>
    %39 = vector.shape_cast %38 : vector<16xf32> to vector<16x1xf32>
    %cst_13 = arith.constant 7.812500e-03 : f32
    %40 = vector.broadcast %cst_13 : f32 to vector<16x1xf32>
    %41 = arith.mulf %36, %40 : vector<16x1xf32>
    %cst_14 = arith.constant 7.812500e-03 : f32
    %42 = vector.broadcast %cst_14 : f32 to vector<16x1xf32>
    %43 = arith.mulf %39, %42 : vector<16x1xf32>
    %44 = arith.mulf %41, %41 : vector<16x1xf32>
    %45 = arith.subf %43, %44 : vector<16x1xf32>
    %cst_15 = arith.constant 0.000000e+00 : f32
    %46 = vector.broadcast %cst_15 : f32 to vector<16x1xf32>
    %47 = arith.maximumf %45, %46 : vector<16x1xf32>
    %48 = vector.broadcast %41 : vector<16x1xf32> to vector<16x128xf32>
    %49 = arith.subf %34, %48 : vector<16x128xf32>
    %cst_16 = arith.constant 9.99999997E-7 : f32
    %50 = vector.broadcast %cst_16 : f32 to vector<16x1xf32>
    %51 = arith.addf %47, %50 : vector<16x1xf32>
    %52 = math.rsqrt %51 : vector<16x1xf32>
    %53 = vector.broadcast %52 : vector<16x1xf32> to vector<16x128xf32>
    %54 = arith.mulf %49, %53 : vector<16x128xf32>
    %c0_17 = arith.constant 0 : index
    %c0_18 = arith.constant 0 : index
    %55 = vector.load %arg7[%c0_17, %c0_18] : memref<1x128xf32, #tpu.memory_space<vmem>>, vector<1x128xf32>
    %56 = vector.broadcast %55 : vector<1x128xf32> to vector<16x128xf32>
    %57 = arith.mulf %54, %56 : vector<16x128xf32>
    %c0_19 = arith.constant 0 : index
    %c0_20 = arith.constant 0 : index
    %58 = vector.load %arg8[%c0_19, %c0_20] : memref<1x128xf32, #tpu.memory_space<vmem>>, vector<1x128xf32>
    %59 = vector.broadcast %58 : vector<1x128xf32> to vector<16x128xf32>
    %60 = arith.addf %57, %59 : vector<16x128xf32>
    %61 = arith.truncf %60 : vector<16x128xf32> to vector<16x128xbf16>
    %c0_21 = arith.constant 0 : index
    %c0_22 = arith.constant 0 : index
    %62 = vector.load %arg9[%c0_21, %c0_22] : memref<16x128xbf16, #tpu.memory_space<vmem>>, vector<16x128xbf16>
    tpu.vector_store %arg9[%c0_21, %c0_22], %61 {strides = array<i32>} : memref<16x128xbf16, #tpu.memory_space<vmem>>, vector<16x128xbf16>,
    return
  }
  func.func @transform_0(%arg0: i32) -> (i32, i32) {
    %c0_i32 = arith.constant 0 : i32
    %c0_i32_0 = arith.constant 0 : i32
    return %arg0, %c0_i32 : i32, i32
  }
  func.func @transform_1(%arg0: i32) -> (i32, i32) {
    %c0_i32 = arith.constant 0 : i32
    %c0_i32_0 = arith.constant 0 : i32
    %c0_i32_1 = arith.constant 0 : i32
    return %c0_i32, %c0_i32_0 : i32, i32
  }
  func.func @transform_2(%arg0: i32) -> (i32, i32) {
    %c0_i32 = arith.constant 0 : i32
    %c0_i32_0 = arith.constant 0 : i32
    %c0_i32_1 = arith.constant 0 : i32
    return %c0_i32, %c0_i32_0 : i32, i32
  }
  func.func @transform_3(%arg0: i32) -> (i32, i32) {
    %c0_i32 = arith.constant 0 : i32
    %c0_i32_0 = arith.constant 0 : i32
    return %arg0, %c0_i32 : i32, i32
  }
  func.func @transform_4(%arg0: i32) -> (i32, i32) {
    %c0_i32 = arith.constant 0 : i32
    %c0_i32_0 = arith.constant 0 : i32
    %c0_i32_1 = arith.constant 0 : i32
    return %c0_i32, %c0_i32_0 : i32, i32
  }
  func.func @transform_5(%arg0: i32) -> (i32, i32) {
    %c0_i32 = arith.constant 0 : i32
    %c0_i32_0 = arith.constant 0 : i32
    %c0_i32_1 = arith.constant 0 : i32
    return %c0_i32, %c0_i32_0 : i32, i32
  }
  func.func @transform_6(%arg0: i32) -> (i32, i32) {
    %c0_i32 = arith.constant 0 : i32
    %c0_i32_0 = arith.constant 0 : i32
    %c0_i32_1 = arith.constant 0 : i32
    return %c0_i32, %c0_i32_0 : i32, i32
  }
  func.func @transform_7(%arg0: i32) -> (i32, i32) {
    %c0_i32 = arith.constant 0 : i32
    %c0_i32_0 = arith.constant 0 : i32
    %c0_i32_1 = arith.constant 0 : i32
    return %c0_i32, %c0_i32_0 : i32, i32
  }
  func.func @transform_8(%arg0: i32) -> (i32, i32) {
    %c0_i32 = arith.constant 0 : i32
    %c0_i32_0 = arith.constant 0 : i32
    return %arg0, %c0_i32 : i32, i32
  }
}

module attributes {stable_mosaic.version = 11 : i64} {
  func.func @_ln_matmul_kernel(%arg0: i32, %arg1: memref<16x128xbf16, #tpu.memory_space<vmem>>, %arg2: memref<1x128xf32, #tpu.memory_space<vmem>>, %arg3: memref<1x128xf32, #tpu.memory_space<vmem>>, %arg4: memref<128x384xbf16, #tpu.memory_space<vmem>>, %arg5: memref<1x384xf32, #tpu.memory_space<vmem>>, %arg6: memref<16x384xbf16, #tpu.memory_space<vmem>>) attributes {dimension_semantics = [#tpu.dimension_semantics<parallel>], iteration_bounds = array<i64: 1>, scalar_prefetch = 0 : i64, scratch_operands = 0 : i64, tpu.core_type = #tpu.core_type<tc>, window_params = [{transform_indices = @transform_0, window_bounds = array<i64: 16, 128>}, {pipeline_mode = #tpu.pipeline_mode<synchronous>, transform_indices = @transform_1, window_bounds = array<i64: 1, 128>}, {pipeline_mode = #tpu.pipeline_mode<synchronous>, transform_indices = @transform_2, window_bounds = array<i64: 1, 128>}, {pipeline_mode = #tpu.pipeline_mode<synchronous>, transform_indices = @transform_3, window_bounds = array<i64: 128, 384>}, {pipeline_mode = #tpu.pipeline_mode<synchronous>, transform_indices = @transform_4, window_bounds = array<i64: 1, 384>}, {transform_indices = @transform_5, window_bounds = array<i64: 16, 384>}]} {
    %c0 = arith.constant 0 : index
    %c0_0 = arith.constant 0 : index
    %0 = vector.load %arg1[%c0, %c0_0] : memref<16x128xbf16, #tpu.memory_space<vmem>>, vector<16x128xbf16>
    %1 = arith.extf %0 : vector<16x128xbf16> to vector<16x128xf32>
    %cst = arith.constant dense<0.000000e+00> : vector<16xf32>
    %2 = vector.multi_reduction <add>, %1, %cst [1] : vector<16x128xf32> to vector<16xf32>
    %3 = vector.shape_cast %2 : vector<16xf32> to vector<16x1xf32>
    %4 = arith.mulf %1, %1 : vector<16x128xf32>
    %cst_1 = arith.constant dense<0.000000e+00> : vector<16xf32>
    %5 = vector.multi_reduction <add>, %4, %cst_1 [1] : vector<16x128xf32> to vector<16xf32>
    %6 = vector.shape_cast %5 : vector<16xf32> to vector<16x1xf32>
    %cst_2 = arith.constant 7.812500e-03 : f32
    %7 = vector.broadcast %cst_2 : f32 to vector<16x1xf32>
    %8 = arith.mulf %3, %7 : vector<16x1xf32>
    %cst_3 = arith.constant 7.812500e-03 : f32
    %9 = vector.broadcast %cst_3 : f32 to vector<16x1xf32>
    %10 = arith.mulf %6, %9 : vector<16x1xf32>
    %11 = arith.mulf %8, %8 : vector<16x1xf32>
    %12 = arith.subf %10, %11 : vector<16x1xf32>
    %cst_4 = arith.constant 0.000000e+00 : f32
    %13 = vector.broadcast %cst_4 : f32 to vector<16x1xf32>
    %14 = arith.maximumf %12, %13 : vector<16x1xf32>
    %15 = vector.broadcast %8 : vector<16x1xf32> to vector<16x128xf32>
    %16 = arith.subf %1, %15 : vector<16x128xf32>
    %cst_5 = arith.constant 9.99999997E-7 : f32
    %17 = vector.broadcast %cst_5 : f32 to vector<16x1xf32>
    %18 = arith.addf %14, %17 : vector<16x1xf32>
    %19 = math.rsqrt %18 : vector<16x1xf32>
    %20 = vector.broadcast %19 : vector<16x1xf32> to vector<16x128xf32>
    %21 = arith.mulf %16, %20 : vector<16x128xf32>
    %c0_6 = arith.constant 0 : index
    %c0_7 = arith.constant 0 : index
    %22 = vector.load %arg2[%c0_6, %c0_7] : memref<1x128xf32, #tpu.memory_space<vmem>>, vector<1x128xf32>
    %23 = vector.broadcast %22 : vector<1x128xf32> to vector<16x128xf32>
    %24 = arith.mulf %21, %23 : vector<16x128xf32>
    %c0_8 = arith.constant 0 : index
    %c0_9 = arith.constant 0 : index
    %25 = vector.load %arg3[%c0_8, %c0_9] : memref<1x128xf32, #tpu.memory_space<vmem>>, vector<1x128xf32>
    %26 = vector.broadcast %25 : vector<1x128xf32> to vector<16x128xf32>
    %27 = arith.addf %24, %26 : vector<16x128xf32>
    %28 = arith.truncf %27 : vector<16x128xf32> to vector<16x128xbf16>
    %c0_10 = arith.constant 0 : index
    %c0_11 = arith.constant 0 : index
    %29 = vector.load %arg4[%c0_10, %c0_11] : memref<128x384xbf16, #tpu.memory_space<vmem>>, vector<128x384xbf16>
    %cst_12 = arith.constant dense<0.000000e+00> : vector<16x384xf32>
    %30 = tpu.matmul %28, %29, %cst_12 {dimension_numbers = #tpu.dot_dimension_numbers<[1], [0], [0], [1], [0, 0, 1, 1], [], []>} : vector<16x128xbf16>, vector<128x384xbf16>, vector<16x384xf32> -> vector<16x384xf32>
    %c0_13 = arith.constant 0 : index
    %c0_14 = arith.constant 0 : index
    %31 = vector.load %arg5[%c0_13, %c0_14] : memref<1x384xf32, #tpu.memory_space<vmem>>, vector<1x384xf32>
    %32 = vector.broadcast %31 : vector<1x384xf32> to vector<16x384xf32>
    %33 = arith.addf %30, %32 : vector<16x384xf32>
    %34 = arith.truncf %33 : vector<16x384xf32> to vector<16x384xbf16>
    %c0_15 = arith.constant 0 : index
    %c0_16 = arith.constant 0 : index
    %35 = vector.load %arg6[%c0_15, %c0_16] : memref<16x384xbf16, #tpu.memory_space<vmem>>, vector<16x384xbf16>
    tpu.vector_store %arg6[%c0_15, %c0_16], %34 {strides = array<i32>} : memref<16x384xbf16, #tpu.memory_space<vmem>>, vector<16x384xbf16>,
    return
  }
  func.func @transform_0(%arg0: i32) -> (i32, i32) {
    %c0_i32 = arith.constant 0 : i32
    %c0_i32_0 = arith.constant 0 : i32
    return %arg0, %c0_i32 : i32, i32
  }
  func.func @transform_1(%arg0: i32) -> (i32, i32) {
    %c0_i32 = arith.constant 0 : i32
    %c0_i32_0 = arith.constant 0 : i32
    %c0_i32_1 = arith.constant 0 : i32
    return %c0_i32, %c0_i32_0 : i32, i32
  }
  func.func @transform_2(%arg0: i32) -> (i32, i32) {
    %c0_i32 = arith.constant 0 : i32
    %c0_i32_0 = arith.constant 0 : i32
    %c0_i32_1 = arith.constant 0 : i32
    return %c0_i32, %c0_i32_0 : i32, i32
  }
  func.func @transform_3(%arg0: i32) -> (i32, i32) {
    %c0_i32 = arith.constant 0 : i32
    %c0_i32_0 = arith.constant 0 : i32
    %c0_i32_1 = arith.constant 0 : i32
    return %c0_i32, %c0_i32_0 : i32, i32
  }
  func.func @transform_4(%arg0: i32) -> (i32, i32) {
    %c0_i32 = arith.constant 0 : i32
    %c0_i32_0 = arith.constant 0 : i32
    %c0_i32_1 = arith.constant 0 : i32
    return %c0_i32, %c0_i32_0 : i32, i32
  }
  func.func @transform_5(%arg0: i32) -> (i32, i32) {
    %c0_i32 = arith.constant 0 : i32
    %c0_i32_0 = arith.constant 0 : i32
    return %arg0, %c0_i32 : i32, i32
  }
}

module attributes {stable_mosaic.version = 11 : i64} {
  func.func @_mha_kernel(%arg0: i32, %arg1: i32, %arg2: i32, %arg3: memref<1x8x128xbf16, #tpu.memory_space<vmem>>, %arg4: memref<1x8x128xbf16, #tpu.memory_space<vmem>>, %arg5: memref<1x8x128xbf16, #tpu.memory_space<vmem>>, %arg6: memref<1x8x128xbf16, #tpu.memory_space<vmem>>) attributes {dimension_semantics = [#tpu.dimension_semantics<parallel>, #tpu.dimension_semantics<parallel>, #tpu.dimension_semantics<parallel>], iteration_bounds = array<i64: 2, 1, 1>, scalar_prefetch = 0 : i64, scratch_operands = 0 : i64, tpu.core_type = #tpu.core_type<tc>, window_params = [{transform_indices = @transform_0, window_bounds = array<i64: 1, 8, 128>}, {transform_indices = @transform_1, window_bounds = array<i64: 1, 8, 128>}, {transform_indices = @transform_2, window_bounds = array<i64: 1, 8, 128>}, {transform_indices = @transform_3, window_bounds = array<i64: 1, 8, 128>}]} {
    %c0 = arith.constant 0 : index
    %c0_0 = arith.constant 0 : index
    %c0_1 = arith.constant 0 : index
    %0 = vector.load %arg3[%c0, %c0_0, %c0_1] : memref<1x8x128xbf16, #tpu.memory_space<vmem>>, vector<1x8x128xbf16>
    %1 = vector.shape_cast %0 : vector<1x8x128xbf16> to vector<8x128xbf16>
    %c0_2 = arith.constant 0 : index
    %c0_3 = arith.constant 0 : index
    %c0_4 = arith.constant 0 : index
    %2 = vector.load %arg4[%c0_2, %c0_3, %c0_4] : memref<1x8x128xbf16, #tpu.memory_space<vmem>>, vector<1x8x128xbf16>
    %3 = vector.shape_cast %2 : vector<1x8x128xbf16> to vector<8x128xbf16>
    %c0_5 = arith.constant 0 : index
    %c0_6 = arith.constant 0 : index
    %c0_7 = arith.constant 0 : index
    %4 = vector.load %arg5[%c0_5, %c0_6, %c0_7] : memref<1x8x128xbf16, #tpu.memory_space<vmem>>, vector<1x8x128xbf16>
    %5 = vector.shape_cast %4 : vector<1x8x128xbf16> to vector<8x128xbf16>
    %6 = vector.extract_strided_slice %1 {offsets = [0, 0], sizes = [8, 32], strides = [1, 1]} : vector<8x128xbf16> to vector<8x32xbf16>
    %7 = vector.extract_strided_slice %3 {offsets = [0, 0], sizes = [8, 32], strides = [1, 1]} : vector<8x128xbf16> to vector<8x32xbf16>
    %8 = vector.extract_strided_slice %5 {offsets = [0, 0], sizes = [8, 32], strides = [1, 1]} : vector<8x128xbf16> to vector<8x32xbf16>
    %cst = arith.constant dense<0.000000e+00> : vector<8x8xf32>
    %9 = tpu.matmul %6, %7, %cst {dimension_numbers = #tpu.dot_dimension_numbers<[1], [1], [0], [0], [0, 0, 1, 0], [], []>} : vector<8x32xbf16>, vector<8x32xbf16>, vector<8x8xf32> -> vector<8x8xf32>
    %cst_8 = arith.constant 0.176776692 : f32
    %10 = vector.broadcast %cst_8 : f32 to vector<8x8xf32>
    %11 = arith.mulf %9, %10 : vector<8x8xf32>
    %cst_9 = arith.constant dense<0xFF800000> : vector<8xf32>
    %12 = vector.multi_reduction <maximumf>, %11, %cst_9 [1] : vector<8x8xf32> to vector<8xf32>
    %13 = vector.shape_cast %12 : vector<8xf32> to vector<8x1xf32>
    %14 = vector.broadcast %13 : vector<8x1xf32> to vector<8x8xf32>
    %15 = arith.subf %11, %14 : vector<8x8xf32>
    %16 = math.exp %15 : vector<8x8xf32>
    %cst_10 = arith.constant dense<0.000000e+00> : vector<8xf32>
    %17 = vector.multi_reduction <add>, %16, %cst_10 [1] : vector<8x8xf32> to vector<8xf32>
    %18 = vector.shape_cast %17 : vector<8xf32> to vector<8x1xf32>
    %19 = tpu.reciprocal %18 {approx = true} : vector<8x1xf32> -> vector<8x1xf32>
    %20 = vector.broadcast %19 : vector<8x1xf32> to vector<8x8xf32>
    %21 = arith.mulf %16, %20 : vector<8x8xf32>
    %22 = arith.truncf %21 : vector<8x8xf32> to vector<8x8xbf16>
    %cst_11 = arith.constant dense<0.000000e+00> : vector<8x32xf32>
    %23 = tpu.matmul %22, %8, %cst_11 {dimension_numbers = #tpu.dot_dimension_numbers<[1], [0], [0], [1], [0, 0, 1, 1], [], []>} : vector<8x8xbf16>, vector<8x32xbf16>, vector<8x32xf32> -> vector<8x32xf32>
    %24 = arith.truncf %23 : vector<8x32xf32> to vector<8x32xbf16>
    %c0_12 = arith.constant 0 : index
    %c0_13 = arith.constant 0 : index
    %c0_14 = arith.constant 0 : index
    %25 = vector.load %arg6[%c0_12, %c0_13, %c0_14] : memref<1x8x128xbf16, #tpu.memory_space<vmem>>, vector<1x8x32xbf16>
    %26 = vector.shape_cast %25 : vector<1x8x32xbf16> to vector<8x32xbf16>
    %27 = vector.shape_cast %24 : vector<8x32xbf16> to vector<1x8x32xbf16>
    tpu.vector_store %arg6[%c0_12, %c0_13, %c0_14], %27 {strides = array<i32>} : memref<1x8x128xbf16, #tpu.memory_space<vmem>>, vector<1x8x32xbf16>,
    %28 = vector.extract_strided_slice %1 {offsets = [0, 32], sizes = [8, 32], strides = [1, 1]} : vector<8x128xbf16> to vector<8x32xbf16>
    %29 = vector.extract_strided_slice %3 {offsets = [0, 32], sizes = [8, 32], strides = [1, 1]} : vector<8x128xbf16> to vector<8x32xbf16>
    %30 = vector.extract_strided_slice %5 {offsets = [0, 32], sizes = [8, 32], strides = [1, 1]} : vector<8x128xbf16> to vector<8x32xbf16>
    %cst_15 = arith.constant dense<0.000000e+00> : vector<8x8xf32>
    %31 = tpu.matmul %28, %29, %cst_15 {dimension_numbers = #tpu.dot_dimension_numbers<[1], [1], [0], [0], [0, 0, 1, 0], [], []>} : vector<8x32xbf16>, vector<8x32xbf16>, vector<8x8xf32> -> vector<8x8xf32>
    %cst_16 = arith.constant 0.176776692 : f32
    %32 = vector.broadcast %cst_16 : f32 to vector<8x8xf32>
    %33 = arith.mulf %31, %32 : vector<8x8xf32>
    %cst_17 = arith.constant dense<0xFF800000> : vector<8xf32>
    %34 = vector.multi_reduction <maximumf>, %33, %cst_17 [1] : vector<8x8xf32> to vector<8xf32>
    %35 = vector.shape_cast %34 : vector<8xf32> to vector<8x1xf32>
    %36 = vector.broadcast %35 : vector<8x1xf32> to vector<8x8xf32>
    %37 = arith.subf %33, %36 : vector<8x8xf32>
    %38 = math.exp %37 : vector<8x8xf32>
    %cst_18 = arith.constant dense<0.000000e+00> : vector<8xf32>
    %39 = vector.multi_reduction <add>, %38, %cst_18 [1] : vector<8x8xf32> to vector<8xf32>
    %40 = vector.shape_cast %39 : vector<8xf32> to vector<8x1xf32>
    %41 = tpu.reciprocal %40 {approx = true} : vector<8x1xf32> -> vector<8x1xf32>
    %42 = vector.broadcast %41 : vector<8x1xf32> to vector<8x8xf32>
    %43 = arith.mulf %38, %42 : vector<8x8xf32>
    %44 = arith.truncf %43 : vector<8x8xf32> to vector<8x8xbf16>
    %cst_19 = arith.constant dense<0.000000e+00> : vector<8x32xf32>
    %45 = tpu.matmul %44, %30, %cst_19 {dimension_numbers = #tpu.dot_dimension_numbers<[1], [0], [0], [1], [0, 0, 1, 1], [], []>} : vector<8x8xbf16>, vector<8x32xbf16>, vector<8x32xf32> -> vector<8x32xf32>
    %46 = arith.truncf %45 : vector<8x32xf32> to vector<8x32xbf16>
    %c0_20 = arith.constant 0 : index
    %c0_21 = arith.constant 0 : index
    %c32 = arith.constant 32 : index
    %47 = vector.load %arg6[%c0_20, %c0_21, %c32] : memref<1x8x128xbf16, #tpu.memory_space<vmem>>, vector<1x8x32xbf16>
    %48 = vector.shape_cast %47 : vector<1x8x32xbf16> to vector<8x32xbf16>
    %49 = vector.shape_cast %46 : vector<8x32xbf16> to vector<1x8x32xbf16>
    tpu.vector_store %arg6[%c0_20, %c0_21, %c32], %49 {strides = array<i32>} : memref<1x8x128xbf16, #tpu.memory_space<vmem>>, vector<1x8x32xbf16>,
    %50 = vector.extract_strided_slice %1 {offsets = [0, 64], sizes = [8, 32], strides = [1, 1]} : vector<8x128xbf16> to vector<8x32xbf16>
    %51 = vector.extract_strided_slice %3 {offsets = [0, 64], sizes = [8, 32], strides = [1, 1]} : vector<8x128xbf16> to vector<8x32xbf16>
    %52 = vector.extract_strided_slice %5 {offsets = [0, 64], sizes = [8, 32], strides = [1, 1]} : vector<8x128xbf16> to vector<8x32xbf16>
    %cst_22 = arith.constant dense<0.000000e+00> : vector<8x8xf32>
    %53 = tpu.matmul %50, %51, %cst_22 {dimension_numbers = #tpu.dot_dimension_numbers<[1], [1], [0], [0], [0, 0, 1, 0], [], []>} : vector<8x32xbf16>, vector<8x32xbf16>, vector<8x8xf32> -> vector<8x8xf32>
    %cst_23 = arith.constant 0.176776692 : f32
    %54 = vector.broadcast %cst_23 : f32 to vector<8x8xf32>
    %55 = arith.mulf %53, %54 : vector<8x8xf32>
    %cst_24 = arith.constant dense<0xFF800000> : vector<8xf32>
    %56 = vector.multi_reduction <maximumf>, %55, %cst_24 [1] : vector<8x8xf32> to vector<8xf32>
    %57 = vector.shape_cast %56 : vector<8xf32> to vector<8x1xf32>
    %58 = vector.broadcast %57 : vector<8x1xf32> to vector<8x8xf32>
    %59 = arith.subf %55, %58 : vector<8x8xf32>
    %60 = math.exp %59 : vector<8x8xf32>
    %cst_25 = arith.constant dense<0.000000e+00> : vector<8xf32>
    %61 = vector.multi_reduction <add>, %60, %cst_25 [1] : vector<8x8xf32> to vector<8xf32>
    %62 = vector.shape_cast %61 : vector<8xf32> to vector<8x1xf32>
    %63 = tpu.reciprocal %62 {approx = true} : vector<8x1xf32> -> vector<8x1xf32>
    %64 = vector.broadcast %63 : vector<8x1xf32> to vector<8x8xf32>
    %65 = arith.mulf %60, %64 : vector<8x8xf32>
    %66 = arith.truncf %65 : vector<8x8xf32> to vector<8x8xbf16>
    %cst_26 = arith.constant dense<0.000000e+00> : vector<8x32xf32>
    %67 = tpu.matmul %66, %52, %cst_26 {dimension_numbers = #tpu.dot_dimension_numbers<[1], [0], [0], [1], [0, 0, 1, 1], [], []>} : vector<8x8xbf16>, vector<8x32xbf16>, vector<8x32xf32> -> vector<8x32xf32>
    %68 = arith.truncf %67 : vector<8x32xf32> to vector<8x32xbf16>
    %c0_27 = arith.constant 0 : index
    %c0_28 = arith.constant 0 : index
    %c64 = arith.constant 64 : index
    %69 = vector.load %arg6[%c0_27, %c0_28, %c64] : memref<1x8x128xbf16, #tpu.memory_space<vmem>>, vector<1x8x32xbf16>
    %70 = vector.shape_cast %69 : vector<1x8x32xbf16> to vector<8x32xbf16>
    %71 = vector.shape_cast %68 : vector<8x32xbf16> to vector<1x8x32xbf16>
    tpu.vector_store %arg6[%c0_27, %c0_28, %c64], %71 {strides = array<i32>} : memref<1x8x128xbf16, #tpu.memory_space<vmem>>, vector<1x8x32xbf16>,
    %72 = vector.extract_strided_slice %1 {offsets = [0, 96], sizes = [8, 32], strides = [1, 1]} : vector<8x128xbf16> to vector<8x32xbf16>
    %73 = vector.extract_strided_slice %3 {offsets = [0, 96], sizes = [8, 32], strides = [1, 1]} : vector<8x128xbf16> to vector<8x32xbf16>
    %74 = vector.extract_strided_slice %5 {offsets = [0, 96], sizes = [8, 32], strides = [1, 1]} : vector<8x128xbf16> to vector<8x32xbf16>
    %cst_29 = arith.constant dense<0.000000e+00> : vector<8x8xf32>
    %75 = tpu.matmul %72, %73, %cst_29 {dimension_numbers = #tpu.dot_dimension_numbers<[1], [1], [0], [0], [0, 0, 1, 0], [], []>} : vector<8x32xbf16>, vector<8x32xbf16>, vector<8x8xf32> -> vector<8x8xf32>
    %cst_30 = arith.constant 0.176776692 : f32
    %76 = vector.broadcast %cst_30 : f32 to vector<8x8xf32>
    %77 = arith.mulf %75, %76 : vector<8x8xf32>
    %cst_31 = arith.constant dense<0xFF800000> : vector<8xf32>
    %78 = vector.multi_reduction <maximumf>, %77, %cst_31 [1] : vector<8x8xf32> to vector<8xf32>
    %79 = vector.shape_cast %78 : vector<8xf32> to vector<8x1xf32>
    %80 = vector.broadcast %79 : vector<8x1xf32> to vector<8x8xf32>
    %81 = arith.subf %77, %80 : vector<8x8xf32>
    %82 = math.exp %81 : vector<8x8xf32>
    %cst_32 = arith.constant dense<0.000000e+00> : vector<8xf32>
    %83 = vector.multi_reduction <add>, %82, %cst_32 [1] : vector<8x8xf32> to vector<8xf32>
    %84 = vector.shape_cast %83 : vector<8xf32> to vector<8x1xf32>
    %85 = tpu.reciprocal %84 {approx = true} : vector<8x1xf32> -> vector<8x1xf32>
    %86 = vector.broadcast %85 : vector<8x1xf32> to vector<8x8xf32>
    %87 = arith.mulf %82, %86 : vector<8x8xf32>
    %88 = arith.truncf %87 : vector<8x8xf32> to vector<8x8xbf16>
    %cst_33 = arith.constant dense<0.000000e+00> : vector<8x32xf32>
    %89 = tpu.matmul %88, %74, %cst_33 {dimension_numbers = #tpu.dot_dimension_numbers<[1], [0], [0], [1], [0, 0, 1, 1], [], []>} : vector<8x8xbf16>, vector<8x32xbf16>, vector<8x32xf32> -> vector<8x32xf32>
    %90 = arith.truncf %89 : vector<8x32xf32> to vector<8x32xbf16>
    %c0_34 = arith.constant 0 : index
    %c0_35 = arith.constant 0 : index
    %c96 = arith.constant 96 : index
    %91 = vector.load %arg6[%c0_34, %c0_35, %c96] : memref<1x8x128xbf16, #tpu.memory_space<vmem>>, vector<1x8x32xbf16>
    %92 = vector.shape_cast %91 : vector<1x8x32xbf16> to vector<8x32xbf16>
    %93 = vector.shape_cast %90 : vector<8x32xbf16> to vector<1x8x32xbf16>
    tpu.vector_store %arg6[%c0_34, %c0_35, %c96], %93 {strides = array<i32>} : memref<1x8x128xbf16, #tpu.memory_space<vmem>>, vector<1x8x32xbf16>,
    return
  }
  func.func @transform_0(%arg0: i32, %arg1: i32, %arg2: i32) -> (i32, i32, i32) {
    %c0_i32 = arith.constant 0 : i32
    return %arg0, %arg2, %arg1 : i32, i32, i32
  }
  func.func @transform_1(%arg0: i32, %arg1: i32, %arg2: i32) -> (i32, i32, i32) {
    %c1_i32 = arith.constant 1 : i32
    %0 = arith.addi %c1_i32, %arg1 : i32
    %c0_i32 = arith.constant 0 : i32
    %c0_i32_0 = arith.constant 0 : i32
    return %arg0, %c0_i32, %0 : i32, i32, i32
  }
  func.func @transform_2(%arg0: i32, %arg1: i32, %arg2: i32) -> (i32, i32, i32) {
    %c2_i32 = arith.constant 2 : i32
    %0 = arith.addi %c2_i32, %arg1 : i32
    %c0_i32 = arith.constant 0 : i32
    %c0_i32_0 = arith.constant 0 : i32
    return %arg0, %c0_i32, %0 : i32, i32, i32
  }
  func.func @transform_3(%arg0: i32, %arg1: i32, %arg2: i32) -> (i32, i32, i32) {
    %c0_i32 = arith.constant 0 : i32
    return %arg0, %arg2, %arg1 : i32, i32, i32
  }
}

module attributes {stable_mosaic.version = 11 : i64} {
  func.func @_matmul_res_kernel(%arg0: i32, %arg1: memref<16x128xbf16, #tpu.memory_space<vmem>>, %arg2: memref<128x128xbf16, #tpu.memory_space<vmem>>, %arg3: memref<1x128xf32, #tpu.memory_space<vmem>>, %arg4: memref<16x128xbf16, #tpu.memory_space<vmem>>, %arg5: memref<16x128xbf16, #tpu.memory_space<vmem>>) attributes {dimension_semantics = [#tpu.dimension_semantics<parallel>], iteration_bounds = array<i64: 1>, scalar_prefetch = 0 : i64, scratch_operands = 0 : i64, tpu.core_type = #tpu.core_type<tc>, window_params = [{transform_indices = @transform_0, window_bounds = array<i64: 16, 128>}, {pipeline_mode = #tpu.pipeline_mode<synchronous>, transform_indices = @transform_1, window_bounds = array<i64: 128, 128>}, {pipeline_mode = #tpu.pipeline_mode<synchronous>, transform_indices = @transform_2, window_bounds = array<i64: 1, 128>}, {transform_indices = @transform_3, window_bounds = array<i64: 16, 128>}, {transform_indices = @transform_4, window_bounds = array<i64: 16, 128>}]} {
    %c0 = arith.constant 0 : index
    %c0_0 = arith.constant 0 : index
    %0 = vector.load %arg1[%c0, %c0_0] : memref<16x128xbf16, #tpu.memory_space<vmem>>, vector<16x128xbf16>
    %c0_1 = arith.constant 0 : index
    %c0_2 = arith.constant 0 : index
    %1 = vector.load %arg2[%c0_1, %c0_2] : memref<128x128xbf16, #tpu.memory_space<vmem>>, vector<128x128xbf16>
    %cst = arith.constant dense<0.000000e+00> : vector<16x128xf32>
    %2 = tpu.matmul %0, %1, %cst {dimension_numbers = #tpu.dot_dimension_numbers<[1], [0], [0], [1], [0, 0, 1, 1], [], []>} : vector<16x128xbf16>, vector<128x128xbf16>, vector<16x128xf32> -> vector<16x128xf32>
    %c0_3 = arith.constant 0 : index
    %c0_4 = arith.constant 0 : index
    %3 = vector.load %arg3[%c0_3, %c0_4] : memref<1x128xf32, #tpu.memory_space<vmem>>, vector<1x128xf32>
    %4 = vector.broadcast %3 : vector<1x128xf32> to vector<16x128xf32>
    %5 = arith.addf %2, %4 : vector<16x128xf32>
    %c0_5 = arith.constant 0 : index
    %c0_6 = arith.constant 0 : index
    %6 = vector.load %arg4[%c0_5, %c0_6] : memref<16x128xbf16, #tpu.memory_space<vmem>>, vector<16x128xbf16>
    %7 = arith.extf %6 : vector<16x128xbf16> to vector<16x128xf32>
    %8 = arith.addf %5, %7 : vector<16x128xf32>
    %9 = arith.truncf %8 : vector<16x128xf32> to vector<16x128xbf16>
    %c0_7 = arith.constant 0 : index
    %c0_8 = arith.constant 0 : index
    %10 = vector.load %arg5[%c0_7, %c0_8] : memref<16x128xbf16, #tpu.memory_space<vmem>>, vector<16x128xbf16>
    tpu.vector_store %arg5[%c0_7, %c0_8], %9 {strides = array<i32>} : memref<16x128xbf16, #tpu.memory_space<vmem>>, vector<16x128xbf16>,
    return
  }
  func.func @transform_0(%arg0: i32) -> (i32, i32) {
    %c0_i32 = arith.constant 0 : i32
    %c0_i32_0 = arith.constant 0 : i32
    return %arg0, %c0_i32 : i32, i32
  }
  func.func @transform_1(%arg0: i32) -> (i32, i32) {
    %c0_i32 = arith.constant 0 : i32
    %c0_i32_0 = arith.constant 0 : i32
    %c0_i32_1 = arith.constant 0 : i32
    return %c0_i32, %c0_i32_0 : i32, i32
  }
  func.func @transform_2(%arg0: i32) -> (i32, i32) {
    %c0_i32 = arith.constant 0 : i32
    %c0_i32_0 = arith.constant 0 : i32
    %c0_i32_1 = arith.constant 0 : i32
    return %c0_i32, %c0_i32_0 : i32, i32
  }
  func.func @transform_3(%arg0: i32) -> (i32, i32) {
    %c0_i32 = arith.constant 0 : i32
    %c0_i32_0 = arith.constant 0 : i32
    return %arg0, %c0_i32 : i32, i32
  }
  func.func @transform_4(%arg0: i32) -> (i32, i32) {
    %c0_i32 = arith.constant 0 : i32
    %c0_i32_0 = arith.constant 0 : i32
    return %arg0, %c0_i32 : i32, i32
  }
}

module attributes {stable_mosaic.version = 11 : i64} {
  func.func @_ln_matmul_kernel(%arg0: i32, %arg1: memref<16x128xbf16, #tpu.memory_space<vmem>>, %arg2: memref<1x128xf32, #tpu.memory_space<vmem>>, %arg3: memref<1x128xf32, #tpu.memory_space<vmem>>, %arg4: memref<128x256xbf16, #tpu.memory_space<vmem>>, %arg5: memref<1x256xf32, #tpu.memory_space<vmem>>, %arg6: memref<16x256xbf16, #tpu.memory_space<vmem>>) attributes {dimension_semantics = [#tpu.dimension_semantics<parallel>], iteration_bounds = array<i64: 1>, scalar_prefetch = 0 : i64, scratch_operands = 0 : i64, tpu.core_type = #tpu.core_type<tc>, window_params = [{transform_indices = @transform_0, window_bounds = array<i64: 16, 128>}, {pipeline_mode = #tpu.pipeline_mode<synchronous>, transform_indices = @transform_1, window_bounds = array<i64: 1, 128>}, {pipeline_mode = #tpu.pipeline_mode<synchronous>, transform_indices = @transform_2, window_bounds = array<i64: 1, 128>}, {pipeline_mode = #tpu.pipeline_mode<synchronous>, transform_indices = @transform_3, window_bounds = array<i64: 128, 256>}, {pipeline_mode = #tpu.pipeline_mode<synchronous>, transform_indices = @transform_4, window_bounds = array<i64: 1, 256>}, {transform_indices = @transform_5, window_bounds = array<i64: 16, 256>}]} {
    %c0 = arith.constant 0 : index
    %c0_0 = arith.constant 0 : index
    %0 = vector.load %arg1[%c0, %c0_0] : memref<16x128xbf16, #tpu.memory_space<vmem>>, vector<16x128xbf16>
    %1 = arith.extf %0 : vector<16x128xbf16> to vector<16x128xf32>
    %cst = arith.constant dense<0.000000e+00> : vector<16xf32>
    %2 = vector.multi_reduction <add>, %1, %cst [1] : vector<16x128xf32> to vector<16xf32>
    %3 = vector.shape_cast %2 : vector<16xf32> to vector<16x1xf32>
    %4 = arith.mulf %1, %1 : vector<16x128xf32>
    %cst_1 = arith.constant dense<0.000000e+00> : vector<16xf32>
    %5 = vector.multi_reduction <add>, %4, %cst_1 [1] : vector<16x128xf32> to vector<16xf32>
    %6 = vector.shape_cast %5 : vector<16xf32> to vector<16x1xf32>
    %cst_2 = arith.constant 7.812500e-03 : f32
    %7 = vector.broadcast %cst_2 : f32 to vector<16x1xf32>
    %8 = arith.mulf %3, %7 : vector<16x1xf32>
    %cst_3 = arith.constant 7.812500e-03 : f32
    %9 = vector.broadcast %cst_3 : f32 to vector<16x1xf32>
    %10 = arith.mulf %6, %9 : vector<16x1xf32>
    %11 = arith.mulf %8, %8 : vector<16x1xf32>
    %12 = arith.subf %10, %11 : vector<16x1xf32>
    %cst_4 = arith.constant 0.000000e+00 : f32
    %13 = vector.broadcast %cst_4 : f32 to vector<16x1xf32>
    %14 = arith.maximumf %12, %13 : vector<16x1xf32>
    %15 = vector.broadcast %8 : vector<16x1xf32> to vector<16x128xf32>
    %16 = arith.subf %1, %15 : vector<16x128xf32>
    %cst_5 = arith.constant 9.99999997E-7 : f32
    %17 = vector.broadcast %cst_5 : f32 to vector<16x1xf32>
    %18 = arith.addf %14, %17 : vector<16x1xf32>
    %19 = math.rsqrt %18 : vector<16x1xf32>
    %20 = vector.broadcast %19 : vector<16x1xf32> to vector<16x128xf32>
    %21 = arith.mulf %16, %20 : vector<16x128xf32>
    %c0_6 = arith.constant 0 : index
    %c0_7 = arith.constant 0 : index
    %22 = vector.load %arg2[%c0_6, %c0_7] : memref<1x128xf32, #tpu.memory_space<vmem>>, vector<1x128xf32>
    %23 = vector.broadcast %22 : vector<1x128xf32> to vector<16x128xf32>
    %24 = arith.mulf %21, %23 : vector<16x128xf32>
    %c0_8 = arith.constant 0 : index
    %c0_9 = arith.constant 0 : index
    %25 = vector.load %arg3[%c0_8, %c0_9] : memref<1x128xf32, #tpu.memory_space<vmem>>, vector<1x128xf32>
    %26 = vector.broadcast %25 : vector<1x128xf32> to vector<16x128xf32>
    %27 = arith.addf %24, %26 : vector<16x128xf32>
    %28 = arith.truncf %27 : vector<16x128xf32> to vector<16x128xbf16>
    %c0_10 = arith.constant 0 : index
    %c0_11 = arith.constant 0 : index
    %29 = vector.load %arg4[%c0_10, %c0_11] : memref<128x256xbf16, #tpu.memory_space<vmem>>, vector<128x256xbf16>
    %cst_12 = arith.constant dense<0.000000e+00> : vector<16x256xf32>
    %30 = tpu.matmul %28, %29, %cst_12 {dimension_numbers = #tpu.dot_dimension_numbers<[1], [0], [0], [1], [0, 0, 1, 1], [], []>} : vector<16x128xbf16>, vector<128x256xbf16>, vector<16x256xf32> -> vector<16x256xf32>
    %c0_13 = arith.constant 0 : index
    %c0_14 = arith.constant 0 : index
    %31 = vector.load %arg5[%c0_13, %c0_14] : memref<1x256xf32, #tpu.memory_space<vmem>>, vector<1x256xf32>
    %32 = vector.broadcast %31 : vector<1x256xf32> to vector<16x256xf32>
    %33 = arith.addf %30, %32 : vector<16x256xf32>
    %cst_15 = arith.constant 0.000000e+00 : f32
    %34 = vector.broadcast %cst_15 : f32 to vector<16x256xf32>
    %35 = arith.maximumf %33, %34 : vector<16x256xf32>
    %36 = arith.truncf %35 : vector<16x256xf32> to vector<16x256xbf16>
    %c0_16 = arith.constant 0 : index
    %c0_17 = arith.constant 0 : index
    %37 = vector.load %arg6[%c0_16, %c0_17] : memref<16x256xbf16, #tpu.memory_space<vmem>>, vector<16x256xbf16>
    tpu.vector_store %arg6[%c0_16, %c0_17], %36 {strides = array<i32>} : memref<16x256xbf16, #tpu.memory_space<vmem>>, vector<16x256xbf16>,
    return
  }
  func.func @transform_0(%arg0: i32) -> (i32, i32) {
    %c0_i32 = arith.constant 0 : i32
    %c0_i32_0 = arith.constant 0 : i32
    return %arg0, %c0_i32 : i32, i32
  }
  func.func @transform_1(%arg0: i32) -> (i32, i32) {
    %c0_i32 = arith.constant 0 : i32
    %c0_i32_0 = arith.constant 0 : i32
    %c0_i32_1 = arith.constant 0 : i32
    return %c0_i32, %c0_i32_0 : i32, i32
  }
  func.func @transform_2(%arg0: i32) -> (i32, i32) {
    %c0_i32 = arith.constant 0 : i32
    %c0_i32_0 = arith.constant 0 : i32
    %c0_i32_1 = arith.constant 0 : i32
    return %c0_i32, %c0_i32_0 : i32, i32
  }
  func.func @transform_3(%arg0: i32) -> (i32, i32) {
    %c0_i32 = arith.constant 0 : i32
    %c0_i32_0 = arith.constant 0 : i32
    %c0_i32_1 = arith.constant 0 : i32
    return %c0_i32, %c0_i32_0 : i32, i32
  }
  func.func @transform_4(%arg0: i32) -> (i32, i32) {
    %c0_i32 = arith.constant 0 : i32
    %c0_i32_0 = arith.constant 0 : i32
    %c0_i32_1 = arith.constant 0 : i32
    return %c0_i32, %c0_i32_0 : i32, i32
  }
  func.func @transform_5(%arg0: i32) -> (i32, i32) {
    %c0_i32 = arith.constant 0 : i32
    %c0_i32_0 = arith.constant 0 : i32
    return %arg0, %c0_i32 : i32, i32
  }
}

module attributes {stable_mosaic.version = 11 : i64} {
  func.func @_matmul_res_kernel(%arg0: i32, %arg1: memref<16x256xbf16, #tpu.memory_space<vmem>>, %arg2: memref<256x128xbf16, #tpu.memory_space<vmem>>, %arg3: memref<1x128xf32, #tpu.memory_space<vmem>>, %arg4: memref<16x128xbf16, #tpu.memory_space<vmem>>, %arg5: memref<16x128xbf16, #tpu.memory_space<vmem>>) attributes {dimension_semantics = [#tpu.dimension_semantics<parallel>], iteration_bounds = array<i64: 1>, scalar_prefetch = 0 : i64, scratch_operands = 0 : i64, tpu.core_type = #tpu.core_type<tc>, window_params = [{transform_indices = @transform_0, window_bounds = array<i64: 16, 256>}, {pipeline_mode = #tpu.pipeline_mode<synchronous>, transform_indices = @transform_1, window_bounds = array<i64: 256, 128>}, {pipeline_mode = #tpu.pipeline_mode<synchronous>, transform_indices = @transform_2, window_bounds = array<i64: 1, 128>}, {transform_indices = @transform_3, window_bounds = array<i64: 16, 128>}, {transform_indices = @transform_4, window_bounds = array<i64: 16, 128>}]} {
    %c0 = arith.constant 0 : index
    %c0_0 = arith.constant 0 : index
    %0 = vector.load %arg1[%c0, %c0_0] : memref<16x256xbf16, #tpu.memory_space<vmem>>, vector<16x256xbf16>
    %c0_1 = arith.constant 0 : index
    %c0_2 = arith.constant 0 : index
    %1 = vector.load %arg2[%c0_1, %c0_2] : memref<256x128xbf16, #tpu.memory_space<vmem>>, vector<256x128xbf16>
    %cst = arith.constant dense<0.000000e+00> : vector<16x128xf32>
    %2 = tpu.matmul %0, %1, %cst {dimension_numbers = #tpu.dot_dimension_numbers<[1], [0], [0], [1], [0, 0, 1, 1], [], []>} : vector<16x256xbf16>, vector<256x128xbf16>, vector<16x128xf32> -> vector<16x128xf32>
    %c0_3 = arith.constant 0 : index
    %c0_4 = arith.constant 0 : index
    %3 = vector.load %arg3[%c0_3, %c0_4] : memref<1x128xf32, #tpu.memory_space<vmem>>, vector<1x128xf32>
    %4 = vector.broadcast %3 : vector<1x128xf32> to vector<16x128xf32>
    %5 = arith.addf %2, %4 : vector<16x128xf32>
    %c0_5 = arith.constant 0 : index
    %c0_6 = arith.constant 0 : index
    %6 = vector.load %arg4[%c0_5, %c0_6] : memref<16x128xbf16, #tpu.memory_space<vmem>>, vector<16x128xbf16>
    %7 = arith.extf %6 : vector<16x128xbf16> to vector<16x128xf32>
    %8 = arith.addf %5, %7 : vector<16x128xf32>
    %9 = arith.truncf %8 : vector<16x128xf32> to vector<16x128xbf16>
    %c0_7 = arith.constant 0 : index
    %c0_8 = arith.constant 0 : index
    %10 = vector.load %arg5[%c0_7, %c0_8] : memref<16x128xbf16, #tpu.memory_space<vmem>>, vector<16x128xbf16>
    tpu.vector_store %arg5[%c0_7, %c0_8], %9 {strides = array<i32>} : memref<16x128xbf16, #tpu.memory_space<vmem>>, vector<16x128xbf16>,
    return
  }
  func.func @transform_0(%arg0: i32) -> (i32, i32) {
    %c0_i32 = arith.constant 0 : i32
    %c0_i32_0 = arith.constant 0 : i32
    return %arg0, %c0_i32 : i32, i32
  }
  func.func @transform_1(%arg0: i32) -> (i32, i32) {
    %c0_i32 = arith.constant 0 : i32
    %c0_i32_0 = arith.constant 0 : i32
    %c0_i32_1 = arith.constant 0 : i32
    return %c0_i32, %c0_i32_0 : i32, i32
  }
  func.func @transform_2(%arg0: i32) -> (i32, i32) {
    %c0_i32 = arith.constant 0 : i32
    %c0_i32_0 = arith.constant 0 : i32
    %c0_i32_1 = arith.constant 0 : i32
    return %c0_i32, %c0_i32_0 : i32, i32
  }
  func.func @transform_3(%arg0: i32) -> (i32, i32) {
    %c0_i32 = arith.constant 0 : i32
    %c0_i32_0 = arith.constant 0 : i32
    return %arg0, %c0_i32 : i32, i32
  }
  func.func @transform_4(%arg0: i32) -> (i32, i32) {
    %c0_i32 = arith.constant 0 : i32
    %c0_i32_0 = arith.constant 0 : i32
    return %arg0, %c0_i32 : i32, i32
  }
}

</mosaic_0001>

<llo_original>
// kernel: encoder_wrapper_forward.23
$region0: #{encoder_wrapper_forward.23}
  #allocation0 [shape = 'u32[]', space=smem, size = 0x4, offset = 0x4, fixed_abs, tag = 'smem constant byte address 0x4 - core index']
  #allocation1 [shape = 'u32[144,128]{1,0:T(1,128)}', space=vmem, size = 0x12000, scoped, tag = 'internal scratch']
  %s0 = inlined_call_operand.vmem [shape: bf16[32,128], index: 0, kind: input, shape index: {}]
  %s1 = inlined_call_operand.vmem [shape: bf16[128,128], index: 1, kind: input, shape index: {}]
  %s2 = inlined_call_operand.vmem [shape: f32[1,128], index: 2, kind: input, shape index: {}]
  %s3 = inlined_call_operand.vmem [shape: bf16[32,128], index: 3, kind: input, shape index: {}]
  %s4 = inlined_call_operand.vmem [shape: bf16[32,128], index: 4, kind: output, shape index: {}]
  %s5 = sld [smem:[#allocation0]]
  $region26: #{encoder_wrapper_forward.23} parent=0
    _
  %s7 = ssub.s32 1, %s5
  %s8 = scalar_select 0, %s7, %s5
  // Predicated region
  $region2: #{encoder_wrapper_forward.23} parent=0 // pred_check
    _
  $region3: #{encoder_wrapper_forward.23} parent=0 // pred_check_branch
    %10 = sbr.rel (0) target = $region5
  $region4: #{encoder_wrapper_forward.23} parent=0 // pred_region
    _
  $region5: #{encoder_wrapper_forward.23} parent=0 // pred_fallthru
    _
  // Predicated region
  $region6: #{encoder_wrapper_forward.23} parent=0 // pred_check
    _
  $region7: #{encoder_wrapper_forward.23} parent=0 // pred_check_branch
    %12 = sbr.rel (0) target = $region9
  $region8: #{encoder_wrapper_forward.23} parent=0 // pred_region
    _
  $region9: #{encoder_wrapper_forward.23} parent=0 // pred_fallthru
    _
  // Predicated region
  $region10: #{encoder_wrapper_forward.23} parent=0 // pred_check
    _
  $region11: #{encoder_wrapper_forward.23} parent=0 // pred_check_branch
    %14 = sbr.rel (0) target = $region13
  $region12: #{encoder_wrapper_forward.23} parent=0 // pred_region
    _
  $region13: #{encoder_wrapper_forward.23} parent=0 // pred_fallthru
    _
  // Predicated region
  $region14: #{encoder_wrapper_forward.23} parent=0 // pred_check
    _
  $region15: #{encoder_wrapper_forward.23} parent=0 // pred_check_branch
    %16 = sbr.rel (0) target = $region17
  $region16: #{encoder_wrapper_forward.23} parent=0 // pred_region
    _
  $region17: #{encoder_wrapper_forward.23} parent=0 // pred_fallthru
    _
  %v18 = vld [vmem:[%s0] sm:$0xf]
  %v19 = vld [vmem:[%s0 + $0x4] sm:$0xf]
  %v20 = vld [vmem:[%s0 + $0x8] sm:$0xf]
  %v21 = vld [vmem:[%s0 + $0xc] sm:$0xf]
  %v22 = vld [vmem:[%s1] sm:$0xf]
  %v23 = vld [vmem:[%s1 + $0x4] sm:$0xf]
  %v24 = vld [vmem:[%s1 + $0x8] sm:$0xf]
  %v25 = vld [vmem:[%s1 + $0xc] sm:$0xf]
  %v26 = vld [vmem:[%s1 + $0x10] sm:$0xf]
  %v27 = vld [vmem:[%s1 + $0x14] sm:$0xf]
  %v28 = vld [vmem:[%s1 + $0x18] sm:$0xf]
  %v29 = vld [vmem:[%s1 + $0x1c] sm:$0xf]
  %v30 = vld [vmem:[%s1 + $0x20] sm:$0xf]
  %v31 = vld [vmem:[%s1 + $0x24] sm:$0xf]
  %v32 = vld [vmem:[%s1 + $0x28] sm:$0xf]
  %v33 = vld [vmem:[%s1 + $0x2c] sm:$0xf]
  %v34 = vld [vmem:[%s1 + $0x30] sm:$0xf]
  %v35 = vld [vmem:[%s1 + $0x34] sm:$0xf]
  %v36 = vld [vmem:[%s1 + $0x38] sm:$0xf]
  %v37 = vld [vmem:[%s1 + $0x3c] sm:$0xf]
  %v38 = vld [vmem:[%s2] sm:$0x1]
  %v40 = vlaneseq
  %v41 = vshrl.u32 %v40, 7
  %v42 = vsub.s32 0, %v41
  %v43 = vrot.slane %v38, %v42
  %v49 = vunpack.c.l.b16 %v18
  %v50 = vunpack.c.l.b16 %v19
  %v51 = vunpack.c.l.b16 %v20
  %v52 = vunpack.c.l.b16 %v21
  %v53 = vpack.c.b16 %v50, %v49
  %v54 = vpack.c.b16 %v52, %v51
  %v73 = vunpack.c.l.b16 %v22
  %v74 = vunpack.c.l.b16 %v23
  %v75 = vunpack.c.l.b16 %v24
  %v76 = vunpack.c.l.b16 %v25
  %v77 = vunpack.c.l.b16 %v26
  %v78 = vunpack.c.l.b16 %v27
  %v79 = vunpack.c.l.b16 %v28
  %v80 = vunpack.c.l.b16 %v29
  %v81 = vunpack.c.l.b16 %v30
  %v82 = vunpack.c.l.b16 %v31
  %v83 = vunpack.c.l.b16 %v32
  %v84 = vunpack.c.l.b16 %v33
  %v85 = vunpack.c.l.b16 %v34
  %v86 = vunpack.c.l.b16 %v35
  %v87 = vunpack.c.l.b16 %v36
  %v88 = vunpack.c.l.b16 %v37
  %v89 = vpack.c.b16 %v74, %v73
  %v90 = vpack.c.b16 %v76, %v75
  %v91 = vpack.c.b16 %v78, %v77
  %v92 = vpack.c.b16 %v80, %v79
  %v93 = vpack.c.b16 %v82, %v81
  %v94 = vpack.c.b16 %v84, %v83
  %v95 = vpack.c.b16 %v86, %v85
  %v96 = vpack.c.b16 %v88, %v87
  %105 = vmatprep.subr.bf16.mxu0 0
  %106 = vmatpush1.bf16.msra.mxu0 %v96
  %107 = vmatprep.subr.bf16.mxu0 0
  %108 = vmatpush1.bf16.msra.mxu0 %v95
  %109 = vmatprep.subr.bf16.mxu0 0
  %110 = vmatpush1.bf16.msra.mxu0 %v94
  %111 = vmatprep.subr.bf16.mxu0 0
  %112 = vmatpush1.bf16.msra.mxu0 %v93
  %113 = vmatprep.subr.bf16.mxu0 0
  %114 = vmatpush1.bf16.msra.mxu0 %v92
  %115 = vmatprep.subr.bf16.mxu0 0
  %116 = vmatpush1.bf16.msra.mxu0 %v91
  %117 = vmatprep.subr.bf16.mxu0 0
  %118 = vmatpush1.bf16.msra.mxu0 %v90
  %119 = vmatprep.subr.bf16.mxu0 0
  %120 = vmatpush1.bf16.msra.mxu0 %v89
  %121 = vmatprep.subr.bf16.mxu0 0
  %122 = vmatpush2.bf16.msra.mxu0 0
  %123 = vmatprep.subr.bf16.mxu0 0
  %124 = vmatpush2.bf16.msra.mxu0 0
  %125 = vmatprep.subr.bf16.mxu0 0
  %126 = vmatpush2.bf16.msra.mxu0 0
  %127 = vmatprep.subr.bf16.mxu0 0
  %128 = vmatpush2.bf16.msra.mxu0 0
  %129 = vmatprep.subr.bf16.mxu0 0
  %130 = vmatpush2.bf16.msra.mxu0 0
  %131 = vmatprep.subr.bf16.mxu0 0
  %132 = vmatpush2.bf16.msra.mxu0 0
  %133 = vmatprep.subr.bf16.mxu0 0
  %134 = vmatpush2.bf16.msra.mxu0 0
  %135 = vmatprep.subr.bf16.mxu0 0
  %136 = vmatpush2.bf16.msra.mxu0 0
  %137 = vmatprep.mubr.bf16.mxu0 0
  %138 = vmatmul.mubr.bf16.gmra.mxu0 %v53
  %v139 = vpop.f32.mrf.mxu0
  %v140 = vadd.f32 %v43, %v139
  %v141 = vpop.f32.mrf.mxu0
  %v142 = vpop.f32.mrf.mxu0
  %v143 = vadd.f32 %v43, %v142
  %v144 = vpop.f32.mrf.mxu0
  %145 = vmatprep.mubr.bf16.mxu0 0
  %146 = vmatmul.mubr.bf16.gmra.mxu0 %v54
  %v147 = vpop.f32.mrf.mxu0
  %v148 = vadd.f32 %v43, %v147
  %v149 = vpop.f32.mrf.mxu0
  %v150 = vpop.f32.mrf.mxu0
  %v151 = vadd.f32 %v43, %v150
  %v152 = vpop.f32.mrf.mxu0
  %153 = vdwg.mxu0
  %v154 = vld [vmem:[%s3] sm:$0xf]
  %v155 = vld [vmem:[%s3 + $0x4] sm:$0xf]
  %v156 = vld [vmem:[%s3 + $0x8] sm:$0xf]
  %v157 = vld [vmem:[%s3 + $0xc] sm:$0xf]
  %v158 = vunpack.c.l.bf16 %v154
  %v159 = vunpack.c.l.bf16 %v155
  %v160 = vunpack.c.l.bf16 %v156
  %v161 = vunpack.c.l.bf16 %v157
  %v162 = vadd.f32 %v140, %v158
  %v163 = vadd.f32 %v143, %v159
  %v164 = vadd.f32 %v148, %v160
  %v165 = vadd.f32 %v151, %v161
  %v166 = vpack.c.bf16 %v163, %v162
  %v167 = vpack.c.bf16 %v165, %v164
  %v170 = vunpack.c.l.b16 %v166
  %v171 = vunpack.c.h.b16 %v166
  %v172 = vunpack.c.l.b16 %v167
  %v173 = vunpack.c.h.b16 %v167
  %v174 = vpack.c.b16 %v170, %v170
  %v175 = vpack.c.b16 %v171, %v171
  %v176 = vpack.c.b16 %v172, %v172
  %v177 = vpack.c.b16 %v173, %v173
  %182 = vst [vmem:[%s4] sm:$0xf] %v174
  %183 = vst [vmem:[%s4 + $0x4] sm:$0xf] %v175
  %184 = vst [vmem:[%s4 + $0x8] sm:$0xf] %v176
  %185 = vst [vmem:[%s4 + $0xc] sm:$0xf] %v177
  // Predicated region
  $region18: #{encoder_wrapper_forward.23} parent=0 // pred_check
    _
  $region19: #{encoder_wrapper_forward.23} parent=0 // pred_check_branch
    %187 = sbr.rel (0) target = $region21
  $region20: #{encoder_wrapper_forward.23} parent=0 // pred_region
    _
  $region21: #{encoder_wrapper_forward.23} parent=0 // pred_fallthru
    _
  // Predicated region
  $region22: #{encoder_wrapper_forward.23} parent=0 // pred_check
    _
  $region23: #{encoder_wrapper_forward.23} parent=0 // pred_check_branch
    %189 = sbr.rel (0) target = $region25
  $region24: #{encoder_wrapper_forward.23} parent=0 // pred_region
    _
  $region25: #{encoder_wrapper_forward.23} parent=0 // pred_fallthru
    _

// kernel: encoder_wrapper_forward.24
$region0: #{encoder_wrapper_forward.24}
  #allocation0 [shape = 'u32[]', space=smem, size = 0x4, offset = 0x4, fixed_abs, tag = 'smem constant byte address 0x4 - core index']
  #allocation1 [shape = 'u32[144,128]{1,0:T(1,128)}', space=vmem, size = 0x12000, scoped, tag = 'internal scratch']
  %s0 = inlined_call_operand.vmem [shape: bf16[32,128], index: 0, kind: input, shape index: {}]
  %s1 = inlined_call_operand.vmem [shape: f32[1,128], index: 1, kind: input, shape index: {}]
  %s2 = inlined_call_operand.vmem [shape: f32[1,128], index: 2, kind: input, shape index: {}]
  %s3 = inlined_call_operand.vmem [shape: bf16[128,256], index: 3, kind: input, shape index: {}]
  %s4 = inlined_call_operand.vmem [shape: f32[1,256], index: 4, kind: input, shape index: {}]
  %s5 = inlined_call_operand.vmem [shape: bf16[32,256], index: 5, kind: output, shape index: {}]
  %s6 = sld [smem:[#allocation0]]
  $region30: #{encoder_wrapper_forward.24} parent=0
    _
  %s8 = ssub.s32 1, %s6
  %s9 = scalar_select 0, %s8, %s6
  // Predicated region
  $region2: #{encoder_wrapper_forward.24} parent=0 // pred_check
    _
  $region3: #{encoder_wrapper_forward.24} parent=0 // pred_check_branch
    %11 = sbr.rel (0) target = $region5
  $region4: #{encoder_wrapper_forward.24} parent=0 // pred_region
    _
  $region5: #{encoder_wrapper_forward.24} parent=0 // pred_fallthru
    _
  // Predicated region
  $region6: #{encoder_wrapper_forward.24} parent=0 // pred_check
    _
  $region7: #{encoder_wrapper_forward.24} parent=0 // pred_check_branch
    %13 = sbr.rel (0) target = $region9
  $region8: #{encoder_wrapper_forward.24} parent=0 // pred_region
    _
  $region9: #{encoder_wrapper_forward.24} parent=0 // pred_fallthru
    _
  // Predicated region
  $region10: #{encoder_wrapper_forward.24} parent=0 // pred_check
    _
  $region11: #{encoder_wrapper_forward.24} parent=0 // pred_check_branch
    %15 = sbr.rel (0) target = $region13
  $region12: #{encoder_wrapper_forward.24} parent=0 // pred_region
    _
  $region13: #{encoder_wrapper_forward.24} parent=0 // pred_fallthru
    _
  // Predicated region
  $region14: #{encoder_wrapper_forward.24} parent=0 // pred_check
    _
  $region15: #{encoder_wrapper_forward.24} parent=0 // pred_check_branch
    %17 = sbr.rel (0) target = $region17
  $region16: #{encoder_wrapper_forward.24} parent=0 // pred_region
    _
  $region17: #{encoder_wrapper_forward.24} parent=0 // pred_fallthru
    _
  // Predicated region
  $region18: #{encoder_wrapper_forward.24} parent=0 // pred_check
    _
  $region19: #{encoder_wrapper_forward.24} parent=0 // pred_check_branch
    %19 = sbr.rel (0) target = $region21
  $region20: #{encoder_wrapper_forward.24} parent=0 // pred_region
    _
  $region21: #{encoder_wrapper_forward.24} parent=0 // pred_fallthru
    _
  %v21 = vld [vmem:[%s0] sm:$0xf]
  %v22 = vld [vmem:[%s0 + $0x4] sm:$0xf]
  %v23 = vld [vmem:[%s0 + $0x8] sm:$0xf]
  %v24 = vld [vmem:[%s0 + $0xc] sm:$0xf]
  %v25 = vunpack.c.l.bf16 %v21
  %v26 = vunpack.c.l.bf16 %v22
  %v27 = vunpack.c.l.bf16 %v23
  %v28 = vunpack.c.l.bf16 %v24
  %29 = vadd.xlane.f32.xlu0 %v25
  %v30 = vpop.xlane.xlu0 %29
  %31 = vadd.xlane.f32.xlu0 %v26
  %v32 = vpop.xlane.xlu0 %31
  %33 = vadd.xlane.f32.xlu0 %v27
  %v34 = vpop.xlane.xlu0 %33
  %35 = vadd.xlane.f32.xlu0 %v28
  %v36 = vpop.xlane.xlu0 %35
  %v37 = vmul.f32 %v25, %v25
  %v38 = vmul.f32 %v26, %v26
  %v39 = vmul.f32 %v27, %v27
  %v40 = vmul.f32 %v28, %v28
  %41 = vadd.xlane.f32.xlu0 %v37
  %v42 = vpop.xlane.xlu0 %41
  %43 = vadd.xlane.f32.xlu0 %v38
  %v44 = vpop.xlane.xlu0 %43
  %45 = vadd.xlane.f32.xlu0 %v39
  %v46 = vpop.xlane.xlu0 %45
  %47 = vadd.xlane.f32.xlu0 %v40
  %v48 = vpop.xlane.xlu0 %47
  %v49 = vmul.f32 %v30, 0.0078125
  %v50 = vmul.f32 %v32, 0.0078125
  %v51 = vmul.f32 %v34, 0.0078125
  %v52 = vmul.f32 %v36, 0.0078125
  %v53 = vmul.f32 %v42, 0.0078125
  %v54 = vmul.f32 %v44, 0.0078125
  %v55 = vmul.f32 %v46, 0.0078125
  %v56 = vmul.f32 %v48, 0.0078125
  %v57 = vmul.f32 %v49, %v49
  %v58 = vmul.f32 %v50, %v50
  %v59 = vmul.f32 %v51, %v51
  %v60 = vmul.f32 %v52, %v52
  %v61 = vsub.f32 %v53, %v57
  %v62 = vsub.f32 %v54, %v58
  %v63 = vsub.f32 %v55, %v59
  %v64 = vsub.f32 %v56, %v60
  %v65 = vmax.f32 %v61, 0.0
  %v66 = vmax.f32 %v62, 0.0
  %v67 = vmax.f32 %v63, 0.0
  %v68 = vmax.f32 %v64, 0.0
  %v69 = vsub.f32 %v25, %v49
  %v70 = vsub.f32 %v26, %v50
  %v71 = vsub.f32 %v27, %v51
  %v72 = vsub.f32 %v28, %v52
  %v73 = vadd.f32 %v65, 1e-06
  %v74 = vadd.f32 %v66, 1e-06
  %v75 = vadd.f32 %v67, 1e-06
  %v76 = vadd.f32 %v68, 1e-06
  %v77 = vrsqrt.pop %v73
  %v78 = vrsqrt.pop %v74
  %v79 = vrsqrt.pop %v75
  %v80 = vrsqrt.pop %v76
  %v81 = vmul.f32 %v69, %v77
  %v82 = vmul.f32 %v70, %v78
  %v83 = vmul.f32 %v71, %v79
  %v84 = vmul.f32 %v72, %v80
  %v85 = vld [vmem:[%s1] sm:$0x1]
  %v87 = vlaneseq
  %v88 = vshrl.u32 %v87, 7
  %v89 = vsub.s32 0, %v88
  %v90 = vrot.slane %v85, %v89
  %v92 = vmul.f32 %v81, %v90
  %v93 = vmul.f32 %v82, %v90
  %v94 = vmul.f32 %v83, %v90
  %v95 = vmul.f32 %v84, %v90
  %v96 = vld [vmem:[%s2] sm:$0x1]
  %v98 = vlaneseq
  %v99 = vshrl.u32 %v98, 7
  %v100 = vsub.s32 0, %v99
  %v101 = vrot.slane %v96, %v100
  %v103 = vadd.f32 %v92, %v101
  %v104 = vadd.f32 %v93, %v101
  %v105 = vadd.f32 %v94, %v101
  %v106 = vadd.f32 %v95, %v101
  %v107 = vpack.c.bf16 %v104, %v103
  %v108 = vpack.c.bf16 %v106, %v105
  %v109 = vld [vmem:[%s3] sm:$0xff]
  %v110 = vld [vmem:[%s3 + $0x8] sm:$0xff]
  %v111 = vld [vmem:[%s3 + $0x10] sm:$0xff]
  %v112 = vld [vmem:[%s3 + $0x18] sm:$0xff]
  %v113 = vld [vmem:[%s3 + $0x20] sm:$0xff]
  %v114 = vld [vmem:[%s3 + $0x28] sm:$0xff]
  %v115 = vld [vmem:[%s3 + $0x30] sm:$0xff]
  %v116 = vld [vmem:[%s3 + $0x38] sm:$0xff]
  %v117 = vld [vmem:[%s3 + $0x40] sm:$0xff]
  %v118 = vld [vmem:[%s3 + $0x48] sm:$0xff]
  %v119 = vld [vmem:[%s3 + $0x50] sm:$0xff]
  %v120 = vld [vmem:[%s3 + $0x58] sm:$0xff]
  %v121 = vld [vmem:[%s3 + $0x60] sm:$0xff]
  %v122 = vld [vmem:[%s3 + $0x68] sm:$0xff]
  %v123 = vld [vmem:[%s3 + $0x70] sm:$0xff]
  %v124 = vld [vmem:[%s3 + $0x78] sm:$0xff]
  %v125 = vld [vmem:[%s4] sm:$0x3]
  %v127 = vlaneseq
  %v128 = vshrl.u32 %v127, 7
  %v129 = vsub.s32 0, %v128
  %v130 = vrot.slane %v125, %v129
  %v131 = vlaneseq
  %v132 = vshrl.u32 %v131, 7
  %v133 = vsub.s32 1, %v132
  %v134 = vrot.slane %v125, %v133
  %v153 = vunpack.c.l.b16 %v109
  %v154 = vunpack.c.h.b16 %v109
  %v155 = vunpack.c.l.b16 %v110
  %v156 = vunpack.c.h.b16 %v110
  %v157 = vunpack.c.l.b16 %v111
  %v158 = vunpack.c.h.b16 %v111
  %v159 = vunpack.c.l.b16 %v112
  %v160 = vunpack.c.h.b16 %v112
  %v161 = vunpack.c.l.b16 %v113
  %v162 = vunpack.c.h.b16 %v113
  %v163 = vunpack.c.l.b16 %v114
  %v164 = vunpack.c.h.b16 %v114
  %v165 = vunpack.c.l.b16 %v115
  %v166 = vunpack.c.h.b16 %v115
  %v167 = vunpack.c.l.b16 %v116
  %v168 = vunpack.c.h.b16 %v116
  %v169 = vunpack.c.l.b16 %v117
  %v170 = vunpack.c.h.b16 %v117
  %v171 = vunpack.c.l.b16 %v118
  %v172 = vunpack.c.h.b16 %v118
  %v173 = vunpack.c.l.b16 %v119
  %v174 = vunpack.c.h.b16 %v119
  %v175 = vunpack.c.l.b16 %v120
  %v176 = vunpack.c.h.b16 %v120
  %v177 = vunpack.c.l.b16 %v121
  %v178 = vunpack.c.h.b16 %v121
  %v179 = vunpack.c.l.b16 %v122
  %v180 = vunpack.c.h.b16 %v122
  %v181 = vunpack.c.l.b16 %v123
  %v182 = vunpack.c.h.b16 %v123
  %v183 = vunpack.c.l.b16 %v124
  %v184 = vunpack.c.h.b16 %v124
  %v185 = vpack.c.b16 %v155, %v153
  %v186 = vpack.c.b16 %v156, %v154
  %v187 = vpack.c.b16 %v159, %v157
  %v188 = vpack.c.b16 %v160, %v158
  %v189 = vpack.c.b16 %v163, %v161
  %v190 = vpack.c.b16 %v164, %v162
  %v191 = vpack.c.b16 %v167, %v165
  %v192 = vpack.c.b16 %v168, %v166
  %v193 = vpack.c.b16 %v171, %v169
  %v194 = vpack.c.b16 %v172, %v170
  %v195 = vpack.c.b16 %v175, %v173
  %v196 = vpack.c.b16 %v176, %v174
  %v197 = vpack.c.b16 %v179, %v177
  %v198 = vpack.c.b16 %v180, %v178
  %v199 = vpack.c.b16 %v183, %v181
  %v200 = vpack.c.b16 %v184, %v182
  %217 = vmatprep.subr.bf16.mxu0 %v200
  %218 = vmatpush1.bf16.msra.mxu0 %v199
  %219 = vmatprep.subr.bf16.mxu0 %v198
  %220 = vmatpush1.bf16.msra.mxu0 %v197
  %221 = vmatprep.subr.bf16.mxu0 %v196
  %222 = vmatpush1.bf16.msra.mxu0 %v195
  %223 = vmatprep.subr.bf16.mxu0 %v194
  %224 = vmatpush1.bf16.msra.mxu0 %v193
  %225 = vmatprep.subr.bf16.mxu0 %v192
  %226 = vmatpush1.bf16.msra.mxu0 %v191
  %227 = vmatprep.subr.bf16.mxu0 %v190
  %228 = vmatpush1.bf16.msra.mxu0 %v189
  %229 = vmatprep.subr.bf16.mxu0 %v188
  %230 = vmatpush1.bf16.msra.mxu0 %v187
  %231 = vmatprep.subr.bf16.mxu0 %v186
  %232 = vmatpush1.bf16.msra.mxu0 %v185
  %233 = vmatprep.subr.bf16.mxu0 0
  %234 = vmatpush2.bf16.msra.mxu0 0
  %235 = vmatprep.subr.bf16.mxu0 0
  %236 = vmatpush2.bf16.msra.mxu0 0
  %237 = vmatprep.subr.bf16.mxu0 0
  %238 = vmatpush2.bf16.msra.mxu0 0
  %239 = vmatprep.subr.bf16.mxu0 0
  %240 = vmatpush2.bf16.msra.mxu0 0
  %241 = vmatprep.subr.bf16.mxu0 0
  %242 = vmatpush2.bf16.msra.mxu0 0
  %243 = vmatprep.subr.bf16.mxu0 0
  %244 = vmatpush2.bf16.msra.mxu0 0
  %245 = vmatprep.subr.bf16.mxu0 0
  %246 = vmatpush2.bf16.msra.mxu0 0
  %247 = vmatprep.subr.bf16.mxu0 0
  %248 = vmatpush2.bf16.msra.mxu0 0
  %249 = vmatprep.mubr.bf16.mxu0 0
  %250 = vmatmul.mubr.bf16.gmra.mxu0 %v107
  %v251 = vpop.f32.mrf.mxu0
  %v252 = vadd.f32 %v130, %v251
  %v253 = vpop.f32.mrf.mxu0
  %v254 = vadd.f32 %v134, %v253
  %v255 = vpop.f32.mrf.mxu0
  %v256 = vadd.f32 %v130, %v255
  %v257 = vpop.f32.mrf.mxu0
  %v258 = vadd.f32 %v134, %v257
  %259 = vmatprep.mubr.bf16.mxu0 0
  %260 = vmatmul.mubr.bf16.gmra.mxu0 %v108
  %v261 = vpop.f32.mrf.mxu0
  %v262 = vadd.f32 %v130, %v261
  %v263 = vpop.f32.mrf.mxu0
  %v264 = vadd.f32 %v134, %v263
  %v265 = vpop.f32.mrf.mxu0
  %v266 = vadd.f32 %v130, %v265
  %v267 = vpop.f32.mrf.mxu0
  %v268 = vadd.f32 %v134, %v267
  %269 = vdwg.mxu0
  %v270 = vmax.f32 %v252, 0.0
  %v271 = vmax.f32 %v254, 0.0
  %v272 = vmax.f32 %v256, 0.0
  %v273 = vmax.f32 %v258, 0.0
  %v274 = vmax.f32 %v262, 0.0
  %v275 = vmax.f32 %v264, 0.0
  %v276 = vmax.f32 %v266, 0.0
  %v277 = vmax.f32 %v268, 0.0
  %v278 = vpack.c.bf16 %v272, %v270
  %v279 = vpack.c.bf16 %v273, %v271
  %v280 = vpack.c.bf16 %v276, %v274
  %v281 = vpack.c.bf16 %v277, %v275
  %v286 = vunpack.c.l.b16 %v278
  %v287 = vunpack.c.l.b16 %v279
  %v288 = vunpack.c.h.b16 %v278
  %v289 = vunpack.c.h.b16 %v279
  %v290 = vunpack.c.l.b16 %v280
  %v291 = vunpack.c.l.b16 %v281
  %v292 = vunpack.c.h.b16 %v280
  %v293 = vunpack.c.h.b16 %v281
  %v294 = vpack.c.b16 %v287, %v286
  %v295 = vpack.c.b16 %v289, %v288
  %v296 = vpack.c.b16 %v291, %v290
  %v297 = vpack.c.b16 %v293, %v292
  %302 = vst [vmem:[%s5] sm:$0xff] %v294
  %303 = vst [vmem:[%s5 + $0x8] sm:$0xff] %v295
  %304 = vst [vmem:[%s5 + $0x10] sm:$0xff] %v296
  %305 = vst [vmem:[%s5 + $0x18] sm:$0xff] %v297
  // Predicated region
  $region22: #{encoder_wrapper_forward.24} parent=0 // pred_check
    _
  $region23: #{encoder_wrapper_forward.24} parent=0 // pred_check_branch
    %307 = sbr.rel (0) target = $region25
  $region24: #{encoder_wrapper_forward.24} parent=0 // pred_region
    _
  $region25: #{encoder_wrapper_forward.24} parent=0 // pred_fallthru
    _
  // Predicated region
  $region26: #{encoder_wrapper_forward.24} parent=0 // pred_check
    _
  $region27: #{encoder_wrapper_forward.24} parent=0 // pred_check_branch
    %309 = sbr.rel (0) target = $region29
  $region28: #{encoder_wrapper_forward.24} parent=0 // pred_region
    _
  $region29: #{encoder_wrapper_forward.24} parent=0 // pred_fallthru
    _

// kernel: encoder_wrapper_forward.21
$region0: #{encoder_wrapper_forward.21}
  #allocation0 [shape = 'u32[]', space=smem, size = 0x4, offset = 0x4, fixed_abs, tag = 'smem constant byte address 0x4 - core index']
  #allocation1 [shape = 'u32[144,128]{1,0:T(1,128)}', space=vmem, size = 0x12000, scoped, tag = 'internal scratch']
  %s0 = inlined_call_operand.vmem [shape: bf16[32,128], index: 0, kind: input, shape index: {}]
  %s1 = inlined_call_operand.vmem [shape: f32[1,128], index: 1, kind: input, shape index: {}]
  %s2 = inlined_call_operand.vmem [shape: f32[1,128], index: 2, kind: input, shape index: {}]
  %s3 = inlined_call_operand.vmem [shape: bf16[128,384], index: 3, kind: input, shape index: {}]
  %s4 = inlined_call_operand.vmem [shape: f32[1,384], index: 4, kind: input, shape index: {}]
  %s5 = inlined_call_operand.vmem [shape: bf16[32,384], index: 5, kind: output, shape index: {}]
  %s6 = sld [smem:[#allocation0]]
  $region30: #{encoder_wrapper_forward.21} parent=0
    _
  %s8 = ssub.s32 1, %s6
  %s9 = scalar_select 0, %s8, %s6
  // Predicated region
  $region2: #{encoder_wrapper_forward.21} parent=0 // pred_check
    _
  $region3: #{encoder_wrapper_forward.21} parent=0 // pred_check_branch
    %11 = sbr.rel (0) target = $region5
  $region4: #{encoder_wrapper_forward.21} parent=0 // pred_region
    _
  $region5: #{encoder_wrapper_forward.21} parent=0 // pred_fallthru
    _
  // Predicated region
  $region6: #{encoder_wrapper_forward.21} parent=0 // pred_check
    _
  $region7: #{encoder_wrapper_forward.21} parent=0 // pred_check_branch
    %13 = sbr.rel (0) target = $region9
  $region8: #{encoder_wrapper_forward.21} parent=0 // pred_region
    _
  $region9: #{encoder_wrapper_forward.21} parent=0 // pred_fallthru
    _
  // Predicated region
  $region10: #{encoder_wrapper_forward.21} parent=0 // pred_check
    _
  $region11: #{encoder_wrapper_forward.21} parent=0 // pred_check_branch
    %15 = sbr.rel (0) target = $region13
  $region12: #{encoder_wrapper_forward.21} parent=0 // pred_region
    _
  $region13: #{encoder_wrapper_forward.21} parent=0 // pred_fallthru
    _
  // Predicated region
  $region14: #{encoder_wrapper_forward.21} parent=0 // pred_check
    _
  $region15: #{encoder_wrapper_forward.21} parent=0 // pred_check_branch
    %17 = sbr.rel (0) target = $region17
  $region16: #{encoder_wrapper_forward.21} parent=0 // pred_region
    _
  $region17: #{encoder_wrapper_forward.21} parent=0 // pred_fallthru
    _
  // Predicated region
  $region18: #{encoder_wrapper_forward.21} parent=0 // pred_check
    _
  $region19: #{encoder_wrapper_forward.21} parent=0 // pred_check_branch
    %19 = sbr.rel (0) target = $region21
  $region20: #{encoder_wrapper_forward.21} parent=0 // pred_region
    _
  $region21: #{encoder_wrapper_forward.21} parent=0 // pred_fallthru
    _
  %v21 = vld [vmem:[%s0] sm:$0xf]
  %v22 = vld [vmem:[%s0 + $0x4] sm:$0xf]
  %v23 = vld [vmem:[%s0 + $0x8] sm:$0xf]
  %v24 = vld [vmem:[%s0 + $0xc] sm:$0xf]
  %v25 = vunpack.c.l.bf16 %v21
  %v26 = vunpack.c.l.bf16 %v22
  %v27 = vunpack.c.l.bf16 %v23
  %v28 = vunpack.c.l.bf16 %v24
  %29 = vadd.xlane.f32.xlu0 %v25
  %v30 = vpop.xlane.xlu0 %29
  %31 = vadd.xlane.f32.xlu0 %v26
  %v32 = vpop.xlane.xlu0 %31
  %33 = vadd.xlane.f32.xlu0 %v27
  %v34 = vpop.xlane.xlu0 %33
  %35 = vadd.xlane.f32.xlu0 %v28
  %v36 = vpop.xlane.xlu0 %35
  %v37 = vmul.f32 %v25, %v25
  %v38 = vmul.f32 %v26, %v26
  %v39 = vmul.f32 %v27, %v27
  %v40 = vmul.f32 %v28, %v28
  %41 = vadd.xlane.f32.xlu0 %v37
  %v42 = vpop.xlane.xlu0 %41
  %43 = vadd.xlane.f32.xlu0 %v38
  %v44 = vpop.xlane.xlu0 %43
  %45 = vadd.xlane.f32.xlu0 %v39
  %v46 = vpop.xlane.xlu0 %45
  %47 = vadd.xlane.f32.xlu0 %v40
  %v48 = vpop.xlane.xlu0 %47
  %v49 = vmul.f32 %v30, 0.0078125
  %v50 = vmul.f32 %v32, 0.0078125
  %v51 = vmul.f32 %v34, 0.0078125
  %v52 = vmul.f32 %v36, 0.0078125
  %v53 = vmul.f32 %v42, 0.0078125
  %v54 = vmul.f32 %v44, 0.0078125
  %v55 = vmul.f32 %v46, 0.0078125
  %v56 = vmul.f32 %v48, 0.0078125
  %v57 = vmul.f32 %v49, %v49
  %v58 = vmul.f32 %v50, %v50
  %v59 = vmul.f32 %v51, %v51
  %v60 = vmul.f32 %v52, %v52
  %v61 = vsub.f32 %v53, %v57
  %v62 = vsub.f32 %v54, %v58
  %v63 = vsub.f32 %v55, %v59
  %v64 = vsub.f32 %v56, %v60
  %v65 = vmax.f32 %v61, 0.0
  %v66 = vmax.f32 %v62, 0.0
  %v67 = vmax.f32 %v63, 0.0
  %v68 = vmax.f32 %v64, 0.0
  %v69 = vsub.f32 %v25, %v49
  %v70 = vsub.f32 %v26, %v50
  %v71 = vsub.f32 %v27, %v51
  %v72 = vsub.f32 %v28, %v52
  %v73 = vadd.f32 %v65, 1e-06
  %v74 = vadd.f32 %v66, 1e-06
  %v75 = vadd.f32 %v67, 1e-06
  %v76 = vadd.f32 %v68, 1e-06
  %v77 = vrsqrt.pop %v73
  %v78 = vrsqrt.pop %v74
  %v79 = vrsqrt.pop %v75
  %v80 = vrsqrt.pop %v76
  %v81 = vmul.f32 %v69, %v77
  %v82 = vmul.f32 %v70, %v78
  %v83 = vmul.f32 %v71, %v79
  %v84 = vmul.f32 %v72, %v80
  %v85 = vld [vmem:[%s1] sm:$0x1]
  %v87 = vlaneseq
  %v88 = vshrl.u32 %v87, 7
  %v89 = vsub.s32 0, %v88
  %v90 = vrot.slane %v85, %v89
  %v92 = vmul.f32 %v81, %v90
  %v93 = vmul.f32 %v82, %v90
  %v94 = vmul.f32 %v83, %v90
  %v95 = vmul.f32 %v84, %v90
  %v96 = vld [vmem:[%s2] sm:$0x1]
  %v98 = vlaneseq
  %v99 = vshrl.u32 %v98, 7
  %v100 = vsub.s32 0, %v99
  %v101 = vrot.slane %v96, %v100
  %v103 = vadd.f32 %v92, %v101
  %v104 = vadd.f32 %v93, %v101
  %v105 = vadd.f32 %v94, %v101
  %v106 = vadd.f32 %v95, %v101
  %v107 = vpack.c.bf16 %v104, %v103
  %v108 = vpack.c.bf16 %v106, %v105
  %v109 = vld [vmem:[%s3] sm:$0xff]
  %v110 = vld [vmem:[%s3 + $0x8] sm:$0xf]
  %v111 = vld [vmem:[%s3 + $0xc] sm:$0xff]
  %v112 = vld [vmem:[%s3 + $0x14] sm:$0xf]
  %v113 = vld [vmem:[%s3 + $0x18] sm:$0xff]
  %v114 = vld [vmem:[%s3 + $0x20] sm:$0xf]
  %v115 = vld [vmem:[%s3 + $0x24] sm:$0xff]
  %v116 = vld [vmem:[%s3 + $0x2c] sm:$0xf]
  %v117 = vld [vmem:[%s3 + $0x30] sm:$0xff]
  %v118 = vld [vmem:[%s3 + $0x38] sm:$0xf]
  %v119 = vld [vmem:[%s3 + $0x3c] sm:$0xff]
  %v120 = vld [vmem:[%s3 + $0x44] sm:$0xf]
  %v121 = vld [vmem:[%s3 + $0x48] sm:$0xff]
  %v122 = vld [vmem:[%s3 + $0x50] sm:$0xf]
  %v123 = vld [vmem:[%s3 + $0x54] sm:$0xff]
  %v124 = vld [vmem:[%s3 + $0x5c] sm:$0xf]
  %v125 = vld [vmem:[%s3 + $0x60] sm:$0xff]
  %v126 = vld [vmem:[%s3 + $0x68] sm:$0xf]
  %v127 = vld [vmem:[%s3 + $0x6c] sm:$0xff]
  %v128 = vld [vmem:[%s3 + $0x74] sm:$0xf]
  %v129 = vld [vmem:[%s3 + $0x78] sm:$0xff]
  %v130 = vld [vmem:[%s3 + $0x80] sm:$0xf]
  %v131 = vld [vmem:[%s3 + $0x84] sm:$0xff]
  %v132 = vld [vmem:[%s3 + $0x8c] sm:$0xf]
  %v133 = vld [vmem:[%s3 + $0x90] sm:$0xff]
  %v134 = vld [vmem:[%s3 + $0x98] sm:$0xf]
  %v135 = vld [vmem:[%s3 + $0x9c] sm:$0xff]
  %v136 = vld [vmem:[%s3 + $0xa4] sm:$0xf]
  %v137 = vld [vmem:[%s3 + $0xa8] sm:$0xff]
  %v138 = vld [vmem:[%s3 + $0xb0] sm:$0xf]
  %v139 = vld [vmem:[%s3 + $0xb4] sm:$0xff]
  %v140 = vld [vmem:[%s3 + $0xbc] sm:$0xf]
  %v141 = vld [vmem:[%s4] sm:$0x7]
  %v143 = vlaneseq
  %v144 = vshrl.u32 %v143, 7
  %v145 = vsub.s32 0, %v144
  %v146 = vrot.slane %v141, %v145
  %v147 = vlaneseq
  %v148 = vshrl.u32 %v147, 7
  %v149 = vsub.s32 1, %v148
  %v150 = vrot.slane %v141, %v149
  %v151 = vlaneseq
  %v152 = vshrl.u32 %v151, 7
  %v153 = vsub.s32 2, %v152
  %v154 = vrot.slane %v141, %v153
  %v190 = vunpack.c.l.b16 %v109
  %v191 = vunpack.c.h.b16 %v109
  %v192 = vunpack.c.l.b16 %v110
  %v193 = vunpack.c.l.b16 %v111
  %v194 = vunpack.c.h.b16 %v111
  %v195 = vunpack.c.l.b16 %v112
  %v196 = vunpack.c.l.b16 %v113
  %v197 = vunpack.c.h.b16 %v113
  %v198 = vunpack.c.l.b16 %v114
  %v199 = vunpack.c.l.b16 %v115
  %v200 = vunpack.c.h.b16 %v115
  %v201 = vunpack.c.l.b16 %v116
  %v202 = vunpack.c.l.b16 %v117
  %v203 = vunpack.c.h.b16 %v117
  %v204 = vunpack.c.l.b16 %v118
  %v205 = vunpack.c.l.b16 %v119
  %v206 = vunpack.c.h.b16 %v119
  %v207 = vunpack.c.l.b16 %v120
  %v208 = vunpack.c.l.b16 %v121
  %v209 = vunpack.c.h.b16 %v121
  %v210 = vunpack.c.l.b16 %v122
  %v211 = vunpack.c.l.b16 %v123
  %v212 = vunpack.c.h.b16 %v123
  %v213 = vunpack.c.l.b16 %v124
  %v214 = vunpack.c.l.b16 %v125
  %v215 = vunpack.c.h.b16 %v125
  %v216 = vunpack.c.l.b16 %v126
  %v217 = vunpack.c.l.b16 %v127
  %v218 = vunpack.c.h.b16 %v127
  %v219 = vunpack.c.l.b16 %v128
  %v220 = vunpack.c.l.b16 %v129
  %v221 = vunpack.c.h.b16 %v129
  %v222 = vunpack.c.l.b16 %v130
  %v223 = vunpack.c.l.b16 %v131
  %v224 = vunpack.c.h.b16 %v131
  %v225 = vunpack.c.l.b16 %v132
  %v226 = vunpack.c.l.b16 %v133
  %v227 = vunpack.c.h.b16 %v133
  %v228 = vunpack.c.l.b16 %v134
  %v229 = vunpack.c.l.b16 %v135
  %v230 = vunpack.c.h.b16 %v135
  %v231 = vunpack.c.l.b16 %v136
  %v232 = vunpack.c.l.b16 %v137
  %v233 = vunpack.c.h.b16 %v137
  %v234 = vunpack.c.l.b16 %v138
  %v235 = vunpack.c.l.b16 %v139
  %v236 = vunpack.c.h.b16 %v139
  %v237 = vunpack.c.l.b16 %v140
  %v238 = vpack.c.b16 %v193, %v190
  %v239 = vpack.c.b16 %v194, %v191
  %v240 = vpack.c.b16 %v195, %v192
  %v241 = vpack.c.b16 %v199, %v196
  %v242 = vpack.c.b16 %v200, %v197
  %v243 = vpack.c.b16 %v201, %v198
  %v244 = vpack.c.b16 %v205, %v202
  %v245 = vpack.c.b16 %v206, %v203
  %v246 = vpack.c.b16 %v207, %v204
  %v247 = vpack.c.b16 %v211, %v208
  %v248 = vpack.c.b16 %v212, %v209
  %v249 = vpack.c.b16 %v213, %v210
  %v250 = vpack.c.b16 %v217, %v214
  %v251 = vpack.c.b16 %v218, %v215
  %v252 = vpack.c.b16 %v219, %v216
  %v253 = vpack.c.b16 %v223, %v220
  %v254 = vpack.c.b16 %v224, %v221
  %v255 = vpack.c.b16 %v225, %v222
  %v256 = vpack.c.b16 %v229, %v226
  %v257 = vpack.c.b16 %v230, %v227
  %v258 = vpack.c.b16 %v231, %v228
  %v259 = vpack.c.b16 %v235, %v232
  %v260 = vpack.c.b16 %v236, %v233
  %v261 = vpack.c.b16 %v237, %v234
  %286 = vmatprep.subr.bf16.mxu0 %v260
  %287 = vmatpush1.bf16.msra.mxu0 %v259
  %288 = vmatprep.subr.bf16.mxu0 %v257
  %289 = vmatpush1.bf16.msra.mxu0 %v256
  %290 = vmatprep.subr.bf16.mxu0 %v254
  %291 = vmatpush1.bf16.msra.mxu0 %v253
  %292 = vmatprep.subr.bf16.mxu0 %v251
  %293 = vmatpush1.bf16.msra.mxu0 %v250
  %294 = vmatprep.subr.bf16.mxu0 %v248
  %295 = vmatpush1.bf16.msra.mxu0 %v247
  %296 = vmatprep.subr.bf16.mxu0 %v245
  %297 = vmatpush1.bf16.msra.mxu0 %v244
  %298 = vmatprep.subr.bf16.mxu0 %v242
  %299 = vmatpush1.bf16.msra.mxu0 %v241
  %300 = vmatprep.subr.bf16.mxu0 %v239
  %301 = vmatpush1.bf16.msra.mxu0 %v238
  %302 = vmatprep.subr.bf16.mxu0 0
  %303 = vmatpush2.bf16.msra.mxu0 0
  %304 = vmatprep.subr.bf16.mxu0 0
  %305 = vmatpush2.bf16.msra.mxu0 0
  %306 = vmatprep.subr.bf16.mxu0 0
  %307 = vmatpush2.bf16.msra.mxu0 0
  %308 = vmatprep.subr.bf16.mxu0 0
  %309 = vmatpush2.bf16.msra.mxu0 0
  %310 = vmatprep.subr.bf16.mxu0 0
  %311 = vmatpush2.bf16.msra.mxu0 0
  %312 = vmatprep.subr.bf16.mxu0 0
  %313 = vmatpush2.bf16.msra.mxu0 0
  %314 = vmatprep.subr.bf16.mxu0 0
  %315 = vmatpush2.bf16.msra.mxu0 0
  %316 = vmatprep.subr.bf16.mxu0 0
  %317 = vmatpush2.bf16.msra.mxu0 0
  %318 = vmatprep.mubr.bf16.mxu0 0
  %319 = vmatmul.mubr.bf16.gmra.mxu0 %v107
  %v320 = vpop.f32.mrf.mxu0
  %v321 = vadd.f32 %v146, %v320
  %v322 = vpop.f32.mrf.mxu0
  %v323 = vadd.f32 %v150, %v322
  %v324 = vpop.f32.mrf.mxu0
  %v325 = vadd.f32 %v146, %v324
  %v326 = vpop.f32.mrf.mxu0
  %v327 = vadd.f32 %v150, %v326
  %328 = vmatprep.mubr.bf16.mxu0 0
  %329 = vmatmul.mubr.bf16.gmra.mxu0 %v108
  %v330 = vpop.f32.mrf.mxu0
  %v331 = vadd.f32 %v146, %v330
  %v332 = vpop.f32.mrf.mxu0
  %v333 = vadd.f32 %v150, %v332
  %v334 = vpop.f32.mrf.mxu0
  %v335 = vadd.f32 %v146, %v334
  %v336 = vpop.f32.mrf.mxu0
  %v337 = vadd.f32 %v150, %v336
  %338 = vdwg.mxu0
  %339 = vmatprep.subr.bf16.mxu0 0
  %340 = vmatpush1.bf16.msra.mxu0 %v261
  %341 = vmatprep.subr.bf16.mxu0 0
  %342 = vmatpush1.bf16.msra.mxu0 %v258
  %343 = vmatprep.subr.bf16.mxu0 0
  %344 = vmatpush1.bf16.msra.mxu0 %v255
  %345 = vmatprep.subr.bf16.mxu0 0
  %346 = vmatpush1.bf16.msra.mxu0 %v252
  %347 = vmatprep.subr.bf16.mxu0 0
  %348 = vmatpush1.bf16.msra.mxu0 %v249
  %349 = vmatprep.subr.bf16.mxu0 0
  %350 = vmatpush1.bf16.msra.mxu0 %v246
  %351 = vmatprep.subr.bf16.mxu0 0
  %352 = vmatpush1.bf16.msra.mxu0 %v243
  %353 = vmatprep.subr.bf16.mxu0 0
  %354 = vmatpush1.bf16.msra.mxu0 %v240
  %355 = vmatprep.subr.bf16.mxu0 0
  %356 = vmatpush2.bf16.msra.mxu0 0
  %357 = vmatprep.subr.bf16.mxu0 0
  %358 = vmatpush2.bf16.msra.mxu0 0
  %359 = vmatprep.subr.bf16.mxu0 0
  %360 = vmatpush2.bf16.msra.mxu0 0
  %361 = vmatprep.subr.bf16.mxu0 0
  %362 = vmatpush2.bf16.msra.mxu0 0
  %363 = vmatprep.subr.bf16.mxu0 0
  %364 = vmatpush2.bf16.msra.mxu0 0
  %365 = vmatprep.subr.bf16.mxu0 0
  %366 = vmatpush2.bf16.msra.mxu0 0
  %367 = vmatprep.subr.bf16.mxu0 0
  %368 = vmatpush2.bf16.msra.mxu0 0
  %369 = vmatprep.subr.bf16.mxu0 0
  %370 = vmatpush2.bf16.msra.mxu0 0
  %371 = vmatprep.mubr.bf16.mxu0 0
  %372 = vmatmul.mubr.bf16.gmra.mxu0 %v107
  %v373 = vpop.f32.mrf.mxu0
  %v374 = vadd.f32 %v154, %v373
  %v375 = vpop.f32.mrf.mxu0
  %v376 = vpop.f32.mrf.mxu0
  %v377 = vadd.f32 %v154, %v376
  %v378 = vpop.f32.mrf.mxu0
  %379 = vmatprep.mubr.bf16.mxu0 0
  %380 = vmatmul.mubr.bf16.gmra.mxu0 %v108
  %v381 = vpop.f32.mrf.mxu0
  %v382 = vadd.f32 %v154, %v381
  %v383 = vpop.f32.mrf.mxu0
  %v384 = vpop.f32.mrf.mxu0
  %v385 = vadd.f32 %v154, %v384
  %v386 = vpop.f32.mrf.mxu0
  %387 = vdwg.mxu0
  %v388 = vpack.c.bf16 %v325, %v321
  %v389 = vpack.c.bf16 %v327, %v323
  %v390 = vpack.c.bf16 %v377, %v374
  %v391 = vpack.c.bf16 %v335, %v331
  %v392 = vpack.c.bf16 %v337, %v333
  %v393 = vpack.c.bf16 %v385, %v382
  %v400 = vunpack.c.l.b16 %v388
  %v401 = vunpack.c.l.b16 %v389
  %v402 = vunpack.c.l.b16 %v390
  %v403 = vunpack.c.h.b16 %v388
  %v404 = vunpack.c.h.b16 %v389
  %v405 = vunpack.c.h.b16 %v390
  %v406 = vunpack.c.l.b16 %v391
  %v407 = vunpack.c.l.b16 %v392
  %v408 = vunpack.c.l.b16 %v393
  %v409 = vunpack.c.h.b16 %v391
  %v410 = vunpack.c.h.b16 %v392
  %v411 = vunpack.c.h.b16 %v393
  %v412 = vpack.c.b16 %v401, %v400
  %v413 = vpack.c.b16 %v402, %v402
  %v414 = vpack.c.b16 %v404, %v403
  %v415 = vpack.c.b16 %v405, %v405
  %v416 = vpack.c.b16 %v407, %v406
  %v417 = vpack.c.b16 %v408, %v408
  %v418 = vpack.c.b16 %v410, %v409
  %v419 = vpack.c.b16 %v411, %v411
  %428 = vst [vmem:[%s5] sm:$0xff] %v412
  %429 = vst [vmem:[%s5 + $0x8] sm:$0xf] %v413
  %430 = vst [vmem:[%s5 + $0xc] sm:$0xff] %v414
  %431 = vst [vmem:[%s5 + $0x14] sm:$0xf] %v415
  %432 = vst [vmem:[%s5 + $0x18] sm:$0xff] %v416
  %433 = vst [vmem:[%s5 + $0x20] sm:$0xf] %v417
  %434 = vst [vmem:[%s5 + $0x24] sm:$0xff] %v418
  %435 = vst [vmem:[%s5 + $0x2c] sm:$0xf] %v419
  // Predicated region
  $region22: #{encoder_wrapper_forward.21} parent=0 // pred_check
    _
  $region23: #{encoder_wrapper_forward.21} parent=0 // pred_check_branch
    %437 = sbr.rel (0) target = $region25
  $region24: #{encoder_wrapper_forward.21} parent=0 // pred_region
    _
  $region25: #{encoder_wrapper_forward.21} parent=0 // pred_fallthru
    _
  // Predicated region
  $region26: #{encoder_wrapper_forward.21} parent=0 // pred_check
    _
  $region27: #{encoder_wrapper_forward.21} parent=0 // pred_check_branch
    %439 = sbr.rel (0) target = $region29
  $region28: #{encoder_wrapper_forward.21} parent=0 // pred_region
    _
  $region29: #{encoder_wrapper_forward.21} parent=0 // pred_fallthru
    _

// kernel: encoder_wrapper_forward.22
$region0: #{encoder_wrapper_forward.22}
  #allocation0 [shape = 'u32[]', space=smem, size = 0x4, offset = 0x4, fixed_abs, tag = 'smem constant byte address 0x4 - core index']
  #allocation1 [shape = 'u32[144,128]{1,0:T(1,128)}', space=vmem, size = 0x12000, scoped, tag = 'internal scratch']
  %s0 = inlined_call_operand.vmem [shape: bf16[4,8,384], index: 0, kind: input, shape index: {}, may-alias: {0,1,2}]
  %s1 = inlined_call_operand.vmem [shape: bf16[4,8,384], index: 1, kind: input, shape index: {}, may-alias: {0,1,2}]
  %s2 = inlined_call_operand.vmem [shape: bf16[4,8,384], index: 2, kind: input, shape index: {}, may-alias: {0,1,2}]
  %s3 = inlined_call_operand.vmem [shape: f32[4,1,8], index: 3, kind: input, shape index: {}]
  %s4 = inlined_call_operand.vmem [shape: bf16[4,8,128], index: 4, kind: output, shape index: {}]
  %s5 = sld [smem:[#allocation0]]
  $region49: #{encoder_wrapper_forward.22} parent=0
    _
  %s7 = ssub.s32 1, %s5
  %s8 = scalar_select 0, %s7, %s5
  loop: start=0, step=1, limit=6
  $region2: #{encoder_wrapper_forward.22} parent=0 // loop_pre_header
    _
  $region3: #{encoder_wrapper_forward.22} parent=0 // loop_header
    %s10 = sphi 0, %s14
    %p11 = scmp.ge.s32.totalorder %s10, 6
    %s17 = sphi 0, %s36
    %s18 = sphi 0, %s32
    %s19 = sphi 0, %s28
    %s20 = sphi 0, %s17
    %s21 = sphi 0, %s18
    %s22 = sphi 0, %s19
    %s23 = sphi 0, %s20
    %s24 = sphi 0, %s21
    %s25 = sphi 0, %s22
    %s43 = sphi 0, %s45
    %s46 = sphi 0, %s43
    %s47 = sphi 0, %s46
    %s63 = sphi 0, %s47
    %s73 = sphi 0, %s75
    %s76 = sphi 0, %s73
    %s77 = sphi 0, %s76
    %s93 = sphi 0, %s77
    %s103 = sphi 0, %s105
    %s106 = sphi 0, %s103
    %s107 = sphi 0, %s106
    %s123 = sphi 0, %s107
    %s129 = sphi 0, %s131
    %s132 = sphi 0, %s129
    %s133 = sphi 0, %s132
    %s149 = sphi 0, %s133
    %s159 = sphi 0, %s161
    %s162 = sphi 0, %s159
    %s163 = sphi 0, %s162
    %s179 = sphi 0, %s163
  $region4: #{encoder_wrapper_forward.22} parent=0 // loop_header_branch
    %13 = sbr.rel (%p11) target = $region8
  $region5: #{encoder_wrapper_forward.22} parent=0 // loop_body
    %s15 = ssub.s32 %s10, 1
    %s16 = ssub.s32 %s10, 2
    %s26 = sadd.s32 1, %s19
    %p27 = scmp.ge.s32.totalorder %s26, 1
    %s28 = scalar_select %p27, 0, %s26
    %s29 = sadd.s32 1, %s18
    %s30 = scalar_select %p27, %s29, %s18
    %p31 = scmp.ge.s32.totalorder %s30, 1
    %s32 = scalar_select %p31, 0, %s30
    %s33 = sadd.s32 1, %s17
    %s34 = scalar_select %p31, %s33, %s17
    %p35 = scmp.ge.s32.totalorder %s34, 4
    %s36 = scalar_select %p35, 0, %s34
    %s37 = ssub.s32 %s17, %s36
    %s38 = ssub.s32 %s19, %s28
    %s39 = sor.u32 %s37, %s38
    %s40 = ssub.s32 %s18, %s32
    %s41 = sor.u32 %s39, %s40
    %p42 = scmp.eq.s32.totalorder %s41, 0
    %s44 = sadd.s32 %s43, 1
    %s45 = scalar_select %p42, %s43, %s44
    %p48 = pneg %p42
    %p49 = scmp.eq.s32.totalorder %s10, 3
    %p50 = por %p48, %p49
    %p51 = scmp.ne.s32.totalorder %s43, %s46
    %p52 = scmp.eq.s32.totalorder %s10, 0
    %p53 = por %p51, %p52
    %p54 = scmp.ne.s32.totalorder %s43, %s46
    %p55 = scmp.eq.s32.totalorder %s15, 3
    %p56 = por %p54, %p55
    %p57 = scmp.ne.s32.totalorder %s46, %s47
    %p58 = scmp.eq.s32.totalorder %s15, 0
    %p59 = por %p57, %p58
    %p60 = scmp.ne.s32.totalorder %s46, %s47
    %p61 = scmp.eq.s32.totalorder %s16, 3
    %p62 = por %p60, %p61
    %p64 = scmp.ne.s32.totalorder %s47, %s63
    %p65 = scmp.eq.s32.totalorder %s16, 0
    %p66 = por %p64, %p65
    %s67 = sadd.s32 %s18, 1
    %s68 = sadd.s32 %s32, 1
    %s69 = ssub.s32 %s17, %s36
    %s70 = ssub.s32 %s67, %s68
    %s71 = sor.u32 %s69, %s70
    %p72 = scmp.eq.s32.totalorder %s71, 0
    %s74 = sadd.s32 %s73, 1
    %s75 = scalar_select %p72, %s73, %s74
    %p78 = pneg %p72
    %p79 = scmp.eq.s32.totalorder %s10, 3
    %p80 = por %p78, %p79
    %p81 = scmp.ne.s32.totalorder %s73, %s76
    %p82 = scmp.eq.s32.totalorder %s10, 0
    %p83 = por %p81, %p82
    %p84 = scmp.ne.s32.totalorder %s73, %s76
    %p85 = scmp.eq.s32.totalorder %s15, 3
    %p86 = por %p84, %p85
    %p87 = scmp.ne.s32.totalorder %s76, %s77
    %p88 = scmp.eq.s32.totalorder %s15, 0
    %p89 = por %p87, %p88
    %p90 = scmp.ne.s32.totalorder %s76, %s77
    %p91 = scmp.eq.s32.totalorder %s16, 3
    %p92 = por %p90, %p91
    %p94 = scmp.ne.s32.totalorder %s77, %s93
    %p95 = scmp.eq.s32.totalorder %s16, 0
    %p96 = por %p94, %p95
    %s97 = sadd.s32 %s18, 2
    %s98 = sadd.s32 %s32, 2
    %s99 = ssub.s32 %s17, %s36
    %s100 = ssub.s32 %s97, %s98
    %s101 = sor.u32 %s99, %s100
    %p102 = scmp.eq.s32.totalorder %s101, 0
    %s104 = sadd.s32 %s103, 1
    %s105 = scalar_select %p102, %s103, %s104
    %p108 = pneg %p102
    %p109 = scmp.eq.s32.totalorder %s10, 3
    %p110 = por %p108, %p109
    %p111 = scmp.ne.s32.totalorder %s103, %s106
    %p112 = scmp.eq.s32.totalorder %s10, 0
    %p113 = por %p111, %p112
    %p114 = scmp.ne.s32.totalorder %s103, %s106
    %p115 = scmp.eq.s32.totalorder %s15, 3
    %p116 = por %p114, %p115
    %p117 = scmp.ne.s32.totalorder %s106, %s107
    %p118 = scmp.eq.s32.totalorder %s15, 0
    %p119 = por %p117, %p118
    %p120 = scmp.ne.s32.totalorder %s106, %s107
    %p121 = scmp.eq.s32.totalorder %s16, 3
    %p122 = por %p120, %p121
    %p124 = scmp.ne.s32.totalorder %s107, %s123
    %p125 = scmp.eq.s32.totalorder %s16, 0
    %p126 = por %p124, %p125
    %s127 = ssub.s32 %s17, %s36
    %p128 = scmp.eq.s32.totalorder %s127, 0
    %s130 = sadd.s32 %s129, 1
    %s131 = scalar_select %p128, %s129, %s130
    %p134 = pneg %p128
    %p135 = scmp.eq.s32.totalorder %s10, 3
    %p136 = por %p134, %p135
    %p137 = scmp.ne.s32.totalorder %s129, %s132
    %p138 = scmp.eq.s32.totalorder %s10, 0
    %p139 = por %p137, %p138
    %p140 = scmp.ne.s32.totalorder %s129, %s132
    %p141 = scmp.eq.s32.totalorder %s15, 3
    %p142 = por %p140, %p141
    %p143 = scmp.ne.s32.totalorder %s132, %s133
    %p144 = scmp.eq.s32.totalorder %s15, 0
    %p145 = por %p143, %p144
    %p146 = scmp.ne.s32.totalorder %s132, %s133
    %p147 = scmp.eq.s32.totalorder %s16, 3
    %p148 = por %p146, %p147
    %p150 = scmp.ne.s32.totalorder %s133, %s149
    %p151 = scmp.eq.s32.totalorder %s16, 0
    %p152 = por %p150, %p151
    %s153 = ssub.s32 %s17, %s36
    %s154 = ssub.s32 %s19, %s28
    %s155 = sor.u32 %s153, %s154
    %s156 = ssub.s32 %s18, %s32
    %s157 = sor.u32 %s155, %s156
    %p158 = scmp.eq.s32.totalorder %s157, 0
    %s160 = sadd.s32 %s159, 1
    %s161 = scalar_select %p158, %s159, %s160
    %p164 = pneg %p158
    %p165 = scmp.eq.s32.totalorder %s10, 3
    %p166 = por %p164, %p165
    %p167 = scmp.ne.s32.totalorder %s159, %s162
    %p168 = scmp.eq.s32.totalorder %s10, 0
    %p169 = por %p167, %p168
    %p170 = scmp.ne.s32.totalorder %s159, %s162
    %p171 = scmp.eq.s32.totalorder %s15, 3
    %p172 = por %p170, %p171
    %p173 = scmp.ne.s32.totalorder %s162, %s163
    %p174 = scmp.eq.s32.totalorder %s15, 0
    %p175 = por %p173, %p174
    %p176 = scmp.ne.s32.totalorder %s162, %s163
    %p177 = scmp.eq.s32.totalorder %s16, 3
    %p178 = por %p176, %p177
    %p180 = scmp.ne.s32.totalorder %s163, %s179
    %p181 = scmp.eq.s32.totalorder %s16, 0
    %p182 = por %p180, %p181
    %p183 = scmp.le.s32.totalorder 1, %s10
    %p184 = scmp.lt.s32.totalorder %s10, 5
    %p185 = pnand %p183, %p184
    %p186 = pneg %p185
    // Predicated region
    $region9: #{encoder_wrapper_forward.22} parent=5 // pred_check
      _
    $region10: #{encoder_wrapper_forward.22} parent=5 // pred_check_branch
      %188 = sbr.rel (%p185) target = $region12
    $region11: #{encoder_wrapper_forward.22} parent=5 // pred_region
      %s189 = ssub.s32 %s10, 1
    $region12: #{encoder_wrapper_forward.22} parent=5 // pred_fallthru
      _
    %p190 = scmp.lt.s32.totalorder %s10, 4
    // Predicated region
    $region13: #{encoder_wrapper_forward.22} parent=5 // pred_check
      %p191 = pneg %p190
    $region14: #{encoder_wrapper_forward.22} parent=5 // pred_check_branch
      %193 = sbr.rel (%p191) target = $region16
    $region15: #{encoder_wrapper_forward.22} parent=5 // pred_region
      // Predicated region
      $region17: #{encoder_wrapper_forward.22} parent=15 // pred_check
        %p194 = pneg %p53
      $region18: #{encoder_wrapper_forward.22} parent=15 // pred_check_branch
        %196 = sbr.rel (%p194) target = $region20
      $region19: #{encoder_wrapper_forward.22} parent=15 // pred_region
        %p197 = scmp.lt.s32.totalorder %s17, 3
        %s198 = scalar_select %p197, %s17, 3
        %p199 = scmp.lt.s32.totalorder %s19, 0
        %s200 = scalar_select %p199, %s19, 0
        %p201 = scmp.lt.s32.totalorder %s18, 2
        %s202 = scalar_select %p201, %s18, 2
        %s203 = smul.addr %s200, 3
        %s204 = sadd.s32 %s202, %s203
        %s205 = smul.addr %s198, 3
        %s206 = sadd.s32 %s204, %s205
        %s207 = smul.addr %s206, 4
        %s208 = scalar_lea.vmem %s0, %s207
      $region20: #{encoder_wrapper_forward.22} parent=15 // pred_fallthru
        _
      // Predicated region
      $region21: #{encoder_wrapper_forward.22} parent=15 // pred_check
        %p209 = pneg %p83
      $region22: #{encoder_wrapper_forward.22} parent=15 // pred_check_branch
        %211 = sbr.rel (%p209) target = $region24
      $region23: #{encoder_wrapper_forward.22} parent=15 // pred_region
        %s212 = sadd.s32 %s18, 1
        %p213 = scmp.lt.s32.totalorder %s17, 3
        %s214 = scalar_select %p213, %s17, 3
        %p215 = scmp.lt.s32.totalorder %s212, 2
        %s216 = scalar_select %p215, %s212, 2
        %s217 = smul.addr %s214, 3
        %s218 = sadd.s32 %s216, %s217
        %s219 = smul.addr %s218, 4
        %s220 = scalar_lea.vmem %s1, %s219
        %s221 = sadd.s32 %s18, 1
      $region24: #{encoder_wrapper_forward.22} parent=15 // pred_fallthru
        _
      // Predicated region
      $region25: #{encoder_wrapper_forward.22} parent=15 // pred_check
        %p222 = pneg %p113
      $region26: #{encoder_wrapper_forward.22} parent=15 // pred_check_branch
        %224 = sbr.rel (%p222) target = $region28
      $region27: #{encoder_wrapper_forward.22} parent=15 // pred_region
        %s225 = sadd.s32 %s18, 2
        %p226 = scmp.lt.s32.totalorder %s17, 3
        %s227 = scalar_select %p226, %s17, 3
        %p228 = scmp.lt.s32.totalorder %s225, 2
        %s229 = scalar_select %p228, %s225, 2
        %s230 = smul.addr %s227, 3
        %s231 = sadd.s32 %s229, %s230
        %s232 = smul.addr %s231, 4
        %s233 = scalar_lea.vmem %s2, %s232
        %s234 = sadd.s32 %s18, 2
      $region28: #{encoder_wrapper_forward.22} parent=15 // pred_fallthru
        _
      // Predicated region
      $region29: #{encoder_wrapper_forward.22} parent=15 // pred_check
        %p235 = pneg %p139
      $region30: #{encoder_wrapper_forward.22} parent=15 // pred_check_branch
        %237 = sbr.rel (%p235) target = $region32
      $region31: #{encoder_wrapper_forward.22} parent=15 // pred_region
        %p238 = scmp.lt.s32.totalorder %s17, 3
        %s239 = scalar_select %p238, %s17, 3
        %s240 = scalar_lea.vmem %s3, %s239
      $region32: #{encoder_wrapper_forward.22} parent=15 // pred_fallthru
        _
    $region16: #{encoder_wrapper_forward.22} parent=5 // pred_fallthru
      _
    %p241 = scmp.le.s32.totalorder 1, %s10
    %p242 = scmp.lt.s32.totalorder %s10, 5
    %p243 = pnand %p241, %p242
    %p244 = pneg %p243
    // Predicated region
    $region33: #{encoder_wrapper_forward.22} parent=5 // pred_check
      _
    $region34: #{encoder_wrapper_forward.22} parent=5 // pred_check_branch
      %246 = sbr.rel (%p243) target = $region36
    $region35: #{encoder_wrapper_forward.22} parent=5 // pred_region
      %s247 = ssub.s32 %s10, 1
      %p248 = scmp.lt.s32.totalorder %s20, 3
      %s249 = scalar_select %p248, %s20, 3
      %p250 = scmp.lt.s32.totalorder %s22, 0
      %s251 = scalar_select %p250, %s22, 0
      %p252 = scmp.lt.s32.totalorder %s21, 2
      %s253 = scalar_select %p252, %s21, 2
      %s254 = smul.addr %s251, 3
      %s255 = sadd.s32 %s253, %s254
      %s256 = smul.addr %s249, 3
      %s257 = sadd.s32 %s255, %s256
      %s258 = smul.addr %s257, 4
      %s259 = scalar_lea.vmem %s0, %s258
      %p260 = pneg %p59
      %p261 = pneg %p56
      %s262 = sadd.s32 %s21, 1
      %p263 = scmp.lt.s32.totalorder %s20, 3
      %s264 = scalar_select %p263, %s20, 3
      %p265 = scmp.lt.s32.totalorder %s262, 2
      %s266 = scalar_select %p265, %s262, 2
      %s267 = smul.addr %s264, 3
      %s268 = sadd.s32 %s266, %s267
      %s269 = smul.addr %s268, 4
      %s270 = scalar_lea.vmem %s1, %s269
      %p271 = pneg %p89
      %p272 = pneg %p86
      %s273 = sadd.s32 %s21, 2
      %p274 = scmp.lt.s32.totalorder %s20, 3
      %s275 = scalar_select %p274, %s20, 3
      %p276 = scmp.lt.s32.totalorder %s273, 2
      %s277 = scalar_select %p276, %s273, 2
      %s278 = smul.addr %s275, 3
      %s279 = sadd.s32 %s277, %s278
      %s280 = smul.addr %s279, 4
      %s281 = scalar_lea.vmem %s2, %s280
      %p282 = pneg %p119
      %p283 = pneg %p116
      %p284 = scmp.lt.s32.totalorder %s20, 3
      %s285 = scalar_select %p284, %s20, 3
      %s286 = scalar_lea.vmem %s3, %s285
      %p287 = pneg %p145
      %p288 = pneg %p142
      %p289 = pneg %p175
      %p290 = pneg %p172
      %p291 = scmp.lt.s32.totalorder %s20, 3
      %s292 = scalar_select %p291, %s20, 3
      %p293 = scmp.lt.s32.totalorder %s22, 0
      %s294 = scalar_select %p293, %s22, 0
      %p295 = scmp.lt.s32.totalorder %s21, 0
      %s296 = scalar_select %p295, %s21, 0
      %s297 = sadd.s32 %s296, %s294
      %s298 = sadd.s32 %s297, %s292
      %s299 = smul.addr %s298, 4
      %s300 = scalar_lea.vmem %s4, %s299
      %p301 = scmp.lt.s32.totalorder %s20, 3
      %s302 = scalar_select %p301, %s20, 3
      %p303 = scmp.lt.s32.totalorder %s22, 0
      %s304 = scalar_select %p303, %s22, 0
      %p305 = scmp.lt.s32.totalorder %s21, 2
      %s306 = scalar_select %p305, %s21, 2
      %s307 = smul.addr %s304, 3
      %s308 = sadd.s32 %s306, %s307
      %s309 = smul.addr %s302, 3
      %s310 = sadd.s32 %s308, %s309
      %s311 = smul.addr %s310, 4
      %s312 = scalar_lea.vmem %s0, %s311
      %s313 = sadd.s32 %s21, 1
      %p314 = scmp.lt.s32.totalorder %s20, 3
      %s315 = scalar_select %p314, %s20, 3
      %p316 = scmp.lt.s32.totalorder %s313, 2
      %s317 = scalar_select %p316, %s313, 2
      %s318 = smul.addr %s315, 3
      %s319 = sadd.s32 %s317, %s318
      %s320 = smul.addr %s319, 4
      %s321 = scalar_lea.vmem %s1, %s320
      %s322 = sadd.s32 %s21, 1
      %s323 = sadd.s32 %s21, 2
      %p324 = scmp.lt.s32.totalorder %s20, 3
      %s325 = scalar_select %p324, %s20, 3
      %p326 = scmp.lt.s32.totalorder %s323, 2
      %s327 = scalar_select %p326, %s323, 2
      %s328 = smul.addr %s325, 3
      %s329 = sadd.s32 %s327, %s328
      %s330 = smul.addr %s329, 4
      %s331 = scalar_lea.vmem %s2, %s330
      %s332 = sadd.s32 %s21, 2
      %p333 = scmp.lt.s32.totalorder %s20, 3
      %s334 = scalar_select %p333, %s20, 3
      %s335 = scalar_lea.vmem %s3, %s334
      %p336 = scmp.lt.s32.totalorder %s20, 3
      %s337 = scalar_select %p336, %s20, 3
      %p338 = scmp.lt.s32.totalorder %s22, 0
      %s339 = scalar_select %p338, %s22, 0
      %p340 = scmp.lt.s32.totalorder %s21, 0
      %s341 = scalar_select %p340, %s21, 0
      %s342 = sadd.s32 %s341, %s339
      %s343 = sadd.s32 %s342, %s337
      %s344 = smul.addr %s343, 4
      %s345 = scalar_lea.vmem %s4, %s344
      %v347 = vld [vmem:[%s312] sm:$0xf]
      %v348 = vld [vmem:[%s321] sm:$0xf]
      %v349 = vld [vmem:[%s331] sm:$0xf]
      %vm350 = vcmask 261120
      %v352 = vsel %vm350, %v347, 0
      %v355 = vsel %vm350, %v348, 0
      %357 = vmatprep.subr.bf16.mxu0 0
      %358 = vmatpush1.bf16.xpose.msra.mxu0 0
      %359 = vmatprep.subr.bf16.mxu0 0
      %360 = vmatpush1.bf16.xpose.msra.mxu0 0
      %361 = vmatprep.subr.bf16.mxu0 0
      %362 = vmatpush1.bf16.xpose.msra.mxu0 0
      %363 = vmatprep.subr.bf16.mxu0 0
      %364 = vmatpush1.bf16.xpose.msra.mxu0 0
      %365 = vmatprep.subr.bf16.mxu0 0
      %366 = vmatpush1.bf16.xpose.msra.mxu0 0
      %367 = vmatprep.subr.bf16.mxu0 0
      %368 = vmatpush1.bf16.xpose.msra.mxu0 0
      %369 = vmatprep.subr.bf16.mxu0 0
      %370 = vmatpush1.bf16.xpose.msra.mxu0 0
      %371 = vmatprep.subr.bf16.mxu0 0
      %372 = vmatpush1.bf16.xpose.msra.mxu0 %v355
      %373 = vmatprep.subr.bf16.mxu0 0
      %374 = vmatpush2.bf16.xpose.msra.mxu0 0
      %375 = vmatprep.subr.bf16.mxu0 0
      %376 = vmatpush2.bf16.xpose.msra.mxu0 0
      %377 = vmatprep.subr.bf16.mxu0 0
      %378 = vmatpush2.bf16.xpose.msra.mxu0 0
      %379 = vmatprep.subr.bf16.mxu0 0
      %380 = vmatpush2.bf16.xpose.msra.mxu0 0
      %381 = vmatprep.subr.bf16.mxu0 0
      %382 = vmatpush2.bf16.xpose.msra.mxu0 0
      %383 = vmatprep.subr.bf16.mxu0 0
      %384 = vmatpush2.bf16.xpose.msra.mxu0 0
      %385 = vmatprep.subr.bf16.mxu0 0
      %386 = vmatpush2.bf16.xpose.msra.mxu0 0
      %387 = vmatprep.subr.bf16.mxu0 0
      %388 = vmatpush2.bf16.xpose.msra.mxu0 0
      %389 = vmatprep.mubr.bf16.mxu0 0
      %390 = vmatmul.mubr.bf16.gmra.mxu0 %v352
      %v391 = vpop.f32.mrf.mxu0
      %v392 = vadd.f32 0.0, %v391
      %v393 = vpop.f32.mrf.mxu0
      %v394 = vpop.f32.mrf.mxu0
      %v395 = vpop.f32.mrf.mxu0
      %396 = vdwg.mxu0
      %v397 = vmul.f32 %v392, 0.17677669
      %v398 = vld [vmem:[%s335] sm:$0x1]
      %v400 = vlaneseq
      %v401 = vshrl.u32 %v400, 7
      %v402 = vsub.s32 0, %v401
      %v403 = vrot.slane %v398, %v402
      %v405 = vadd.f32 %v397, %v403
      %vm406 = vcmask 64512
      %v407 = vsel %vm406, %v405, -inf
      %408 = vmax.xlane.f32.xlu0 %v407
      %v409 = vpop.xlane.xlu0 %408
      %v410 = vsub.f32 %v405, %v409
      %v411 = vmul.f32 %v410, 1.442695
      %v412 = vpow.pop %v411
      %v413 = vsel %vm406, %v412, 0.0
      %414 = vadd.xlane.f32.xlu0 %v413
      %v415 = vpop.xlane.xlu0 %414
      %v416 = vrcp.pop %v415
      %v417 = vmul.f32 %v412, %v416
      %v418 = vpack.c.bf16 %v417, %v417
      %v420 = vsel %vm406, %v418, 0
      %vm422 = vcmask 1043456
      %v424 = vsel %vm422, %v349, 0
      %426 = vmatprep.subr.bf16.mxu0 0
      %427 = vmatpush1.bf16.msra.mxu0 0
      %428 = vmatprep.subr.bf16.mxu0 0
      %429 = vmatpush1.bf16.msra.mxu0 0
      %430 = vmatprep.subr.bf16.mxu0 0
      %431 = vmatpush1.bf16.msra.mxu0 0
      %432 = vmatprep.subr.bf16.mxu0 0
      %433 = vmatpush1.bf16.msra.mxu0 0
      %434 = vmatprep.subr.bf16.mxu0 0
      %435 = vmatpush1.bf16.msra.mxu0 0
      %436 = vmatprep.subr.bf16.mxu0 0
      %437 = vmatpush1.bf16.msra.mxu0 0
      %438 = vmatprep.subr.bf16.mxu0 0
      %439 = vmatpush1.bf16.msra.mxu0 0
      %440 = vmatprep.subr.bf16.mxu0 0
      %441 = vmatpush1.bf16.msra.mxu0 %v424
      %442 = vmatprep.subr.bf16.mxu0 0
      %443 = vmatpush2.bf16.msra.mxu0 0
      %444 = vmatprep.subr.bf16.mxu0 0
      %445 = vmatpush2.bf16.msra.mxu0 0
      %446 = vmatprep.subr.bf16.mxu0 0
      %447 = vmatpush2.bf16.msra.mxu0 0
      %448 = vmatprep.subr.bf16.mxu0 0
      %449 = vmatpush2.bf16.msra.mxu0 0
      %450 = vmatprep.subr.bf16.mxu0 0
      %451 = vmatpush2.bf16.msra.mxu0 0
      %452 = vmatprep.subr.bf16.mxu0 0
      %453 = vmatpush2.bf16.msra.mxu0 0
      %454 = vmatprep.subr.bf16.mxu0 0
      %455 = vmatpush2.bf16.msra.mxu0 0
      %456 = vmatprep.subr.bf16.mxu0 0
      %457 = vmatpush2.bf16.msra.mxu0 0
      %458 = vmatprep.mubr.bf16.mxu0 0
      %459 = vmatmul.mubr.bf16.gmra.mxu0 %v420
      %v460 = vpop.f32.mrf.mxu0
      %v461 = vadd.f32 0.0, %v460
      %v462 = vpop.f32.mrf.mxu0
      %v463 = vpop.f32.mrf.mxu0
      %v464 = vpop.f32.mrf.mxu0
      %465 = vdwg.mxu0
      %v466 = vpack.c.bf16 %v461, %v461
      %vm467 = vcmask 257024
      %468 = vst.msk [vmem:[%s345] sm:$0xf] %vm467, %v466
      %v470 = vunpack.c.l.b16 %v347
      %v471 = vpack.c.b16 %v470, %v470
      %472 = vrot.lane.b32.xlu0 %v471, 96
      %v473 = vpop.permute.xlu0 %472
      %v475 = vunpack.c.l.b16 %v348
      %v476 = vpack.c.b16 %v475, %v475
      %477 = vrot.lane.b32.xlu0 %v476, 96
      %v478 = vpop.permute.xlu0 %477
      %v480 = vsel %vm350, %v473, 0
      %v483 = vsel %vm350, %v478, 0
      %485 = vmatprep.subr.bf16.mxu0 0
      %486 = vmatpush1.bf16.xpose.msra.mxu0 0
      %487 = vmatprep.subr.bf16.mxu0 0
      %488 = vmatpush1.bf16.xpose.msra.mxu0 0
      %489 = vmatprep.subr.bf16.mxu0 0
      %490 = vmatpush1.bf16.xpose.msra.mxu0 0
      %491 = vmatprep.subr.bf16.mxu0 0
      %492 = vmatpush1.bf16.xpose.msra.mxu0 0
      %493 = vmatprep.subr.bf16.mxu0 0
      %494 = vmatpush1.bf16.xpose.msra.mxu0 0
      %495 = vmatprep.subr.bf16.mxu0 0
      %496 = vmatpush1.bf16.xpose.msra.mxu0 0
      %497 = vmatprep.subr.bf16.mxu0 0
      %498 = vmatpush1.bf16.xpose.msra.mxu0 0
      %499 = vmatprep.subr.bf16.mxu0 0
      %500 = vmatpush1.bf16.xpose.msra.mxu0 %v483
      %501 = vmatprep.subr.bf16.mxu0 0
      %502 = vmatpush2.bf16.xpose.msra.mxu0 0
      %503 = vmatprep.subr.bf16.mxu0 0
      %504 = vmatpush2.bf16.xpose.msra.mxu0 0
      %505 = vmatprep.subr.bf16.mxu0 0
      %506 = vmatpush2.bf16.xpose.msra.mxu0 0
      %507 = vmatprep.subr.bf16.mxu0 0
      %508 = vmatpush2.bf16.xpose.msra.mxu0 0
      %509 = vmatprep.subr.bf16.mxu0 0
      %510 = vmatpush2.bf16.xpose.msra.mxu0 0
      %511 = vmatprep.subr.bf16.mxu0 0
      %512 = vmatpush2.bf16.xpose.msra.mxu0 0
      %513 = vmatprep.subr.bf16.mxu0 0
      %514 = vmatpush2.bf16.xpose.msra.mxu0 0
      %515 = vmatprep.subr.bf16.mxu0 0
      %516 = vmatpush2.bf16.xpose.msra.mxu0 0
      %517 = vmatprep.mubr.bf16.mxu0 0
      %518 = vmatmul.mubr.bf16.gmra.mxu0 %v480
      %v519 = vpop.f32.mrf.mxu0
      %v520 = vadd.f32 0.0, %v519
      %v521 = vpop.f32.mrf.mxu0
      %v522 = vpop.f32.mrf.mxu0
      %v523 = vpop.f32.mrf.mxu0
      %524 = vdwg.mxu0
      %v525 = vmul.f32 %v520, 0.17677669
      %v526 = vld [vmem:[%s335] sm:$0x1]
      %v528 = vlaneseq
      %v529 = vshrl.u32 %v528, 7
      %v530 = vsub.s32 0, %v529
      %v531 = vrot.slane %v526, %v530
      %v533 = vadd.f32 %v525, %v531
      %v534 = vsel %vm406, %v533, -inf
      %535 = vmax.xlane.f32.xlu0 %v534
      %v536 = vpop.xlane.xlu0 %535
      %v537 = vsub.f32 %v533, %v536
      %v538 = vmul.f32 %v537, 1.442695
      %v539 = vpow.pop %v538
      %v540 = vsel %vm406, %v539, 0.0
      %541 = vadd.xlane.f32.xlu0 %v540
      %v542 = vpop.xlane.xlu0 %541
      %v543 = vrcp.pop %v542
      %v544 = vmul.f32 %v539, %v543
      %v545 = vpack.c.bf16 %v544, %v544
      %v547 = vunpack.c.l.b16 %v349
      %v548 = vpack.c.b16 %v547, %v547
      %549 = vrot.lane.b32.xlu0 %v548, 96
      %v550 = vpop.permute.xlu0 %549
      %v552 = vsel %vm406, %v545, 0
      %v555 = vsel %vm422, %v550, 0
      %557 = vmatprep.subr.bf16.mxu0 0
      %558 = vmatpush1.bf16.msra.mxu0 0
      %559 = vmatprep.subr.bf16.mxu0 0
      %560 = vmatpush1.bf16.msra.mxu0 0
      %561 = vmatprep.subr.bf16.mxu0 0
      %562 = vmatpush1.bf16.msra.mxu0 0
      %563 = vmatprep.subr.bf16.mxu0 0
      %564 = vmatpush1.bf16.msra.mxu0 0
      %565 = vmatprep.subr.bf16.mxu0 0
      %566 = vmatpush1.bf16.msra.mxu0 0
      %567 = vmatprep.subr.bf16.mxu0 0
      %568 = vmatpush1.bf16.msra.mxu0 0
      %569 = vmatprep.subr.bf16.mxu0 0
      %570 = vmatpush1.bf16.msra.mxu0 0
      %571 = vmatprep.subr.bf16.mxu0 0
      %572 = vmatpush1.bf16.msra.mxu0 %v555
      %573 = vmatprep.subr.bf16.mxu0 0
      %574 = vmatpush2.bf16.msra.mxu0 0
      %575 = vmatprep.subr.bf16.mxu0 0
      %576 = vmatpush2.bf16.msra.mxu0 0
      %577 = vmatprep.subr.bf16.mxu0 0
      %578 = vmatpush2.bf16.msra.mxu0 0
      %579 = vmatprep.subr.bf16.mxu0 0
      %580 = vmatpush2.bf16.msra.mxu0 0
      %581 = vmatprep.subr.bf16.mxu0 0
      %582 = vmatpush2.bf16.msra.mxu0 0
      %583 = vmatprep.subr.bf16.mxu0 0
      %584 = vmatpush2.bf16.msra.mxu0 0
      %585 = vmatprep.subr.bf16.mxu0 0
      %586 = vmatpush2.bf16.msra.mxu0 0
      %587 = vmatprep.subr.bf16.mxu0 0
      %588 = vmatpush2.bf16.msra.mxu0 0
      %589 = vmatprep.mubr.bf16.mxu0 0
      %590 = vmatmul.mubr.bf16.gmra.mxu0 %v552
      %v591 = vpop.f32.mrf.mxu0
      %v592 = vadd.f32 0.0, %v591
      %v593 = vpop.f32.mrf.mxu0
      %v594 = vpop.f32.mrf.mxu0
      %v595 = vpop.f32.mrf.mxu0
      %596 = vdwg.mxu0
      %v597 = vpack.c.bf16 %v592, %v592
      %v599 = vunpack.c.l.b16 %v597
      %v600 = vpack.c.b16 %v599, %v599
      %601 = vrot.lane.b32.xlu0 %v600, 32
      %v602 = vpop.permute.xlu0 %601
      %vm604 = vcmask 519424
      %605 = vst.msk [vmem:[%s345] sm:$0xf] %vm604, %v602
      %606 = vrot.lane.b32.xlu0 %v471, 64
      %v607 = vpop.permute.xlu0 %606
      %608 = vrot.lane.b32.xlu0 %v476, 64
      %v609 = vpop.permute.xlu0 %608
      %v611 = vsel %vm350, %v607, 0
      %v614 = vsel %vm350, %v609, 0
      %616 = vmatprep.subr.bf16.mxu0 0
      %617 = vmatpush1.bf16.xpose.msra.mxu0 0
      %618 = vmatprep.subr.bf16.mxu0 0
      %619 = vmatpush1.bf16.xpose.msra.mxu0 0
      %620 = vmatprep.subr.bf16.mxu0 0
      %621 = vmatpush1.bf16.xpose.msra.mxu0 0
      %622 = vmatprep.subr.bf16.mxu0 0
      %623 = vmatpush1.bf16.xpose.msra.mxu0 0
      %624 = vmatprep.subr.bf16.mxu0 0
      %625 = vmatpush1.bf16.xpose.msra.mxu0 0
      %626 = vmatprep.subr.bf16.mxu0 0
      %627 = vmatpush1.bf16.xpose.msra.mxu0 0
      %628 = vmatprep.subr.bf16.mxu0 0
      %629 = vmatpush1.bf16.xpose.msra.mxu0 0
      %630 = vmatprep.subr.bf16.mxu0 0
      %631 = vmatpush1.bf16.xpose.msra.mxu0 %v614
      %632 = vmatprep.subr.bf16.mxu0 0
      %633 = vmatpush2.bf16.xpose.msra.mxu0 0
      %634 = vmatprep.subr.bf16.mxu0 0
      %635 = vmatpush2.bf16.xpose.msra.mxu0 0
      %636 = vmatprep.subr.bf16.mxu0 0
      %637 = vmatpush2.bf16.xpose.msra.mxu0 0
      %638 = vmatprep.subr.bf16.mxu0 0
      %639 = vmatpush2.bf16.xpose.msra.mxu0 0
      %640 = vmatprep.subr.bf16.mxu0 0
      %641 = vmatpush2.bf16.xpose.msra.mxu0 0
      %642 = vmatprep.subr.bf16.mxu0 0
      %643 = vmatpush2.bf16.xpose.msra.mxu0 0
      %644 = vmatprep.subr.bf16.mxu0 0
      %645 = vmatpush2.bf16.xpose.msra.mxu0 0
      %646 = vmatprep.subr.bf16.mxu0 0
      %647 = vmatpush2.bf16.xpose.msra.mxu0 0
      %648 = vmatprep.mubr.bf16.mxu0 0
      %649 = vmatmul.mubr.bf16.gmra.mxu0 %v611
      %v650 = vpop.f32.mrf.mxu0
      %v651 = vadd.f32 0.0, %v650
      %v652 = vpop.f32.mrf.mxu0
      %v653 = vpop.f32.mrf.mxu0
      %v654 = vpop.f32.mrf.mxu0
      %655 = vdwg.mxu0
      %v656 = vmul.f32 %v651, 0.17677669
      %v657 = vld [vmem:[%s335] sm:$0x1]
      %v659 = vlaneseq
      %v660 = vshrl.u32 %v659, 7
      %v661 = vsub.s32 0, %v660
      %v662 = vrot.slane %v657, %v661
      %v664 = vadd.f32 %v656, %v662
      %v665 = vsel %vm406, %v664, -inf
      %666 = vmax.xlane.f32.xlu0 %v665
      %v667 = vpop.xlane.xlu0 %666
      %v668 = vsub.f32 %v664, %v667
      %v669 = vmul.f32 %v668, 1.442695
      %v670 = vpow.pop %v669
      %v671 = vsel %vm406, %v670, 0.0
      %672 = vadd.xlane.f32.xlu0 %v671
      %v673 = vpop.xlane.xlu0 %672
      %v674 = vrcp.pop %v673
      %v675 = vmul.f32 %v670, %v674
      %v676 = vpack.c.bf16 %v675, %v675
      %677 = vrot.lane.b32.xlu0 %v548, 64
      %v678 = vpop.permute.xlu0 %677
      %v680 = vsel %vm406, %v676, 0
      %v683 = vsel %vm422, %v678, 0
      %685 = vmatprep.subr.bf16.mxu0 0
      %686 = vmatpush1.bf16.msra.mxu0 0
      %687 = vmatprep.subr.bf16.mxu0 0
      %688 = vmatpush1.bf16.msra.mxu0 0
      %689 = vmatprep.subr.bf16.mxu0 0
      %690 = vmatpush1.bf16.msra.mxu0 0
      %691 = vmatprep.subr.bf16.mxu0 0
      %692 = vmatpush1.bf16.msra.mxu0 0
      %693 = vmatprep.subr.bf16.mxu0 0
      %694 = vmatpush1.bf16.msra.mxu0 0
      %695 = vmatprep.subr.bf16.mxu0 0
      %696 = vmatpush1.bf16.msra.mxu0 0
      %697 = vmatprep.subr.bf16.mxu0 0
      %698 = vmatpush1.bf16.msra.mxu0 0
      %699 = vmatprep.subr.bf16.mxu0 0
      %700 = vmatpush1.bf16.msra.mxu0 %v683
      %701 = vmatprep.subr.bf16.mxu0 0
      %702 = vmatpush2.bf16.msra.mxu0 0
      %703 = vmatprep.subr.bf16.mxu0 0
      %704 = vmatpush2.bf16.msra.mxu0 0
      %705 = vmatprep.subr.bf16.mxu0 0
      %706 = vmatpush2.bf16.msra.mxu0 0
      %707 = vmatprep.subr.bf16.mxu0 0
      %708 = vmatpush2.bf16.msra.mxu0 0
      %709 = vmatprep.subr.bf16.mxu0 0
      %710 = vmatpush2.bf16.msra.mxu0 0
      %711 = vmatprep.subr.bf16.mxu0 0
      %712 = vmatpush2.bf16.msra.mxu0 0
      %713 = vmatprep.subr.bf16.mxu0 0
      %714 = vmatpush2.bf16.msra.mxu0 0
      %715 = vmatprep.subr.bf16.mxu0 0
      %716 = vmatpush2.bf16.msra.mxu0 0
      %717 = vmatprep.mubr.bf16.mxu0 0
      %718 = vmatmul.mubr.bf16.gmra.mxu0 %v680
      %v719 = vpop.f32.mrf.mxu0
      %v720 = vadd.f32 0.0, %v719
      %v721 = vpop.f32.mrf.mxu0
      %v722 = vpop.f32.mrf.mxu0
      %v723 = vpop.f32.mrf.mxu0
      %724 = vdwg.mxu0
      %v725 = vpack.c.bf16 %v720, %v720
      %v727 = vunpack.c.l.b16 %v725
      %v728 = vpack.c.b16 %v727, %v727
      %729 = vrot.lane.b32.xlu0 %v728, 64
      %v730 = vpop.permute.xlu0 %729
      %vm732 = vcmask 781824
      %733 = vst.msk [vmem:[%s345] sm:$0xf] %vm732, %v730
      %734 = vrot.lane.b32.xlu0 %v471, 32
      %v735 = vpop.permute.xlu0 %734
      %736 = vrot.lane.b32.xlu0 %v476, 32
      %v737 = vpop.permute.xlu0 %736
      %v739 = vsel %vm350, %v735, 0
      %v742 = vsel %vm350, %v737, 0
      %744 = vmatprep.subr.bf16.mxu0 0
      %745 = vmatpush1.bf16.xpose.msra.mxu0 0
      %746 = vmatprep.subr.bf16.mxu0 0
      %747 = vmatpush1.bf16.xpose.msra.mxu0 0
      %748 = vmatprep.subr.bf16.mxu0 0
      %749 = vmatpush1.bf16.xpose.msra.mxu0 0
      %750 = vmatprep.subr.bf16.mxu0 0
      %751 = vmatpush1.bf16.xpose.msra.mxu0 0
      %752 = vmatprep.subr.bf16.mxu0 0
      %753 = vmatpush1.bf16.xpose.msra.mxu0 0
      %754 = vmatprep.subr.bf16.mxu0 0
      %755 = vmatpush1.bf16.xpose.msra.mxu0 0
      %756 = vmatprep.subr.bf16.mxu0 0
      %757 = vmatpush1.bf16.xpose.msra.mxu0 0
      %758 = vmatprep.subr.bf16.mxu0 0
      %759 = vmatpush1.bf16.xpose.msra.mxu0 %v742
      %760 = vmatprep.subr.bf16.mxu0 0
      %761 = vmatpush2.bf16.xpose.msra.mxu0 0
      %762 = vmatprep.subr.bf16.mxu0 0
      %763 = vmatpush2.bf16.xpose.msra.mxu0 0
      %764 = vmatprep.subr.bf16.mxu0 0
      %765 = vmatpush2.bf16.xpose.msra.mxu0 0
      %766 = vmatprep.subr.bf16.mxu0 0
      %767 = vmatpush2.bf16.xpose.msra.mxu0 0
      %768 = vmatprep.subr.bf16.mxu0 0
      %769 = vmatpush2.bf16.xpose.msra.mxu0 0
      %770 = vmatprep.subr.bf16.mxu0 0
      %771 = vmatpush2.bf16.xpose.msra.mxu0 0
      %772 = vmatprep.subr.bf16.mxu0 0
      %773 = vmatpush2.bf16.xpose.msra.mxu0 0
      %774 = vmatprep.subr.bf16.mxu0 0
      %775 = vmatpush2.bf16.xpose.msra.mxu0 0
      %776 = vmatprep.mubr.bf16.mxu0 0
      %777 = vmatmul.mubr.bf16.gmra.mxu0 %v739
      %v778 = vpop.f32.mrf.mxu0
      %v779 = vadd.f32 0.0, %v778
      %v780 = vpop.f32.mrf.mxu0
      %v781 = vpop.f32.mrf.mxu0
      %v782 = vpop.f32.mrf.mxu0
      %783 = vdwg.mxu0
      %v784 = vmul.f32 %v779, 0.17677669
      %v785 = vld [vmem:[%s335] sm:$0x1]
      %v787 = vlaneseq
      %v788 = vshrl.u32 %v787, 7
      %v789 = vsub.s32 0, %v788
      %v790 = vrot.slane %v785, %v789
      %v792 = vadd.f32 %v784, %v790
      %v793 = vsel %vm406, %v792, -inf
      %794 = vmax.xlane.f32.xlu0 %v793
      %v795 = vpop.xlane.xlu0 %794
      %v796 = vsub.f32 %v792, %v795
      %v797 = vmul.f32 %v796, 1.442695
      %v798 = vpow.pop %v797
      %v799 = vsel %vm406, %v798, 0.0
      %800 = vadd.xlane.f32.xlu0 %v799
      %v801 = vpop.xlane.xlu0 %800
      %v802 = vrcp.pop %v801
      %v803 = vmul.f32 %v798, %v802
      %v804 = vpack.c.bf16 %v803, %v803
      %805 = vrot.lane.b32.xlu0 %v548, 32
      %v806 = vpop.permute.xlu0 %805
      %v808 = vsel %vm406, %v804, 0
      %v811 = vsel %vm422, %v806, 0
      %813 = vmatprep.subr.bf16.mxu0 0
      %814 = vmatpush1.bf16.msra.mxu0 0
      %815 = vmatprep.subr.bf16.mxu0 0
      %816 = vmatpush1.bf16.msra.mxu0 0
      %817 = vmatprep.subr.bf16.mxu0 0
      %818 = vmatpush1.bf16.msra.mxu0 0
      %819 = vmatprep.subr.bf16.mxu0 0
      %820 = vmatpush1.bf16.msra.mxu0 0
      %821 = vmatprep.subr.bf16.mxu0 0
      %822 = vmatpush1.bf16.msra.mxu0 0
      %823 = vmatprep.subr.bf16.mxu0 0
      %824 = vmatpush1.bf16.msra.mxu0 0
      %825 = vmatprep.subr.bf16.mxu0 0
      %826 = vmatpush1.bf16.msra.mxu0 0
      %827 = vmatprep.subr.bf16.mxu0 0
      %828 = vmatpush1.bf16.msra.mxu0 %v811
      %829 = vmatprep.subr.bf16.mxu0 0
      %830 = vmatpush2.bf16.msra.mxu0 0
      %831 = vmatprep.subr.bf16.mxu0 0
      %832 = vmatpush2.bf16.msra.mxu0 0
      %833 = vmatprep.subr.bf16.mxu0 0
      %834 = vmatpush2.bf16.msra.mxu0 0
      %835 = vmatprep.subr.bf16.mxu0 0
      %836 = vmatpush2.bf16.msra.mxu0 0
      %837 = vmatprep.subr.bf16.mxu0 0
      %838 = vmatpush2.bf16.msra.mxu0 0
      %839 = vmatprep.subr.bf16.mxu0 0
      %840 = vmatpush2.bf16.msra.mxu0 0
      %841 = vmatprep.subr.bf16.mxu0 0
      %842 = vmatpush2.bf16.msra.mxu0 0
      %843 = vmatprep.subr.bf16.mxu0 0
      %844 = vmatpush2.bf16.msra.mxu0 0
      %845 = vmatprep.mubr.bf16.mxu0 0
      %846 = vmatmul.mubr.bf16.gmra.mxu0 %v808
      %v847 = vpop.f32.mrf.mxu0
      %v848 = vadd.f32 0.0, %v847
      %v849 = vpop.f32.mrf.mxu0
      %v850 = vpop.f32.mrf.mxu0
      %v851 = vpop.f32.mrf.mxu0
      %852 = vdwg.mxu0
      %v853 = vpack.c.bf16 %v848, %v848
      %v855 = vunpack.c.l.b16 %v853
      %v856 = vpack.c.b16 %v855, %v855
      %857 = vrot.lane.b32.xlu0 %v856, 96
      %v858 = vpop.permute.xlu0 %857
      %vm860 = vcmask 1044224
      %861 = vst.msk [vmem:[%s345] sm:$0xf] %vm860, %v858
      %p862 = scmp.lt.s32.totalorder %s20, 3
      %s863 = scalar_select %p862, %s20, 3
      %p864 = scmp.lt.s32.totalorder %s22, 0
      %s865 = scalar_select %p864, %s22, 0
      %p866 = scmp.lt.s32.totalorder %s21, 0
      %s867 = scalar_select %p866, %s21, 0
      %s868 = sadd.s32 %s867, %s865
      %s869 = sadd.s32 %s868, %s863
      %s870 = smul.addr %s869, 4
      %s871 = scalar_lea.vmem %s4, %s870
      // Predicated region
      $region37: #{encoder_wrapper_forward.22} parent=35 // pred_check
        %p872 = pneg %p172
      $region38: #{encoder_wrapper_forward.22} parent=35 // pred_check_branch
        %874 = sbr.rel (%p872) target = $region40
      $region39: #{encoder_wrapper_forward.22} parent=35 // pred_region
        _
      $region40: #{encoder_wrapper_forward.22} parent=35 // pred_fallthru
        _
    $region36: #{encoder_wrapper_forward.22} parent=5 // pred_fallthru
      _
    %p875 = scmp.le.s32.totalorder 2, %s10
    // Predicated region
    $region41: #{encoder_wrapper_forward.22} parent=5 // pred_check
      %p876 = pneg %p875
    $region42: #{encoder_wrapper_forward.22} parent=5 // pred_check_branch
      %878 = sbr.rel (%p876) target = $region44
    $region43: #{encoder_wrapper_forward.22} parent=5 // pred_region
      %s879 = ssub.s32 %s10, 2
      // Predicated region
      $region45: #{encoder_wrapper_forward.22} parent=43 // pred_check
        %p880 = pneg %p178
      $region46: #{encoder_wrapper_forward.22} parent=43 // pred_check_branch
        %882 = sbr.rel (%p880) target = $region48
      $region47: #{encoder_wrapper_forward.22} parent=43 // pred_region
        %p883 = scmp.lt.s32.totalorder %s23, 3
        %s884 = scalar_select %p883, %s23, 3
        %p885 = scmp.lt.s32.totalorder %s25, 0
        %s886 = scalar_select %p885, %s25, 0
        %p887 = scmp.lt.s32.totalorder %s24, 0
        %s888 = scalar_select %p887, %s24, 0
        %s889 = sadd.s32 %s888, %s886
        %s890 = sadd.s32 %s889, %s884
        %s891 = smul.addr %s890, 4
        %s892 = scalar_lea.vmem %s4, %s891
      $region48: #{encoder_wrapper_forward.22} parent=43 // pred_fallthru
        _
    $region44: #{encoder_wrapper_forward.22} parent=5 // pred_fallthru
      _
  $region6: #{encoder_wrapper_forward.22} parent=0 // loop_footer
    %s14 = sadd.s32 1, %s10
  $region7: #{encoder_wrapper_forward.22} parent=0 // loop_footer_branch
    %9 = sbr.rel target = $region3
  $region8: #{encoder_wrapper_forward.22} parent=0 // loop_exit
    _

// kernel: encoder_wrapper_forward.25
$region0: #{encoder_wrapper_forward.25}
  #allocation0 [shape = 'u32[]', space=smem, size = 0x4, offset = 0x4, fixed_abs, tag = 'smem constant byte address 0x4 - core index']
  #allocation1 [shape = 'u32[144,128]{1,0:T(1,128)}', space=vmem, size = 0x12000, scoped, tag = 'internal scratch']
  %s0 = inlined_call_operand.vmem [shape: bf16[32,256], index: 0, kind: input, shape index: {}]
  %s1 = inlined_call_operand.vmem [shape: bf16[256,128], index: 1, kind: input, shape index: {}]
  %s2 = inlined_call_operand.vmem [shape: f32[1,128], index: 2, kind: input, shape index: {}]
  %s3 = inlined_call_operand.vmem [shape: bf16[32,128], index: 3, kind: input, shape index: {}]
  %s4 = inlined_call_operand.vmem [shape: bf16[32,128], index: 4, kind: output, shape index: {}]
  %s5 = sld [smem:[#allocation0]]
  $region26: #{encoder_wrapper_forward.25} parent=0
    _
  %s7 = ssub.s32 1, %s5
  %s8 = scalar_select 0, %s7, %s5
  // Predicated region
  $region2: #{encoder_wrapper_forward.25} parent=0 // pred_check
    _
  $region3: #{encoder_wrapper_forward.25} parent=0 // pred_check_branch
    %10 = sbr.rel (0) target = $region5
  $region4: #{encoder_wrapper_forward.25} parent=0 // pred_region
    _
  $region5: #{encoder_wrapper_forward.25} parent=0 // pred_fallthru
    _
  // Predicated region
  $region6: #{encoder_wrapper_forward.25} parent=0 // pred_check
    _
  $region7: #{encoder_wrapper_forward.25} parent=0 // pred_check_branch
    %12 = sbr.rel (0) target = $region9
  $region8: #{encoder_wrapper_forward.25} parent=0 // pred_region
    _
  $region9: #{encoder_wrapper_forward.25} parent=0 // pred_fallthru
    _
  // Predicated region
  $region10: #{encoder_wrapper_forward.25} parent=0 // pred_check
    _
  $region11: #{encoder_wrapper_forward.25} parent=0 // pred_check_branch
    %14 = sbr.rel (0) target = $region13
  $region12: #{encoder_wrapper_forward.25} parent=0 // pred_region
    _
  $region13: #{encoder_wrapper_forward.25} parent=0 // pred_fallthru
    _
  // Predicated region
  $region14: #{encoder_wrapper_forward.25} parent=0 // pred_check
    _
  $region15: #{encoder_wrapper_forward.25} parent=0 // pred_check_branch
    %16 = sbr.rel (0) target = $region17
  $region16: #{encoder_wrapper_forward.25} parent=0 // pred_region
    _
  $region17: #{encoder_wrapper_forward.25} parent=0 // pred_fallthru
    _
  %v18 = vld [vmem:[%s0] sm:$0xff]
  %v19 = vld [vmem:[%s0 + $0x8] sm:$0xff]
  %v20 = vld [vmem:[%s0 + $0x10] sm:$0xff]
  %v21 = vld [vmem:[%s0 + $0x18] sm:$0xff]
  %v22 = vld [vmem:[%s1] sm:$0xf]
  %v23 = vld [vmem:[%s1 + $0x4] sm:$0xf]
  %v24 = vld [vmem:[%s1 + $0x8] sm:$0xf]
  %v25 = vld [vmem:[%s1 + $0xc] sm:$0xf]
  %v26 = vld [vmem:[%s1 + $0x10] sm:$0xf]
  %v27 = vld [vmem:[%s1 + $0x14] sm:$0xf]
  %v28 = vld [vmem:[%s1 + $0x18] sm:$0xf]
  %v29 = vld [vmem:[%s1 + $0x1c] sm:$0xf]
  %v30 = vld [vmem:[%s1 + $0x20] sm:$0xf]
  %v31 = vld [vmem:[%s1 + $0x24] sm:$0xf]
  %v32 = vld [vmem:[%s1 + $0x28] sm:$0xf]
  %v33 = vld [vmem:[%s1 + $0x2c] sm:$0xf]
  %v34 = vld [vmem:[%s1 + $0x30] sm:$0xf]
  %v35 = vld [vmem:[%s1 + $0x34] sm:$0xf]
  %v36 = vld [vmem:[%s1 + $0x38] sm:$0xf]
  %v37 = vld [vmem:[%s1 + $0x3c] sm:$0xf]
  %v38 = vld [vmem:[%s1 + $0x40] sm:$0xf]
  %v39 = vld [vmem:[%s1 + $0x44] sm:$0xf]
  %v40 = vld [vmem:[%s1 + $0x48] sm:$0xf]
  %v41 = vld [vmem:[%s1 + $0x4c] sm:$0xf]
  %v42 = vld [vmem:[%s1 + $0x50] sm:$0xf]
  %v43 = vld [vmem:[%s1 + $0x54] sm:$0xf]
  %v44 = vld [vmem:[%s1 + $0x58] sm:$0xf]
  %v45 = vld [vmem:[%s1 + $0x5c] sm:$0xf]
  %v46 = vld [vmem:[%s1 + $0x60] sm:$0xf]
  %v47 = vld [vmem:[%s1 + $0x64] sm:$0xf]
  %v48 = vld [vmem:[%s1 + $0x68] sm:$0xf]
  %v49 = vld [vmem:[%s1 + $0x6c] sm:$0xf]
  %v50 = vld [vmem:[%s1 + $0x70] sm:$0xf]
  %v51 = vld [vmem:[%s1 + $0x74] sm:$0xf]
  %v52 = vld [vmem:[%s1 + $0x78] sm:$0xf]
  %v53 = vld [vmem:[%s1 + $0x7c] sm:$0xf]
  %v54 = vld [vmem:[%s2] sm:$0x1]
  %v56 = vlaneseq
  %v57 = vshrl.u32 %v56, 7
  %v58 = vsub.s32 0, %v57
  %v59 = vrot.slane %v54, %v58
  %v65 = vunpack.c.l.b16 %v18
  %v66 = vunpack.c.h.b16 %v18
  %v67 = vunpack.c.l.b16 %v19
  %v68 = vunpack.c.h.b16 %v19
  %v69 = vunpack.c.l.b16 %v20
  %v70 = vunpack.c.h.b16 %v20
  %v71 = vunpack.c.l.b16 %v21
  %v72 = vunpack.c.h.b16 %v21
  %v73 = vpack.c.b16 %v67, %v65
  %v74 = vpack.c.b16 %v68, %v66
  %v75 = vpack.c.b16 %v71, %v69
  %v76 = vpack.c.b16 %v72, %v70
  %v113 = vunpack.c.l.b16 %v22
  %v114 = vunpack.c.l.b16 %v23
  %v115 = vunpack.c.l.b16 %v24
  %v116 = vunpack.c.l.b16 %v25
  %v117 = vunpack.c.l.b16 %v26
  %v118 = vunpack.c.l.b16 %v27
  %v119 = vunpack.c.l.b16 %v28
  %v120 = vunpack.c.l.b16 %v29
  %v121 = vunpack.c.l.b16 %v30
  %v122 = vunpack.c.l.b16 %v31
  %v123 = vunpack.c.l.b16 %v32
  %v124 = vunpack.c.l.b16 %v33
  %v125 = vunpack.c.l.b16 %v34
  %v126 = vunpack.c.l.b16 %v35
  %v127 = vunpack.c.l.b16 %v36
  %v128 = vunpack.c.l.b16 %v37
  %v129 = vunpack.c.l.b16 %v38
  %v130 = vunpack.c.l.b16 %v39
  %v131 = vunpack.c.l.b16 %v40
  %v132 = vunpack.c.l.b16 %v41
  %v133 = vunpack.c.l.b16 %v42
  %v134 = vunpack.c.l.b16 %v43
  %v135 = vunpack.c.l.b16 %v44
  %v136 = vunpack.c.l.b16 %v45
  %v137 = vunpack.c.l.b16 %v46
  %v138 = vunpack.c.l.b16 %v47
  %v139 = vunpack.c.l.b16 %v48
  %v140 = vunpack.c.l.b16 %v49
  %v141 = vunpack.c.l.b16 %v50
  %v142 = vunpack.c.l.b16 %v51
  %v143 = vunpack.c.l.b16 %v52
  %v144 = vunpack.c.l.b16 %v53
  %v145 = vpack.c.b16 %v114, %v113
  %v146 = vpack.c.b16 %v116, %v115
  %v147 = vpack.c.b16 %v118, %v117
  %v148 = vpack.c.b16 %v120, %v119
  %v149 = vpack.c.b16 %v122, %v121
  %v150 = vpack.c.b16 %v124, %v123
  %v151 = vpack.c.b16 %v126, %v125
  %v152 = vpack.c.b16 %v128, %v127
  %v153 = vpack.c.b16 %v130, %v129
  %v154 = vpack.c.b16 %v132, %v131
  %v155 = vpack.c.b16 %v134, %v133
  %v156 = vpack.c.b16 %v136, %v135
  %v157 = vpack.c.b16 %v138, %v137
  %v158 = vpack.c.b16 %v140, %v139
  %v159 = vpack.c.b16 %v142, %v141
  %v160 = vpack.c.b16 %v144, %v143
  %177 = vmatprep.subr.bf16.mxu0 0
  %178 = vmatpush1.bf16.msra.mxu0 %v152
  %179 = vmatprep.subr.bf16.mxu0 0
  %180 = vmatpush1.bf16.msra.mxu0 %v151
  %181 = vmatprep.subr.bf16.mxu0 0
  %182 = vmatpush1.bf16.msra.mxu0 %v150
  %183 = vmatprep.subr.bf16.mxu0 0
  %184 = vmatpush1.bf16.msra.mxu0 %v149
  %185 = vmatprep.subr.bf16.mxu0 0
  %186 = vmatpush1.bf16.msra.mxu0 %v148
  %187 = vmatprep.subr.bf16.mxu0 0
  %188 = vmatpush1.bf16.msra.mxu0 %v147
  %189 = vmatprep.subr.bf16.mxu0 0
  %190 = vmatpush1.bf16.msra.mxu0 %v146
  %191 = vmatprep.subr.bf16.mxu0 0
  %192 = vmatpush1.bf16.msra.mxu0 %v145
  %193 = vmatprep.subr.bf16.mxu0 0
  %194 = vmatpush2.bf16.msra.mxu0 %v160
  %195 = vmatprep.subr.bf16.mxu0 0
  %196 = vmatpush2.bf16.msra.mxu0 %v159
  %197 = vmatprep.subr.bf16.mxu0 0
  %198 = vmatpush2.bf16.msra.mxu0 %v158
  %199 = vmatprep.subr.bf16.mxu0 0
  %200 = vmatpush2.bf16.msra.mxu0 %v157
  %201 = vmatprep.subr.bf16.mxu0 0
  %202 = vmatpush2.bf16.msra.mxu0 %v156
  %203 = vmatprep.subr.bf16.mxu0 0
  %204 = vmatpush2.bf16.msra.mxu0 %v155
  %205 = vmatprep.subr.bf16.mxu0 0
  %206 = vmatpush2.bf16.msra.mxu0 %v154
  %207 = vmatprep.subr.bf16.mxu0 0
  %208 = vmatpush2.bf16.msra.mxu0 %v153
  %209 = vmatprep.mubr.bf16.mxu0 %v74
  %210 = vmatmul.mubr.bf16.gmra.mxu0 %v73
  %v211 = vpop.f32.mrf.mxu0
  %v212 = vadd.f32 %v59, %v211
  %v213 = vpop.f32.mrf.mxu0
  %v214 = vpop.f32.mrf.mxu0
  %v215 = vadd.f32 %v59, %v214
  %v216 = vpop.f32.mrf.mxu0
  %217 = vmatprep.mubr.bf16.mxu0 %v76
  %218 = vmatmul.mubr.bf16.gmra.mxu0 %v75
  %v219 = vpop.f32.mrf.mxu0
  %v220 = vadd.f32 %v59, %v219
  %v221 = vpop.f32.mrf.mxu0
  %v222 = vpop.f32.mrf.mxu0
  %v223 = vadd.f32 %v59, %v222
  %v224 = vpop.f32.mrf.mxu0
  %225 = vdwg.mxu0
  %v226 = vld [vmem:[%s3] sm:$0xf]
  %v227 = vld [vmem:[%s3 + $0x4] sm:$0xf]
  %v228 = vld [vmem:[%s3 + $0x8] sm:$0xf]
  %v229 = vld [vmem:[%s3 + $0xc] sm:$0xf]
  %v230 = vunpack.c.l.bf16 %v226
  %v231 = vunpack.c.l.bf16 %v227
  %v232 = vunpack.c.l.bf16 %v228
  %v233 = vunpack.c.l.bf16 %v229
  %v234 = vadd.f32 %v212, %v230
  %v235 = vadd.f32 %v215, %v231
  %v236 = vadd.f32 %v220, %v232
  %v237 = vadd.f32 %v223, %v233
  %v238 = vpack.c.bf16 %v235, %v234
  %v239 = vpack.c.bf16 %v237, %v236
  %v242 = vunpack.c.l.b16 %v238
  %v243 = vunpack.c.h.b16 %v238
  %v244 = vunpack.c.l.b16 %v239
  %v245 = vunpack.c.h.b16 %v239
  %v246 = vpack.c.b16 %v242, %v242
  %v247 = vpack.c.b16 %v243, %v243
  %v248 = vpack.c.b16 %v244, %v244
  %v249 = vpack.c.b16 %v245, %v245
  %254 = vst [vmem:[%s4] sm:$0xf] %v246
  %255 = vst [vmem:[%s4 + $0x4] sm:$0xf] %v247
  %256 = vst [vmem:[%s4 + $0x8] sm:$0xf] %v248
  %257 = vst [vmem:[%s4 + $0xc] sm:$0xf] %v249
  // Predicated region
  $region18: #{encoder_wrapper_forward.25} parent=0 // pred_check
    _
  $region19: #{encoder_wrapper_forward.25} parent=0 // pred_check_branch
    %259 = sbr.rel (0) target = $region21
  $region20: #{encoder_wrapper_forward.25} parent=0 // pred_region
    _
  $region21: #{encoder_wrapper_forward.25} parent=0 // pred_fallthru
    _
  // Predicated region
  $region22: #{encoder_wrapper_forward.25} parent=0 // pred_check
    _
  $region23: #{encoder_wrapper_forward.25} parent=0 // pred_check_branch
    %261 = sbr.rel (0) target = $region25
  $region24: #{encoder_wrapper_forward.25} parent=0 // pred_region
    _
  $region25: #{encoder_wrapper_forward.25} parent=0 // pred_fallthru
    _

// kernel: encoder_wrapper_forward.30
$region0: #{encoder_wrapper_forward.30}
  #allocation0 [shape = 'u32[]', space=smem, size = 0x4, offset = 0x4, fixed_abs, tag = 'smem constant byte address 0x4 - core index']
  #allocation1 [shape = 'u32[144,128]{1,0:T(1,128)}', space=vmem, size = 0x12000, scoped, tag = 'internal scratch']
  %s0 = inlined_call_operand.vmem [shape: bf16[32,256], index: 0, kind: input, shape index: {}]
  %s1 = inlined_call_operand.vmem [shape: bf16[256,128], index: 1, kind: input, shape index: {}]
  %s2 = inlined_call_operand.vmem [shape: f32[1,128], index: 2, kind: input, shape index: {}]
  %s3 = inlined_call_operand.vmem [shape: bf16[32,128], index: 3, kind: input, shape index: {}]
  %s4 = inlined_call_operand.vmem [shape: f32[1,128], index: 4, kind: input, shape index: {}]
  %s5 = inlined_call_operand.vmem [shape: f32[1,128], index: 5, kind: input, shape index: {}]
  %s6 = inlined_call_operand.vmem [shape: bf16[32,128], index: 6, kind: output, shape index: {}]
  %s7 = sld [smem:[#allocation0]]
  $region34: #{encoder_wrapper_forward.30} parent=0
    _
  %s9 = ssub.s32 1, %s7
  %s10 = scalar_select 0, %s9, %s7
  // Predicated region
  $region2: #{encoder_wrapper_forward.30} parent=0 // pred_check
    _
  $region3: #{encoder_wrapper_forward.30} parent=0 // pred_check_branch
    %12 = sbr.rel (0) target = $region5
  $region4: #{encoder_wrapper_forward.30} parent=0 // pred_region
    _
  $region5: #{encoder_wrapper_forward.30} parent=0 // pred_fallthru
    _
  // Predicated region
  $region6: #{encoder_wrapper_forward.30} parent=0 // pred_check
    _
  $region7: #{encoder_wrapper_forward.30} parent=0 // pred_check_branch
    %14 = sbr.rel (0) target = $region9
  $region8: #{encoder_wrapper_forward.30} parent=0 // pred_region
    _
  $region9: #{encoder_wrapper_forward.30} parent=0 // pred_fallthru
    _
  // Predicated region
  $region10: #{encoder_wrapper_forward.30} parent=0 // pred_check
    _
  $region11: #{encoder_wrapper_forward.30} parent=0 // pred_check_branch
    %16 = sbr.rel (0) target = $region13
  $region12: #{encoder_wrapper_forward.30} parent=0 // pred_region
    _
  $region13: #{encoder_wrapper_forward.30} parent=0 // pred_fallthru
    _
  // Predicated region
  $region14: #{encoder_wrapper_forward.30} parent=0 // pred_check
    _
  $region15: #{encoder_wrapper_forward.30} parent=0 // pred_check_branch
    %18 = sbr.rel (0) target = $region17
  $region16: #{encoder_wrapper_forward.30} parent=0 // pred_region
    _
  $region17: #{encoder_wrapper_forward.30} parent=0 // pred_fallthru
    _
  // Predicated region
  $region18: #{encoder_wrapper_forward.30} parent=0 // pred_check
    _
  $region19: #{encoder_wrapper_forward.30} parent=0 // pred_check_branch
    %20 = sbr.rel (0) target = $region21
  $region20: #{encoder_wrapper_forward.30} parent=0 // pred_region
    _
  $region21: #{encoder_wrapper_forward.30} parent=0 // pred_fallthru
    _
  // Predicated region
  $region22: #{encoder_wrapper_forward.30} parent=0 // pred_check
    _
  $region23: #{encoder_wrapper_forward.30} parent=0 // pred_check_branch
    %22 = sbr.rel (0) target = $region25
  $region24: #{encoder_wrapper_forward.30} parent=0 // pred_region
    _
  $region25: #{encoder_wrapper_forward.30} parent=0 // pred_fallthru
    _
  %v24 = vld [vmem:[%s0] sm:$0xff]
  %v25 = vld [vmem:[%s0 + $0x8] sm:$0xff]
  %v26 = vld [vmem:[%s0 + $0x10] sm:$0xff]
  %v27 = vld [vmem:[%s0 + $0x18] sm:$0xff]
  %v28 = vld [vmem:[%s1] sm:$0xf]
  %v29 = vld [vmem:[%s1 + $0x4] sm:$0xf]
  %v30 = vld [vmem:[%s1 + $0x8] sm:$0xf]
  %v31 = vld [vmem:[%s1 + $0xc] sm:$0xf]
  %v32 = vld [vmem:[%s1 + $0x10] sm:$0xf]
  %v33 = vld [vmem:[%s1 + $0x14] sm:$0xf]
  %v34 = vld [vmem:[%s1 + $0x18] sm:$0xf]
  %v35 = vld [vmem:[%s1 + $0x1c] sm:$0xf]
  %v36 = vld [vmem:[%s1 + $0x20] sm:$0xf]
  %v37 = vld [vmem:[%s1 + $0x24] sm:$0xf]
  %v38 = vld [vmem:[%s1 + $0x28] sm:$0xf]
  %v39 = vld [vmem:[%s1 + $0x2c] sm:$0xf]
  %v40 = vld [vmem:[%s1 + $0x30] sm:$0xf]
  %v41 = vld [vmem:[%s1 + $0x34] sm:$0xf]
  %v42 = vld [vmem:[%s1 + $0x38] sm:$0xf]
  %v43 = vld [vmem:[%s1 + $0x3c] sm:$0xf]
  %v44 = vld [vmem:[%s1 + $0x40] sm:$0xf]
  %v45 = vld [vmem:[%s1 + $0x44] sm:$0xf]
  %v46 = vld [vmem:[%s1 + $0x48] sm:$0xf]
  %v47 = vld [vmem:[%s1 + $0x4c] sm:$0xf]
  %v48 = vld [vmem:[%s1 + $0x50] sm:$0xf]
  %v49 = vld [vmem:[%s1 + $0x54] sm:$0xf]
  %v50 = vld [vmem:[%s1 + $0x58] sm:$0xf]
  %v51 = vld [vmem:[%s1 + $0x5c] sm:$0xf]
  %v52 = vld [vmem:[%s1 + $0x60] sm:$0xf]
  %v53 = vld [vmem:[%s1 + $0x64] sm:$0xf]
  %v54 = vld [vmem:[%s1 + $0x68] sm:$0xf]
  %v55 = vld [vmem:[%s1 + $0x6c] sm:$0xf]
  %v56 = vld [vmem:[%s1 + $0x70] sm:$0xf]
  %v57 = vld [vmem:[%s1 + $0x74] sm:$0xf]
  %v58 = vld [vmem:[%s1 + $0x78] sm:$0xf]
  %v59 = vld [vmem:[%s1 + $0x7c] sm:$0xf]
  %v60 = vld [vmem:[%s2] sm:$0x1]
  %v62 = vlaneseq
  %v63 = vshrl.u32 %v62, 7
  %v64 = vsub.s32 0, %v63
  %v65 = vrot.slane %v60, %v64
  %v71 = vunpack.c.l.b16 %v24
  %v72 = vunpack.c.h.b16 %v24
  %v73 = vunpack.c.l.b16 %v25
  %v74 = vunpack.c.h.b16 %v25
  %v75 = vunpack.c.l.b16 %v26
  %v76 = vunpack.c.h.b16 %v26
  %v77 = vunpack.c.l.b16 %v27
  %v78 = vunpack.c.h.b16 %v27
  %v79 = vpack.c.b16 %v73, %v71
  %v80 = vpack.c.b16 %v74, %v72
  %v81 = vpack.c.b16 %v77, %v75
  %v82 = vpack.c.b16 %v78, %v76
  %v119 = vunpack.c.l.b16 %v28
  %v120 = vunpack.c.l.b16 %v29
  %v121 = vunpack.c.l.b16 %v30
  %v122 = vunpack.c.l.b16 %v31
  %v123 = vunpack.c.l.b16 %v32
  %v124 = vunpack.c.l.b16 %v33
  %v125 = vunpack.c.l.b16 %v34
  %v126 = vunpack.c.l.b16 %v35
  %v127 = vunpack.c.l.b16 %v36
  %v128 = vunpack.c.l.b16 %v37
  %v129 = vunpack.c.l.b16 %v38
  %v130 = vunpack.c.l.b16 %v39
  %v131 = vunpack.c.l.b16 %v40
  %v132 = vunpack.c.l.b16 %v41
  %v133 = vunpack.c.l.b16 %v42
  %v134 = vunpack.c.l.b16 %v43
  %v135 = vunpack.c.l.b16 %v44
  %v136 = vunpack.c.l.b16 %v45
  %v137 = vunpack.c.l.b16 %v46
  %v138 = vunpack.c.l.b16 %v47
  %v139 = vunpack.c.l.b16 %v48
  %v140 = vunpack.c.l.b16 %v49
  %v141 = vunpack.c.l.b16 %v50
  %v142 = vunpack.c.l.b16 %v51
  %v143 = vunpack.c.l.b16 %v52
  %v144 = vunpack.c.l.b16 %v53
  %v145 = vunpack.c.l.b16 %v54
  %v146 = vunpack.c.l.b16 %v55
  %v147 = vunpack.c.l.b16 %v56
  %v148 = vunpack.c.l.b16 %v57
  %v149 = vunpack.c.l.b16 %v58
  %v150 = vunpack.c.l.b16 %v59
  %v151 = vpack.c.b16 %v120, %v119
  %v152 = vpack.c.b16 %v122, %v121
  %v153 = vpack.c.b16 %v124, %v123
  %v154 = vpack.c.b16 %v126, %v125
  %v155 = vpack.c.b16 %v128, %v127
  %v156 = vpack.c.b16 %v130, %v129
  %v157 = vpack.c.b16 %v132, %v131
  %v158 = vpack.c.b16 %v134, %v133
  %v159 = vpack.c.b16 %v136, %v135
  %v160 = vpack.c.b16 %v138, %v137
  %v161 = vpack.c.b16 %v140, %v139
  %v162 = vpack.c.b16 %v142, %v141
  %v163 = vpack.c.b16 %v144, %v143
  %v164 = vpack.c.b16 %v146, %v145
  %v165 = vpack.c.b16 %v148, %v147
  %v166 = vpack.c.b16 %v150, %v149
  %183 = vmatprep.subr.bf16.mxu0 0
  %184 = vmatpush1.bf16.msra.mxu0 %v158
  %185 = vmatprep.subr.bf16.mxu0 0
  %186 = vmatpush1.bf16.msra.mxu0 %v157
  %187 = vmatprep.subr.bf16.mxu0 0
  %188 = vmatpush1.bf16.msra.mxu0 %v156
  %189 = vmatprep.subr.bf16.mxu0 0
  %190 = vmatpush1.bf16.msra.mxu0 %v155
  %191 = vmatprep.subr.bf16.mxu0 0
  %192 = vmatpush1.bf16.msra.mxu0 %v154
  %193 = vmatprep.subr.bf16.mxu0 0
  %194 = vmatpush1.bf16.msra.mxu0 %v153
  %195 = vmatprep.subr.bf16.mxu0 0
  %196 = vmatpush1.bf16.msra.mxu0 %v152
  %197 = vmatprep.subr.bf16.mxu0 0
  %198 = vmatpush1.bf16.msra.mxu0 %v151
  %199 = vmatprep.subr.bf16.mxu0 0
  %200 = vmatpush2.bf16.msra.mxu0 %v166
  %201 = vmatprep.subr.bf16.mxu0 0
  %202 = vmatpush2.bf16.msra.mxu0 %v165
  %203 = vmatprep.subr.bf16.mxu0 0
  %204 = vmatpush2.bf16.msra.mxu0 %v164
  %205 = vmatprep.subr.bf16.mxu0 0
  %206 = vmatpush2.bf16.msra.mxu0 %v163
  %207 = vmatprep.subr.bf16.mxu0 0
  %208 = vmatpush2.bf16.msra.mxu0 %v162
  %209 = vmatprep.subr.bf16.mxu0 0
  %210 = vmatpush2.bf16.msra.mxu0 %v161
  %211 = vmatprep.subr.bf16.mxu0 0
  %212 = vmatpush2.bf16.msra.mxu0 %v160
  %213 = vmatprep.subr.bf16.mxu0 0
  %214 = vmatpush2.bf16.msra.mxu0 %v159
  %215 = vmatprep.mubr.bf16.mxu0 %v80
  %216 = vmatmul.mubr.bf16.gmra.mxu0 %v79
  %v217 = vpop.f32.mrf.mxu0
  %v218 = vadd.f32 %v65, %v217
  %v219 = vpop.f32.mrf.mxu0
  %v220 = vpop.f32.mrf.mxu0
  %v221 = vadd.f32 %v65, %v220
  %v222 = vpop.f32.mrf.mxu0
  %223 = vmatprep.mubr.bf16.mxu0 %v82
  %224 = vmatmul.mubr.bf16.gmra.mxu0 %v81
  %v225 = vpop.f32.mrf.mxu0
  %v226 = vadd.f32 %v65, %v225
  %v227 = vpop.f32.mrf.mxu0
  %v228 = vpop.f32.mrf.mxu0
  %v229 = vadd.f32 %v65, %v228
  %v230 = vpop.f32.mrf.mxu0
  %231 = vdwg.mxu0
  %v232 = vld [vmem:[%s3] sm:$0xf]
  %v233 = vld [vmem:[%s3 + $0x4] sm:$0xf]
  %v234 = vld [vmem:[%s3 + $0x8] sm:$0xf]
  %v235 = vld [vmem:[%s3 + $0xc] sm:$0xf]
  %v236 = vunpack.c.l.bf16 %v232
  %v237 = vunpack.c.l.bf16 %v233
  %v238 = vunpack.c.l.bf16 %v234
  %v239 = vunpack.c.l.bf16 %v235
  %v240 = vadd.f32 %v218, %v236
  %v241 = vadd.f32 %v221, %v237
  %v242 = vadd.f32 %v226, %v238
  %v243 = vadd.f32 %v229, %v239
  %244 = vadd.xlane.f32.xlu0 %v240
  %v245 = vpop.xlane.xlu0 %244
  %246 = vadd.xlane.f32.xlu0 %v241
  %v247 = vpop.xlane.xlu0 %246
  %248 = vadd.xlane.f32.xlu0 %v242
  %v249 = vpop.xlane.xlu0 %248
  %250 = vadd.xlane.f32.xlu0 %v243
  %v251 = vpop.xlane.xlu0 %250
  %v252 = vmul.f32 %v240, %v240
  %v253 = vmul.f32 %v241, %v241
  %v254 = vmul.f32 %v242, %v242
  %v255 = vmul.f32 %v243, %v243
  %256 = vadd.xlane.f32.xlu0 %v252
  %v257 = vpop.xlane.xlu0 %256
  %258 = vadd.xlane.f32.xlu0 %v253
  %v259 = vpop.xlane.xlu0 %258
  %260 = vadd.xlane.f32.xlu0 %v254
  %v261 = vpop.xlane.xlu0 %260
  %262 = vadd.xlane.f32.xlu0 %v255
  %v263 = vpop.xlane.xlu0 %262
  %v264 = vmul.f32 %v245, 0.0078125
  %v265 = vmul.f32 %v247, 0.0078125
  %v266 = vmul.f32 %v249, 0.0078125
  %v267 = vmul.f32 %v251, 0.0078125
  %v268 = vmul.f32 %v257, 0.0078125
  %v269 = vmul.f32 %v259, 0.0078125
  %v270 = vmul.f32 %v261, 0.0078125
  %v271 = vmul.f32 %v263, 0.0078125
  %v272 = vmul.f32 %v264, %v264
  %v273 = vmul.f32 %v265, %v265
  %v274 = vmul.f32 %v266, %v266
  %v275 = vmul.f32 %v267, %v267
  %v276 = vsub.f32 %v268, %v272
  %v277 = vsub.f32 %v269, %v273
  %v278 = vsub.f32 %v270, %v274
  %v279 = vsub.f32 %v271, %v275
  %v280 = vmax.f32 %v276, 0.0
  %v281 = vmax.f32 %v277, 0.0
  %v282 = vmax.f32 %v278, 0.0
  %v283 = vmax.f32 %v279, 0.0
  %v284 = vsub.f32 %v240, %v264
  %v285 = vsub.f32 %v241, %v265
  %v286 = vsub.f32 %v242, %v266
  %v287 = vsub.f32 %v243, %v267
  %v288 = vadd.f32 %v280, 1e-06
  %v289 = vadd.f32 %v281, 1e-06
  %v290 = vadd.f32 %v282, 1e-06
  %v291 = vadd.f32 %v283, 1e-06
  %v292 = vrsqrt.pop %v288
  %v293 = vrsqrt.pop %v289
  %v294 = vrsqrt.pop %v290
  %v295 = vrsqrt.pop %v291
  %v296 = vmul.f32 %v284, %v292
  %v297 = vmul.f32 %v285, %v293
  %v298 = vmul.f32 %v286, %v294
  %v299 = vmul.f32 %v287, %v295
  %v300 = vld [vmem:[%s4] sm:$0x1]
  %v302 = vlaneseq
  %v303 = vshrl.u32 %v302, 7
  %v304 = vsub.s32 0, %v303
  %v305 = vrot.slane %v300, %v304
  %v307 = vmul.f32 %v296, %v305
  %v308 = vmul.f32 %v297, %v305
  %v309 = vmul.f32 %v298, %v305
  %v310 = vmul.f32 %v299, %v305
  %v311 = vld [vmem:[%s5] sm:$0x1]
  %v313 = vlaneseq
  %v314 = vshrl.u32 %v313, 7
  %v315 = vsub.s32 0, %v314
  %v316 = vrot.slane %v311, %v315
  %v318 = vadd.f32 %v307, %v316
  %v319 = vadd.f32 %v308, %v316
  %v320 = vadd.f32 %v309, %v316
  %v321 = vadd.f32 %v310, %v316
  %v322 = vpack.c.bf16 %v319, %v318
  %v323 = vpack.c.bf16 %v321, %v320
  %v326 = vunpack.c.l.b16 %v322
  %v327 = vunpack.c.h.b16 %v322
  %v328 = vunpack.c.l.b16 %v323
  %v329 = vunpack.c.h.b16 %v323
  %v330 = vpack.c.b16 %v326, %v326
  %v331 = vpack.c.b16 %v327, %v327
  %v332 = vpack.c.b16 %v328, %v328
  %v333 = vpack.c.b16 %v329, %v329
  %338 = vst [vmem:[%s6] sm:$0xf] %v330
  %339 = vst [vmem:[%s6 + $0x4] sm:$0xf] %v331
  %340 = vst [vmem:[%s6 + $0x8] sm:$0xf] %v332
  %341 = vst [vmem:[%s6 + $0xc] sm:$0xf] %v333
  // Predicated region
  $region26: #{encoder_wrapper_forward.30} parent=0 // pred_check
    _
  $region27: #{encoder_wrapper_forward.30} parent=0 // pred_check_branch
    %343 = sbr.rel (0) target = $region29
  $region28: #{encoder_wrapper_forward.30} parent=0 // pred_region
    _
  $region29: #{encoder_wrapper_forward.30} parent=0 // pred_fallthru
    _
  // Predicated region
  $region30: #{encoder_wrapper_forward.30} parent=0 // pred_check
    _
  $region31: #{encoder_wrapper_forward.30} parent=0 // pred_check_branch
    %345 = sbr.rel (0) target = $region33
  $region32: #{encoder_wrapper_forward.30} parent=0 // pred_region
    _
  $region33: #{encoder_wrapper_forward.30} parent=0 // pred_fallthru
    _

// kernel: encoder_wrapper_forward.31
$region0: #{encoder_wrapper_forward.31}
  #allocation0 [shape = 'u32[]', space=smem, size = 0x4, offset = 0x4, fixed_abs, tag = 'smem constant byte address 0x4 - core index']
  #allocation1 [shape = 'u32[144,128]{1,0:T(1,128)}', space=vmem, size = 0x12000, scoped, tag = 'internal scratch']
  %s0 = inlined_call_operand.vmem [shape: bf16[16,64], index: 0, kind: input, shape index: {}]
  %s1 = inlined_call_operand.vmem [shape: bf16[64,128], index: 1, kind: input, shape index: {}]
  %s2 = inlined_call_operand.vmem [shape: f32[1,128], index: 2, kind: input, shape index: {}]
  %s3 = inlined_call_operand.vmem [shape: f32[16,4], index: 3, kind: input, shape index: {}]
  %s4 = inlined_call_operand.vmem [shape: f32[4,128], index: 4, kind: input, shape index: {}]
  %s5 = inlined_call_operand.vmem [shape: f32[1,128], index: 5, kind: input, shape index: {}]
  %s6 = inlined_call_operand.vmem [shape: f32[1,128], index: 6, kind: input, shape index: {}]
  %s7 = inlined_call_operand.vmem [shape: f32[1,128], index: 7, kind: input, shape index: {}]
  %s8 = inlined_call_operand.vmem [shape: bf16[16,128], index: 8, kind: output, shape index: {}]
  %s9 = sld [smem:[#allocation0]]
  $region42: #{encoder_wrapper_forward.31} parent=0
    _
  %s11 = ssub.s32 1, %s9
  %s12 = scalar_select 0, %s11, %s9
  // Predicated region
  $region2: #{encoder_wrapper_forward.31} parent=0 // pred_check
    _
  $region3: #{encoder_wrapper_forward.31} parent=0 // pred_check_branch
    %14 = sbr.rel (0) target = $region5
  $region4: #{encoder_wrapper_forward.31} parent=0 // pred_region
    _
  $region5: #{encoder_wrapper_forward.31} parent=0 // pred_fallthru
    _
  // Predicated region
  $region6: #{encoder_wrapper_forward.31} parent=0 // pred_check
    _
  $region7: #{encoder_wrapper_forward.31} parent=0 // pred_check_branch
    %16 = sbr.rel (0) target = $region9
  $region8: #{encoder_wrapper_forward.31} parent=0 // pred_region
    _
  $region9: #{encoder_wrapper_forward.31} parent=0 // pred_fallthru
    _
  // Predicated region
  $region10: #{encoder_wrapper_forward.31} parent=0 // pred_check
    _
  $region11: #{encoder_wrapper_forward.31} parent=0 // pred_check_branch
    %18 = sbr.rel (0) target = $region13
  $region12: #{encoder_wrapper_forward.31} parent=0 // pred_region
    _
  $region13: #{encoder_wrapper_forward.31} parent=0 // pred_fallthru
    _
  // Predicated region
  $region14: #{encoder_wrapper_forward.31} parent=0 // pred_check
    _
  $region15: #{encoder_wrapper_forward.31} parent=0 // pred_check_branch
    %20 = sbr.rel (0) target = $region17
  $region16: #{encoder_wrapper_forward.31} parent=0 // pred_region
    _
  $region17: #{encoder_wrapper_forward.31} parent=0 // pred_fallthru
    _
  // Predicated region
  $region18: #{encoder_wrapper_forward.31} parent=0 // pred_check
    _
  $region19: #{encoder_wrapper_forward.31} parent=0 // pred_check_branch
    %22 = sbr.rel (0) target = $region21
  $region20: #{encoder_wrapper_forward.31} parent=0 // pred_region
    _
  $region21: #{encoder_wrapper_forward.31} parent=0 // pred_fallthru
    _
  // Predicated region
  $region22: #{encoder_wrapper_forward.31} parent=0 // pred_check
    _
  $region23: #{encoder_wrapper_forward.31} parent=0 // pred_check_branch
    %24 = sbr.rel (0) target = $region25
  $region24: #{encoder_wrapper_forward.31} parent=0 // pred_region
    _
  $region25: #{encoder_wrapper_forward.31} parent=0 // pred_fallthru
    _
  // Predicated region
  $region26: #{encoder_wrapper_forward.31} parent=0 // pred_check
    _
  $region27: #{encoder_wrapper_forward.31} parent=0 // pred_check_branch
    %26 = sbr.rel (0) target = $region29
  $region28: #{encoder_wrapper_forward.31} parent=0 // pred_region
    _
  $region29: #{encoder_wrapper_forward.31} parent=0 // pred_fallthru
    _
  // Predicated region
  $region30: #{encoder_wrapper_forward.31} parent=0 // pred_check
    _
  $region31: #{encoder_wrapper_forward.31} parent=0 // pred_check_branch
    %28 = sbr.rel (0) target = $region33
  $region32: #{encoder_wrapper_forward.31} parent=0 // pred_region
    _
  $region33: #{encoder_wrapper_forward.31} parent=0 // pred_fallthru
    _
  %v30 = vld [vmem:[%s0] sm:$0xf]
  %v31 = vld [vmem:[%s0 + $0x4] sm:$0xf]
  %v32 = vld [vmem:[%s1] sm:$0xf]
  %v33 = vld [vmem:[%s1 + $0x4] sm:$0xf]
  %v34 = vld [vmem:[%s1 + $0x8] sm:$0xf]
  %v35 = vld [vmem:[%s1 + $0xc] sm:$0xf]
  %v36 = vld [vmem:[%s1 + $0x10] sm:$0xf]
  %v37 = vld [vmem:[%s1 + $0x14] sm:$0xf]
  %v38 = vld [vmem:[%s1 + $0x18] sm:$0xf]
  %v39 = vld [vmem:[%s1 + $0x1c] sm:$0xf]
  %v40 = vld [vmem:[%s2] sm:$0x1]
  %v42 = vlaneseq
  %v43 = vshrl.u32 %v42, 7
  %v44 = vsub.s32 0, %v43
  %v45 = vrot.slane %v40, %v44
  %v49 = vunpack.c.l.b16 %v30
  %v50 = vunpack.c.l.b16 %v31
  %v51 = vpack.c.b16 %v50, %v49
  %v60 = vunpack.c.l.b16 %v32
  %v61 = vunpack.c.l.b16 %v33
  %v62 = vunpack.c.l.b16 %v34
  %v63 = vunpack.c.l.b16 %v35
  %v64 = vunpack.c.l.b16 %v36
  %v65 = vunpack.c.l.b16 %v37
  %v66 = vunpack.c.l.b16 %v38
  %v67 = vunpack.c.l.b16 %v39
  %v68 = vpack.c.b16 %v61, %v60
  %v69 = vpack.c.b16 %v63, %v62
  %v70 = vpack.c.b16 %v65, %v64
  %v71 = vpack.c.b16 %v67, %v66
  %vm76 = vcmask 523264
  %v78 = vsel %vm76, %v51, 0
  %80 = vmatprep.subr.bf16.mxu0 0
  %81 = vmatpush1.bf16.msra.mxu0 0
  %82 = vmatprep.subr.bf16.mxu0 0
  %83 = vmatpush1.bf16.msra.mxu0 0
  %84 = vmatprep.subr.bf16.mxu0 0
  %85 = vmatpush1.bf16.msra.mxu0 0
  %86 = vmatprep.subr.bf16.mxu0 0
  %87 = vmatpush1.bf16.msra.mxu0 0
  %88 = vmatprep.subr.bf16.mxu0 0
  %89 = vmatpush1.bf16.msra.mxu0 %v71
  %90 = vmatprep.subr.bf16.mxu0 0
  %91 = vmatpush1.bf16.msra.mxu0 %v70
  %92 = vmatprep.subr.bf16.mxu0 0
  %93 = vmatpush1.bf16.msra.mxu0 %v69
  %94 = vmatprep.subr.bf16.mxu0 0
  %95 = vmatpush1.bf16.msra.mxu0 %v68
  %96 = vmatprep.subr.bf16.mxu0 0
  %97 = vmatpush2.bf16.msra.mxu0 0
  %98 = vmatprep.subr.bf16.mxu0 0
  %99 = vmatpush2.bf16.msra.mxu0 0
  %100 = vmatprep.subr.bf16.mxu0 0
  %101 = vmatpush2.bf16.msra.mxu0 0
  %102 = vmatprep.subr.bf16.mxu0 0
  %103 = vmatpush2.bf16.msra.mxu0 0
  %104 = vmatprep.subr.bf16.mxu0 0
  %105 = vmatpush2.bf16.msra.mxu0 0
  %106 = vmatprep.subr.bf16.mxu0 0
  %107 = vmatpush2.bf16.msra.mxu0 0
  %108 = vmatprep.subr.bf16.mxu0 0
  %109 = vmatpush2.bf16.msra.mxu0 0
  %110 = vmatprep.subr.bf16.mxu0 0
  %111 = vmatpush2.bf16.msra.mxu0 0
  %112 = vmatprep.mubr.bf16.mxu0 0
  %113 = vmatmul.mubr.bf16.gmra.mxu0 %v78
  %v114 = vpop.f32.mrf.mxu0
  %v115 = vadd.f32 %v45, %v114
  %v116 = vpop.f32.mrf.mxu0
  %v117 = vpop.f32.mrf.mxu0
  %v118 = vadd.f32 %v45, %v117
  %v119 = vpop.f32.mrf.mxu0
  %120 = vdwg.mxu0
  %v121 = vld [vmem:[%s5] sm:$0x1]
  %v123 = vlaneseq
  %v124 = vshrl.u32 %v123, 7
  %v125 = vsub.s32 0, %v124
  %v126 = vrot.slane %v121, %v125
  %v128 = vadd.f32 %v115, %v126
  %v129 = vadd.f32 %v118, %v126
  %v130 = vld [vmem:[%s3] sm:$0xff]
  %v131 = vld [vmem:[%s3 + $0x8] sm:$0xff]
  %v132 = vld [vmem:[%s4] sm:$0xf]
  %134 = vset.pattern.permute.xlu0 0
  %135 = vperm.xlu0 %134, %v130
  %v136 = vpop.permute.xlu0 %135
  %139 = vset.pattern.permute.xlu0 0
  %140 = vperm.xlu0 %139, %v131
  %v141 = vpop.permute.xlu0 %140
  %v143 = vlaneseq
  %v144 = vshrl.u32 %v143, 7
  %v145 = vsub.s32 0, %v144
  %v146 = vrot.slane %v132, %v145
  %v147 = vmul.f32 %v136, %v146
  %v148 = vmul.f32 %v141, %v146
  %v149 = vadd.f32 %v128, %v147
  %v150 = vadd.f32 %v129, %v148
  %151 = vset.pattern.permute.xlu0 1
  %152 = vperm.xlu0 %151, %v130
  %v153 = vpop.permute.xlu0 %152
  %155 = vset.pattern.permute.xlu0 1
  %156 = vperm.xlu0 %155, %v131
  %v157 = vpop.permute.xlu0 %156
  %v159 = vlaneseq
  %v160 = vshrl.u32 %v159, 7
  %v161 = vsub.s32 1, %v160
  %v162 = vrot.slane %v132, %v161
  %v163 = vmul.f32 %v153, %v162
  %v164 = vmul.f32 %v157, %v162
  %v165 = vadd.f32 %v149, %v163
  %v166 = vadd.f32 %v150, %v164
  %167 = vset.pattern.permute.xlu0 2
  %168 = vperm.xlu0 %167, %v130
  %v169 = vpop.permute.xlu0 %168
  %171 = vset.pattern.permute.xlu0 2
  %172 = vperm.xlu0 %171, %v131
  %v173 = vpop.permute.xlu0 %172
  %v175 = vlaneseq
  %v176 = vshrl.u32 %v175, 7
  %v177 = vsub.s32 2, %v176
  %v178 = vrot.slane %v132, %v177
  %v179 = vmul.f32 %v169, %v178
  %v180 = vmul.f32 %v173, %v178
  %v181 = vadd.f32 %v165, %v179
  %v182 = vadd.f32 %v166, %v180
  %183 = vset.pattern.permute.xlu0 3
  %184 = vperm.xlu0 %183, %v130
  %v185 = vpop.permute.xlu0 %184
  %187 = vset.pattern.permute.xlu0 3
  %188 = vperm.xlu0 %187, %v131
  %v189 = vpop.permute.xlu0 %188
  %v191 = vlaneseq
  %v192 = vshrl.u32 %v191, 7
  %v193 = vsub.s32 3, %v192
  %v194 = vrot.slane %v132, %v193
  %v195 = vmul.f32 %v185, %v194
  %v196 = vmul.f32 %v189, %v194
  %v197 = vadd.f32 %v181, %v195
  %v198 = vadd.f32 %v182, %v196
  %199 = vadd.xlane.f32.xlu0 %v197
  %v200 = vpop.xlane.xlu0 %199
  %201 = vadd.xlane.f32.xlu0 %v198
  %v202 = vpop.xlane.xlu0 %201
  %v203 = vmul.f32 %v197, %v197
  %v204 = vmul.f32 %v198, %v198
  %205 = vadd.xlane.f32.xlu0 %v203
  %v206 = vpop.xlane.xlu0 %205
  %207 = vadd.xlane.f32.xlu0 %v204
  %v208 = vpop.xlane.xlu0 %207
  %v209 = vmul.f32 %v200, 0.0078125
  %v210 = vmul.f32 %v202, 0.0078125
  %v211 = vmul.f32 %v206, 0.0078125
  %v212 = vmul.f32 %v208, 0.0078125
  %v213 = vmul.f32 %v209, %v209
  %v214 = vmul.f32 %v210, %v210
  %v215 = vsub.f32 %v211, %v213
  %v216 = vsub.f32 %v212, %v214
  %v217 = vmax.f32 %v215, 0.0
  %v218 = vmax.f32 %v216, 0.0
  %v219 = vsub.f32 %v197, %v209
  %v220 = vsub.f32 %v198, %v210
  %v221 = vadd.f32 %v217, 1e-06
  %v222 = vadd.f32 %v218, 1e-06
  %v223 = vrsqrt.pop %v221
  %v224 = vrsqrt.pop %v222
  %v225 = vmul.f32 %v219, %v223
  %v226 = vmul.f32 %v220, %v224
  %v227 = vld [vmem:[%s6] sm:$0x1]
  %v229 = vlaneseq
  %v230 = vshrl.u32 %v229, 7
  %v231 = vsub.s32 0, %v230
  %v232 = vrot.slane %v227, %v231
  %v234 = vmul.f32 %v225, %v232
  %v235 = vmul.f32 %v226, %v232
  %v236 = vld [vmem:[%s7] sm:$0x1]
  %v238 = vlaneseq
  %v239 = vshrl.u32 %v238, 7
  %v240 = vsub.s32 0, %v239
  %v241 = vrot.slane %v236, %v240
  %v243 = vadd.f32 %v234, %v241
  %v244 = vadd.f32 %v235, %v241
  %v245 = vpack.c.bf16 %v244, %v243
  %v247 = vunpack.c.l.b16 %v245
  %v248 = vunpack.c.h.b16 %v245
  %v249 = vpack.c.b16 %v247, %v247
  %v250 = vpack.c.b16 %v248, %v248
  %253 = vst [vmem:[%s8] sm:$0xf] %v249
  %254 = vst [vmem:[%s8 + $0x4] sm:$0xf] %v250
  // Predicated region
  $region34: #{encoder_wrapper_forward.31} parent=0 // pred_check
    _
  $region35: #{encoder_wrapper_forward.31} parent=0 // pred_check_branch
    %256 = sbr.rel (0) target = $region37
  $region36: #{encoder_wrapper_forward.31} parent=0 // pred_region
    _
  $region37: #{encoder_wrapper_forward.31} parent=0 // pred_fallthru
    _
  // Predicated region
  $region38: #{encoder_wrapper_forward.31} parent=0 // pred_check
    _
  $region39: #{encoder_wrapper_forward.31} parent=0 // pred_check_branch
    %258 = sbr.rel (0) target = $region41
  $region40: #{encoder_wrapper_forward.31} parent=0 // pred_region
    _
  $region41: #{encoder_wrapper_forward.31} parent=0 // pred_fallthru
    _

// kernel: encoder_wrapper_forward.32
$region0: #{encoder_wrapper_forward.32}
  #allocation0 [shape = 'u32[]', space=smem, size = 0x4, offset = 0x4, fixed_abs, tag = 'smem constant byte address 0x4 - core index']
  #allocation1 [shape = 'u32[144,128]{1,0:T(1,128)}', space=vmem, size = 0x12000, scoped, tag = 'internal scratch']
  %s0 = inlined_call_operand.vmem [shape: bf16[16,128], index: 0, kind: input, shape index: {}]
  %s1 = inlined_call_operand.vmem [shape: f32[1,128], index: 1, kind: input, shape index: {}]
  %s2 = inlined_call_operand.vmem [shape: f32[1,128], index: 2, kind: input, shape index: {}]
  %s3 = inlined_call_operand.vmem [shape: bf16[128,384], index: 3, kind: input, shape index: {}]
  %s4 = inlined_call_operand.vmem [shape: f32[1,384], index: 4, kind: input, shape index: {}]
  %s5 = inlined_call_operand.vmem [shape: bf16[16,384], index: 5, kind: output, shape index: {}]
  %s6 = sld [smem:[#allocation0]]
  $region30: #{encoder_wrapper_forward.32} parent=0
    _
  %s8 = ssub.s32 1, %s6
  %s9 = scalar_select 0, %s8, %s6
  // Predicated region
  $region2: #{encoder_wrapper_forward.32} parent=0 // pred_check
    _
  $region3: #{encoder_wrapper_forward.32} parent=0 // pred_check_branch
    %11 = sbr.rel (0) target = $region5
  $region4: #{encoder_wrapper_forward.32} parent=0 // pred_region
    _
  $region5: #{encoder_wrapper_forward.32} parent=0 // pred_fallthru
    _
  // Predicated region
  $region6: #{encoder_wrapper_forward.32} parent=0 // pred_check
    _
  $region7: #{encoder_wrapper_forward.32} parent=0 // pred_check_branch
    %13 = sbr.rel (0) target = $region9
  $region8: #{encoder_wrapper_forward.32} parent=0 // pred_region
    _
  $region9: #{encoder_wrapper_forward.32} parent=0 // pred_fallthru
    _
  // Predicated region
  $region10: #{encoder_wrapper_forward.32} parent=0 // pred_check
    _
  $region11: #{encoder_wrapper_forward.32} parent=0 // pred_check_branch
    %15 = sbr.rel (0) target = $region13
  $region12: #{encoder_wrapper_forward.32} parent=0 // pred_region
    _
  $region13: #{encoder_wrapper_forward.32} parent=0 // pred_fallthru
    _
  // Predicated region
  $region14: #{encoder_wrapper_forward.32} parent=0 // pred_check
    _
  $region15: #{encoder_wrapper_forward.32} parent=0 // pred_check_branch
    %17 = sbr.rel (0) target = $region17
  $region16: #{encoder_wrapper_forward.32} parent=0 // pred_region
    _
  $region17: #{encoder_wrapper_forward.32} parent=0 // pred_fallthru
    _
  // Predicated region
  $region18: #{encoder_wrapper_forward.32} parent=0 // pred_check
    _
  $region19: #{encoder_wrapper_forward.32} parent=0 // pred_check_branch
    %19 = sbr.rel (0) target = $region21
  $region20: #{encoder_wrapper_forward.32} parent=0 // pred_region
    _
  $region21: #{encoder_wrapper_forward.32} parent=0 // pred_fallthru
    _
  %v21 = vld [vmem:[%s0] sm:$0xf]
  %v22 = vld [vmem:[%s0 + $0x4] sm:$0xf]
  %v23 = vunpack.c.l.bf16 %v21
  %v24 = vunpack.c.l.bf16 %v22
  %25 = vadd.xlane.f32.xlu0 %v23
  %v26 = vpop.xlane.xlu0 %25
  %27 = vadd.xlane.f32.xlu0 %v24
  %v28 = vpop.xlane.xlu0 %27
  %v29 = vmul.f32 %v23, %v23
  %v30 = vmul.f32 %v24, %v24
  %31 = vadd.xlane.f32.xlu0 %v29
  %v32 = vpop.xlane.xlu0 %31
  %33 = vadd.xlane.f32.xlu0 %v30
  %v34 = vpop.xlane.xlu0 %33
  %v35 = vmul.f32 %v26, 0.0078125
  %v36 = vmul.f32 %v28, 0.0078125
  %v37 = vmul.f32 %v32, 0.0078125
  %v38 = vmul.f32 %v34, 0.0078125
  %v39 = vmul.f32 %v35, %v35
  %v40 = vmul.f32 %v36, %v36
  %v41 = vsub.f32 %v37, %v39
  %v42 = vsub.f32 %v38, %v40
  %v43 = vmax.f32 %v41, 0.0
  %v44 = vmax.f32 %v42, 0.0
  %v45 = vsub.f32 %v23, %v35
  %v46 = vsub.f32 %v24, %v36
  %v47 = vadd.f32 %v43, 1e-06
  %v48 = vadd.f32 %v44, 1e-06
  %v49 = vrsqrt.pop %v47
  %v50 = vrsqrt.pop %v48
  %v51 = vmul.f32 %v45, %v49
  %v52 = vmul.f32 %v46, %v50
  %v53 = vld [vmem:[%s1] sm:$0x1]
  %v55 = vlaneseq
  %v56 = vshrl.u32 %v55, 7
  %v57 = vsub.s32 0, %v56
  %v58 = vrot.slane %v53, %v57
  %v60 = vmul.f32 %v51, %v58
  %v61 = vmul.f32 %v52, %v58
  %v62 = vld [vmem:[%s2] sm:$0x1]
  %v64 = vlaneseq
  %v65 = vshrl.u32 %v64, 7
  %v66 = vsub.s32 0, %v65
  %v67 = vrot.slane %v62, %v66
  %v69 = vadd.f32 %v60, %v67
  %v70 = vadd.f32 %v61, %v67
  %v71 = vpack.c.bf16 %v70, %v69
  %v72 = vld [vmem:[%s3] sm:$0xff]
  %v73 = vld [vmem:[%s3 + $0x8] sm:$0xf]
  %v74 = vld [vmem:[%s3 + $0xc] sm:$0xff]
  %v75 = vld [vmem:[%s3 + $0x14] sm:$0xf]
  %v76 = vld [vmem:[%s3 + $0x18] sm:$0xff]
  %v77 = vld [vmem:[%s3 + $0x20] sm:$0xf]
  %v78 = vld [vmem:[%s3 + $0x24] sm:$0xff]
  %v79 = vld [vmem:[%s3 + $0x2c] sm:$0xf]
  %v80 = vld [vmem:[%s3 + $0x30] sm:$0xff]
  %v81 = vld [vmem:[%s3 + $0x38] sm:$0xf]
  %v82 = vld [vmem:[%s3 + $0x3c] sm:$0xff]
  %v83 = vld [vmem:[%s3 + $0x44] sm:$0xf]
  %v84 = vld [vmem:[%s3 + $0x48] sm:$0xff]
  %v85 = vld [vmem:[%s3 + $0x50] sm:$0xf]
  %v86 = vld [vmem:[%s3 + $0x54] sm:$0xff]
  %v87 = vld [vmem:[%s3 + $0x5c] sm:$0xf]
  %v88 = vld [vmem:[%s3 + $0x60] sm:$0xff]
  %v89 = vld [vmem:[%s3 + $0x68] sm:$0xf]
  %v90 = vld [vmem:[%s3 + $0x6c] sm:$0xff]
  %v91 = vld [vmem:[%s3 + $0x74] sm:$0xf]
  %v92 = vld [vmem:[%s3 + $0x78] sm:$0xff]
  %v93 = vld [vmem:[%s3 + $0x80] sm:$0xf]
  %v94 = vld [vmem:[%s3 + $0x84] sm:$0xff]
  %v95 = vld [vmem:[%s3 + $0x8c] sm:$0xf]
  %v96 = vld [vmem:[%s3 + $0x90] sm:$0xff]
  %v97 = vld [vmem:[%s3 + $0x98] sm:$0xf]
  %v98 = vld [vmem:[%s3 + $0x9c] sm:$0xff]
  %v99 = vld [vmem:[%s3 + $0xa4] sm:$0xf]
  %v100 = vld [vmem:[%s3 + $0xa8] sm:$0xff]
  %v101 = vld [vmem:[%s3 + $0xb0] sm:$0xf]
  %v102 = vld [vmem:[%s3 + $0xb4] sm:$0xff]
  %v103 = vld [vmem:[%s3 + $0xbc] sm:$0xf]
  %v104 = vld [vmem:[%s4] sm:$0x7]
  %v106 = vlaneseq
  %v107 = vshrl.u32 %v106, 7
  %v108 = vsub.s32 0, %v107
  %v109 = vrot.slane %v104, %v108
  %v110 = vlaneseq
  %v111 = vshrl.u32 %v110, 7
  %v112 = vsub.s32 1, %v111
  %v113 = vrot.slane %v104, %v112
  %v114 = vlaneseq
  %v115 = vshrl.u32 %v114, 7
  %v116 = vsub.s32 2, %v115
  %v117 = vrot.slane %v104, %v116
  %v153 = vunpack.c.l.b16 %v72
  %v154 = vunpack.c.h.b16 %v72
  %v155 = vunpack.c.l.b16 %v73
  %v156 = vunpack.c.l.b16 %v74
  %v157 = vunpack.c.h.b16 %v74
  %v158 = vunpack.c.l.b16 %v75
  %v159 = vunpack.c.l.b16 %v76
  %v160 = vunpack.c.h.b16 %v76
  %v161 = vunpack.c.l.b16 %v77
  %v162 = vunpack.c.l.b16 %v78
  %v163 = vunpack.c.h.b16 %v78
  %v164 = vunpack.c.l.b16 %v79
  %v165 = vunpack.c.l.b16 %v80
  %v166 = vunpack.c.h.b16 %v80
  %v167 = vunpack.c.l.b16 %v81
  %v168 = vunpack.c.l.b16 %v82
  %v169 = vunpack.c.h.b16 %v82
  %v170 = vunpack.c.l.b16 %v83
  %v171 = vunpack.c.l.b16 %v84
  %v172 = vunpack.c.h.b16 %v84
  %v173 = vunpack.c.l.b16 %v85
  %v174 = vunpack.c.l.b16 %v86
  %v175 = vunpack.c.h.b16 %v86
  %v176 = vunpack.c.l.b16 %v87
  %v177 = vunpack.c.l.b16 %v88
  %v178 = vunpack.c.h.b16 %v88
  %v179 = vunpack.c.l.b16 %v89
  %v180 = vunpack.c.l.b16 %v90
  %v181 = vunpack.c.h.b16 %v90
  %v182 = vunpack.c.l.b16 %v91
  %v183 = vunpack.c.l.b16 %v92
  %v184 = vunpack.c.h.b16 %v92
  %v185 = vunpack.c.l.b16 %v93
  %v186 = vunpack.c.l.b16 %v94
  %v187 = vunpack.c.h.b16 %v94
  %v188 = vunpack.c.l.b16 %v95
  %v189 = vunpack.c.l.b16 %v96
  %v190 = vunpack.c.h.b16 %v96
  %v191 = vunpack.c.l.b16 %v97
  %v192 = vunpack.c.l.b16 %v98
  %v193 = vunpack.c.h.b16 %v98
  %v194 = vunpack.c.l.b16 %v99
  %v195 = vunpack.c.l.b16 %v100
  %v196 = vunpack.c.h.b16 %v100
  %v197 = vunpack.c.l.b16 %v101
  %v198 = vunpack.c.l.b16 %v102
  %v199 = vunpack.c.h.b16 %v102
  %v200 = vunpack.c.l.b16 %v103
  %v201 = vpack.c.b16 %v156, %v153
  %v202 = vpack.c.b16 %v157, %v154
  %v203 = vpack.c.b16 %v158, %v155
  %v204 = vpack.c.b16 %v162, %v159
  %v205 = vpack.c.b16 %v163, %v160
  %v206 = vpack.c.b16 %v164, %v161
  %v207 = vpack.c.b16 %v168, %v165
  %v208 = vpack.c.b16 %v169, %v166
  %v209 = vpack.c.b16 %v170, %v167
  %v210 = vpack.c.b16 %v174, %v171
  %v211 = vpack.c.b16 %v175, %v172
  %v212 = vpack.c.b16 %v176, %v173
  %v213 = vpack.c.b16 %v180, %v177
  %v214 = vpack.c.b16 %v181, %v178
  %v215 = vpack.c.b16 %v182, %v179
  %v216 = vpack.c.b16 %v186, %v183
  %v217 = vpack.c.b16 %v187, %v184
  %v218 = vpack.c.b16 %v188, %v185
  %v219 = vpack.c.b16 %v192, %v189
  %v220 = vpack.c.b16 %v193, %v190
  %v221 = vpack.c.b16 %v194, %v191
  %v222 = vpack.c.b16 %v198, %v195
  %v223 = vpack.c.b16 %v199, %v196
  %v224 = vpack.c.b16 %v200, %v197
  %249 = vmatprep.subr.bf16.mxu0 %v223
  %250 = vmatpush1.bf16.msra.mxu0 %v222
  %251 = vmatprep.subr.bf16.mxu0 %v220
  %252 = vmatpush1.bf16.msra.mxu0 %v219
  %253 = vmatprep.subr.bf16.mxu0 %v217
  %254 = vmatpush1.bf16.msra.mxu0 %v216
  %255 = vmatprep.subr.bf16.mxu0 %v214
  %256 = vmatpush1.bf16.msra.mxu0 %v213
  %257 = vmatprep.subr.bf16.mxu0 %v211
  %258 = vmatpush1.bf16.msra.mxu0 %v210
  %259 = vmatprep.subr.bf16.mxu0 %v208
  %260 = vmatpush1.bf16.msra.mxu0 %v207
  %261 = vmatprep.subr.bf16.mxu0 %v205
  %262 = vmatpush1.bf16.msra.mxu0 %v204
  %263 = vmatprep.subr.bf16.mxu0 %v202
  %264 = vmatpush1.bf16.msra.mxu0 %v201
  %265 = vmatprep.subr.bf16.mxu0 0
  %266 = vmatpush2.bf16.msra.mxu0 0
  %267 = vmatprep.subr.bf16.mxu0 0
  %268 = vmatpush2.bf16.msra.mxu0 0
  %269 = vmatprep.subr.bf16.mxu0 0
  %270 = vmatpush2.bf16.msra.mxu0 0
  %271 = vmatprep.subr.bf16.mxu0 0
  %272 = vmatpush2.bf16.msra.mxu0 0
  %273 = vmatprep.subr.bf16.mxu0 0
  %274 = vmatpush2.bf16.msra.mxu0 0
  %275 = vmatprep.subr.bf16.mxu0 0
  %276 = vmatpush2.bf16.msra.mxu0 0
  %277 = vmatprep.subr.bf16.mxu0 0
  %278 = vmatpush2.bf16.msra.mxu0 0
  %279 = vmatprep.subr.bf16.mxu0 0
  %280 = vmatpush2.bf16.msra.mxu0 0
  %281 = vmatprep.mubr.bf16.mxu0 0
  %282 = vmatmul.mubr.bf16.gmra.mxu0 %v71
  %v283 = vpop.f32.mrf.mxu0
  %v284 = vadd.f32 %v109, %v283
  %v285 = vpop.f32.mrf.mxu0
  %v286 = vadd.f32 %v113, %v285
  %v287 = vpop.f32.mrf.mxu0
  %v288 = vadd.f32 %v109, %v287
  %v289 = vpop.f32.mrf.mxu0
  %v290 = vadd.f32 %v113, %v289
  %291 = vdwg.mxu0
  %292 = vmatprep.subr.bf16.mxu0 0
  %293 = vmatpush1.bf16.msra.mxu0 %v224
  %294 = vmatprep.subr.bf16.mxu0 0
  %295 = vmatpush1.bf16.msra.mxu0 %v221
  %296 = vmatprep.subr.bf16.mxu0 0
  %297 = vmatpush1.bf16.msra.mxu0 %v218
  %298 = vmatprep.subr.bf16.mxu0 0
  %299 = vmatpush1.bf16.msra.mxu0 %v215
  %300 = vmatprep.subr.bf16.mxu0 0
  %301 = vmatpush1.bf16.msra.mxu0 %v212
  %302 = vmatprep.subr.bf16.mxu0 0
  %303 = vmatpush1.bf16.msra.mxu0 %v209
  %304 = vmatprep.subr.bf16.mxu0 0
  %305 = vmatpush1.bf16.msra.mxu0 %v206
  %306 = vmatprep.subr.bf16.mxu0 0
  %307 = vmatpush1.bf16.msra.mxu0 %v203
  %308 = vmatprep.subr.bf16.mxu0 0
  %309 = vmatpush2.bf16.msra.mxu0 0
  %310 = vmatprep.subr.bf16.mxu0 0
  %311 = vmatpush2.bf16.msra.mxu0 0
  %312 = vmatprep.subr.bf16.mxu0 0
  %313 = vmatpush2.bf16.msra.mxu0 0
  %314 = vmatprep.subr.bf16.mxu0 0
  %315 = vmatpush2.bf16.msra.mxu0 0
  %316 = vmatprep.subr.bf16.mxu0 0
  %317 = vmatpush2.bf16.msra.mxu0 0
  %318 = vmatprep.subr.bf16.mxu0 0
  %319 = vmatpush2.bf16.msra.mxu0 0
  %320 = vmatprep.subr.bf16.mxu0 0
  %321 = vmatpush2.bf16.msra.mxu0 0
  %322 = vmatprep.subr.bf16.mxu0 0
  %323 = vmatpush2.bf16.msra.mxu0 0
  %324 = vmatprep.mubr.bf16.mxu0 0
  %325 = vmatmul.mubr.bf16.gmra.mxu0 %v71
  %v326 = vpop.f32.mrf.mxu0
  %v327 = vadd.f32 %v117, %v326
  %v328 = vpop.f32.mrf.mxu0
  %v329 = vpop.f32.mrf.mxu0
  %v330 = vadd.f32 %v117, %v329
  %v331 = vpop.f32.mrf.mxu0
  %332 = vdwg.mxu0
  %v333 = vpack.c.bf16 %v288, %v284
  %v334 = vpack.c.bf16 %v290, %v286
  %v335 = vpack.c.bf16 %v330, %v327
  %v339 = vunpack.c.l.b16 %v333
  %v340 = vunpack.c.l.b16 %v334
  %v341 = vunpack.c.l.b16 %v335
  %v342 = vunpack.c.h.b16 %v333
  %v343 = vunpack.c.h.b16 %v334
  %v344 = vunpack.c.h.b16 %v335
  %v345 = vpack.c.b16 %v340, %v339
  %v346 = vpack.c.b16 %v341, %v341
  %v347 = vpack.c.b16 %v343, %v342
  %v348 = vpack.c.b16 %v344, %v344
  %353 = vst [vmem:[%s5] sm:$0xff] %v345
  %354 = vst [vmem:[%s5 + $0x8] sm:$0xf] %v346
  %355 = vst [vmem:[%s5 + $0xc] sm:$0xff] %v347
  %356 = vst [vmem:[%s5 + $0x14] sm:$0xf] %v348
  // Predicated region
  $region22: #{encoder_wrapper_forward.32} parent=0 // pred_check
    _
  $region23: #{encoder_wrapper_forward.32} parent=0 // pred_check_branch
    %358 = sbr.rel (0) target = $region25
  $region24: #{encoder_wrapper_forward.32} parent=0 // pred_region
    _
  $region25: #{encoder_wrapper_forward.32} parent=0 // pred_fallthru
    _
  // Predicated region
  $region26: #{encoder_wrapper_forward.32} parent=0 // pred_check
    _
  $region27: #{encoder_wrapper_forward.32} parent=0 // pred_check_branch
    %360 = sbr.rel (0) target = $region29
  $region28: #{encoder_wrapper_forward.32} parent=0 // pred_region
    _
  $region29: #{encoder_wrapper_forward.32} parent=0 // pred_fallthru
    _

// kernel: encoder_wrapper_forward.33
$region0: #{encoder_wrapper_forward.33}
  #allocation0 [shape = 'u32[]', space=smem, size = 0x4, offset = 0x4, fixed_abs, tag = 'smem constant byte address 0x4 - core index']
  #allocation1 [shape = 'u32[144,128]{1,0:T(1,128)}', space=vmem, size = 0x12000, scoped, tag = 'internal scratch']
  %s0 = inlined_call_operand.vmem [shape: bf16[2,8,384], index: 0, kind: input, shape index: {}, may-alias: {0,1,2}]
  %s1 = inlined_call_operand.vmem [shape: bf16[2,8,384], index: 1, kind: input, shape index: {}, may-alias: {0,1,2}]
  %s2 = inlined_call_operand.vmem [shape: bf16[2,8,384], index: 2, kind: input, shape index: {}, may-alias: {0,1,2}]
  %s3 = inlined_call_operand.vmem [shape: bf16[2,8,128], index: 3, kind: output, shape index: {}]
  %s4 = sld [smem:[#allocation0]]
  $region45: #{encoder_wrapper_forward.33} parent=0
    _
  %s6 = ssub.s32 1, %s4
  %s7 = scalar_select 0, %s6, %s4
  loop: start=0, step=1, limit=4
  $region2: #{encoder_wrapper_forward.33} parent=0 // loop_pre_header
    _
  $region3: #{encoder_wrapper_forward.33} parent=0 // loop_header
    %s9 = sphi 0, %s13
    %p10 = scmp.ge.s32.totalorder %s9, 4
    %s16 = sphi 0, %s35
    %s17 = sphi 0, %s31
    %s18 = sphi 0, %s27
    %s19 = sphi 0, %s16
    %s20 = sphi 0, %s17
    %s21 = sphi 0, %s18
    %s22 = sphi 0, %s19
    %s23 = sphi 0, %s20
    %s24 = sphi 0, %s21
    %s42 = sphi 0, %s44
    %s45 = sphi 0, %s42
    %s46 = sphi 0, %s45
    %s62 = sphi 0, %s46
    %s72 = sphi 0, %s74
    %s75 = sphi 0, %s72
    %s76 = sphi 0, %s75
    %s92 = sphi 0, %s76
    %s102 = sphi 0, %s104
    %s105 = sphi 0, %s102
    %s106 = sphi 0, %s105
    %s122 = sphi 0, %s106
    %s132 = sphi 0, %s134
    %s135 = sphi 0, %s132
    %s136 = sphi 0, %s135
    %s152 = sphi 0, %s136
  $region4: #{encoder_wrapper_forward.33} parent=0 // loop_header_branch
    %12 = sbr.rel (%p10) target = $region8
  $region5: #{encoder_wrapper_forward.33} parent=0 // loop_body
    %s14 = ssub.s32 %s9, 1
    %s15 = ssub.s32 %s9, 2
    %s25 = sadd.s32 1, %s18
    %p26 = scmp.ge.s32.totalorder %s25, 1
    %s27 = scalar_select %p26, 0, %s25
    %s28 = sadd.s32 1, %s17
    %s29 = scalar_select %p26, %s28, %s17
    %p30 = scmp.ge.s32.totalorder %s29, 1
    %s31 = scalar_select %p30, 0, %s29
    %s32 = sadd.s32 1, %s16
    %s33 = scalar_select %p30, %s32, %s16
    %p34 = scmp.ge.s32.totalorder %s33, 2
    %s35 = scalar_select %p34, 0, %s33
    %s36 = ssub.s32 %s16, %s35
    %s37 = ssub.s32 %s18, %s27
    %s38 = sor.u32 %s36, %s37
    %s39 = ssub.s32 %s17, %s31
    %s40 = sor.u32 %s38, %s39
    %p41 = scmp.eq.s32.totalorder %s40, 0
    %s43 = sadd.s32 %s42, 1
    %s44 = scalar_select %p41, %s42, %s43
    %p47 = pneg %p41
    %p48 = scmp.eq.s32.totalorder %s9, 1
    %p49 = por %p47, %p48
    %p50 = scmp.ne.s32.totalorder %s42, %s45
    %p51 = scmp.eq.s32.totalorder %s9, 0
    %p52 = por %p50, %p51
    %p53 = scmp.ne.s32.totalorder %s42, %s45
    %p54 = scmp.eq.s32.totalorder %s14, 1
    %p55 = por %p53, %p54
    %p56 = scmp.ne.s32.totalorder %s45, %s46
    %p57 = scmp.eq.s32.totalorder %s14, 0
    %p58 = por %p56, %p57
    %p59 = scmp.ne.s32.totalorder %s45, %s46
    %p60 = scmp.eq.s32.totalorder %s15, 1
    %p61 = por %p59, %p60
    %p63 = scmp.ne.s32.totalorder %s46, %s62
    %p64 = scmp.eq.s32.totalorder %s15, 0
    %p65 = por %p63, %p64
    %s66 = sadd.s32 %s17, 1
    %s67 = sadd.s32 %s31, 1
    %s68 = ssub.s32 %s16, %s35
    %s69 = ssub.s32 %s66, %s67
    %s70 = sor.u32 %s68, %s69
    %p71 = scmp.eq.s32.totalorder %s70, 0
    %s73 = sadd.s32 %s72, 1
    %s74 = scalar_select %p71, %s72, %s73
    %p77 = pneg %p71
    %p78 = scmp.eq.s32.totalorder %s9, 1
    %p79 = por %p77, %p78
    %p80 = scmp.ne.s32.totalorder %s72, %s75
    %p81 = scmp.eq.s32.totalorder %s9, 0
    %p82 = por %p80, %p81
    %p83 = scmp.ne.s32.totalorder %s72, %s75
    %p84 = scmp.eq.s32.totalorder %s14, 1
    %p85 = por %p83, %p84
    %p86 = scmp.ne.s32.totalorder %s75, %s76
    %p87 = scmp.eq.s32.totalorder %s14, 0
    %p88 = por %p86, %p87
    %p89 = scmp.ne.s32.totalorder %s75, %s76
    %p90 = scmp.eq.s32.totalorder %s15, 1
    %p91 = por %p89, %p90
    %p93 = scmp.ne.s32.totalorder %s76, %s92
    %p94 = scmp.eq.s32.totalorder %s15, 0
    %p95 = por %p93, %p94
    %s96 = sadd.s32 %s17, 2
    %s97 = sadd.s32 %s31, 2
    %s98 = ssub.s32 %s16, %s35
    %s99 = ssub.s32 %s96, %s97
    %s100 = sor.u32 %s98, %s99
    %p101 = scmp.eq.s32.totalorder %s100, 0
    %s103 = sadd.s32 %s102, 1
    %s104 = scalar_select %p101, %s102, %s103
    %p107 = pneg %p101
    %p108 = scmp.eq.s32.totalorder %s9, 1
    %p109 = por %p107, %p108
    %p110 = scmp.ne.s32.totalorder %s102, %s105
    %p111 = scmp.eq.s32.totalorder %s9, 0
    %p112 = por %p110, %p111
    %p113 = scmp.ne.s32.totalorder %s102, %s105
    %p114 = scmp.eq.s32.totalorder %s14, 1
    %p115 = por %p113, %p114
    %p116 = scmp.ne.s32.totalorder %s105, %s106
    %p117 = scmp.eq.s32.totalorder %s14, 0
    %p118 = por %p116, %p117
    %p119 = scmp.ne.s32.totalorder %s105, %s106
    %p120 = scmp.eq.s32.totalorder %s15, 1
    %p121 = por %p119, %p120
    %p123 = scmp.ne.s32.totalorder %s106, %s122
    %p124 = scmp.eq.s32.totalorder %s15, 0
    %p125 = por %p123, %p124
    %s126 = ssub.s32 %s16, %s35
    %s127 = ssub.s32 %s18, %s27
    %s128 = sor.u32 %s126, %s127
    %s129 = ssub.s32 %s17, %s31
    %s130 = sor.u32 %s128, %s129
    %p131 = scmp.eq.s32.totalorder %s130, 0
    %s133 = sadd.s32 %s132, 1
    %s134 = scalar_select %p131, %s132, %s133
    %p137 = pneg %p131
    %p138 = scmp.eq.s32.totalorder %s9, 1
    %p139 = por %p137, %p138
    %p140 = scmp.ne.s32.totalorder %s132, %s135
    %p141 = scmp.eq.s32.totalorder %s9, 0
    %p142 = por %p140, %p141
    %p143 = scmp.ne.s32.totalorder %s132, %s135
    %p144 = scmp.eq.s32.totalorder %s14, 1
    %p145 = por %p143, %p144
    %p146 = scmp.ne.s32.totalorder %s135, %s136
    %p147 = scmp.eq.s32.totalorder %s14, 0
    %p148 = por %p146, %p147
    %p149 = scmp.ne.s32.totalorder %s135, %s136
    %p150 = scmp.eq.s32.totalorder %s15, 1
    %p151 = por %p149, %p150
    %p153 = scmp.ne.s32.totalorder %s136, %s152
    %p154 = scmp.eq.s32.totalorder %s15, 0
    %p155 = por %p153, %p154
    %p156 = scmp.le.s32.totalorder 1, %s9
    %p157 = scmp.lt.s32.totalorder %s9, 3
    %p158 = pnand %p156, %p157
    %p159 = pneg %p158
    // Predicated region
    $region9: #{encoder_wrapper_forward.33} parent=5 // pred_check
      _
    $region10: #{encoder_wrapper_forward.33} parent=5 // pred_check_branch
      %161 = sbr.rel (%p158) target = $region12
    $region11: #{encoder_wrapper_forward.33} parent=5 // pred_region
      %s162 = ssub.s32 %s9, 1
    $region12: #{encoder_wrapper_forward.33} parent=5 // pred_fallthru
      _
    %p163 = scmp.lt.s32.totalorder %s9, 2
    // Predicated region
    $region13: #{encoder_wrapper_forward.33} parent=5 // pred_check
      %p164 = pneg %p163
    $region14: #{encoder_wrapper_forward.33} parent=5 // pred_check_branch
      %166 = sbr.rel (%p164) target = $region16
    $region15: #{encoder_wrapper_forward.33} parent=5 // pred_region
      // Predicated region
      $region17: #{encoder_wrapper_forward.33} parent=15 // pred_check
        %p167 = pneg %p52
      $region18: #{encoder_wrapper_forward.33} parent=15 // pred_check_branch
        %169 = sbr.rel (%p167) target = $region20
      $region19: #{encoder_wrapper_forward.33} parent=15 // pred_region
        %p170 = scmp.lt.s32.totalorder %s16, 1
        %s171 = scalar_select %p170, %s16, 1
        %p172 = scmp.lt.s32.totalorder %s18, 0
        %s173 = scalar_select %p172, %s18, 0
        %p174 = scmp.lt.s32.totalorder %s17, 2
        %s175 = scalar_select %p174, %s17, 2
        %s176 = smul.addr %s173, 3
        %s177 = sadd.s32 %s175, %s176
        %s178 = smul.addr %s171, 3
        %s179 = sadd.s32 %s177, %s178
        %s180 = smul.addr %s179, 4
        %s181 = scalar_lea.vmem %s0, %s180
      $region20: #{encoder_wrapper_forward.33} parent=15 // pred_fallthru
        _
      // Predicated region
      $region21: #{encoder_wrapper_forward.33} parent=15 // pred_check
        %p182 = pneg %p82
      $region22: #{encoder_wrapper_forward.33} parent=15 // pred_check_branch
        %184 = sbr.rel (%p182) target = $region24
      $region23: #{encoder_wrapper_forward.33} parent=15 // pred_region
        %s185 = sadd.s32 %s17, 1
        %p186 = scmp.lt.s32.totalorder %s16, 1
        %s187 = scalar_select %p186, %s16, 1
        %p188 = scmp.lt.s32.totalorder %s185, 2
        %s189 = scalar_select %p188, %s185, 2
        %s190 = smul.addr %s187, 3
        %s191 = sadd.s32 %s189, %s190
        %s192 = smul.addr %s191, 4
        %s193 = scalar_lea.vmem %s1, %s192
        %s194 = sadd.s32 %s17, 1
      $region24: #{encoder_wrapper_forward.33} parent=15 // pred_fallthru
        _
      // Predicated region
      $region25: #{encoder_wrapper_forward.33} parent=15 // pred_check
        %p195 = pneg %p112
      $region26: #{encoder_wrapper_forward.33} parent=15 // pred_check_branch
        %197 = sbr.rel (%p195) target = $region28
      $region27: #{encoder_wrapper_forward.33} parent=15 // pred_region
        %s198 = sadd.s32 %s17, 2
        %p199 = scmp.lt.s32.totalorder %s16, 1
        %s200 = scalar_select %p199, %s16, 1
        %p201 = scmp.lt.s32.totalorder %s198, 2
        %s202 = scalar_select %p201, %s198, 2
        %s203 = smul.addr %s200, 3
        %s204 = sadd.s32 %s202, %s203
        %s205 = smul.addr %s204, 4
        %s206 = scalar_lea.vmem %s2, %s205
        %s207 = sadd.s32 %s17, 2
      $region28: #{encoder_wrapper_forward.33} parent=15 // pred_fallthru
        _
    $region16: #{encoder_wrapper_forward.33} parent=5 // pred_fallthru
      _
    %p208 = scmp.le.s32.totalorder 1, %s9
    %p209 = scmp.lt.s32.totalorder %s9, 3
    %p210 = pnand %p208, %p209
    %p211 = pneg %p210
    // Predicated region
    $region29: #{encoder_wrapper_forward.33} parent=5 // pred_check
      _
    $region30: #{encoder_wrapper_forward.33} parent=5 // pred_check_branch
      %213 = sbr.rel (%p210) target = $region32
    $region31: #{encoder_wrapper_forward.33} parent=5 // pred_region
      %s214 = ssub.s32 %s9, 1
      %p215 = scmp.lt.s32.totalorder %s19, 1
      %s216 = scalar_select %p215, %s19, 1
      %p217 = scmp.lt.s32.totalorder %s21, 0
      %s218 = scalar_select %p217, %s21, 0
      %p219 = scmp.lt.s32.totalorder %s20, 2
      %s220 = scalar_select %p219, %s20, 2
      %s221 = smul.addr %s218, 3
      %s222 = sadd.s32 %s220, %s221
      %s223 = smul.addr %s216, 3
      %s224 = sadd.s32 %s222, %s223
      %s225 = smul.addr %s224, 4
      %s226 = scalar_lea.vmem %s0, %s225
      %p227 = pneg %p58
      %p228 = pneg %p55
      %s229 = sadd.s32 %s20, 1
      %p230 = scmp.lt.s32.totalorder %s19, 1
      %s231 = scalar_select %p230, %s19, 1
      %p232 = scmp.lt.s32.totalorder %s229, 2
      %s233 = scalar_select %p232, %s229, 2
      %s234 = smul.addr %s231, 3
      %s235 = sadd.s32 %s233, %s234
      %s236 = smul.addr %s235, 4
      %s237 = scalar_lea.vmem %s1, %s236
      %p238 = pneg %p88
      %p239 = pneg %p85
      %s240 = sadd.s32 %s20, 2
      %p241 = scmp.lt.s32.totalorder %s19, 1
      %s242 = scalar_select %p241, %s19, 1
      %p243 = scmp.lt.s32.totalorder %s240, 2
      %s244 = scalar_select %p243, %s240, 2
      %s245 = smul.addr %s242, 3
      %s246 = sadd.s32 %s244, %s245
      %s247 = smul.addr %s246, 4
      %s248 = scalar_lea.vmem %s2, %s247
      %p249 = pneg %p118
      %p250 = pneg %p115
      %p251 = pneg %p148
      %p252 = pneg %p145
      %p253 = scmp.lt.s32.totalorder %s19, 1
      %s254 = scalar_select %p253, %s19, 1
      %p255 = scmp.lt.s32.totalorder %s21, 0
      %s256 = scalar_select %p255, %s21, 0
      %p257 = scmp.lt.s32.totalorder %s20, 0
      %s258 = scalar_select %p257, %s20, 0
      %s259 = sadd.s32 %s258, %s256
      %s260 = sadd.s32 %s259, %s254
      %s261 = smul.addr %s260, 4
      %s262 = scalar_lea.vmem %s3, %s261
      %p263 = scmp.lt.s32.totalorder %s19, 1
      %s264 = scalar_select %p263, %s19, 1
      %p265 = scmp.lt.s32.totalorder %s21, 0
      %s266 = scalar_select %p265, %s21, 0
      %p267 = scmp.lt.s32.totalorder %s20, 2
      %s268 = scalar_select %p267, %s20, 2
      %s269 = smul.addr %s266, 3
      %s270 = sadd.s32 %s268, %s269
      %s271 = smul.addr %s264, 3
      %s272 = sadd.s32 %s270, %s271
      %s273 = smul.addr %s272, 4
      %s274 = scalar_lea.vmem %s0, %s273
      %s275 = sadd.s32 %s20, 1
      %p276 = scmp.lt.s32.totalorder %s19, 1
      %s277 = scalar_select %p276, %s19, 1
      %p278 = scmp.lt.s32.totalorder %s275, 2
      %s279 = scalar_select %p278, %s275, 2
      %s280 = smul.addr %s277, 3
      %s281 = sadd.s32 %s279, %s280
      %s282 = smul.addr %s281, 4
      %s283 = scalar_lea.vmem %s1, %s282
      %s284 = sadd.s32 %s20, 1
      %s285 = sadd.s32 %s20, 2
      %p286 = scmp.lt.s32.totalorder %s19, 1
      %s287 = scalar_select %p286, %s19, 1
      %p288 = scmp.lt.s32.totalorder %s285, 2
      %s289 = scalar_select %p288, %s285, 2
      %s290 = smul.addr %s287, 3
      %s291 = sadd.s32 %s289, %s290
      %s292 = smul.addr %s291, 4
      %s293 = scalar_lea.vmem %s2, %s292
      %s294 = sadd.s32 %s20, 2
      %p295 = scmp.lt.s32.totalorder %s19, 1
      %s296 = scalar_select %p295, %s19, 1
      %p297 = scmp.lt.s32.totalorder %s21, 0
      %s298 = scalar_select %p297, %s21, 0
      %p299 = scmp.lt.s32.totalorder %s20, 0
      %s300 = scalar_select %p299, %s20, 0
      %s301 = sadd.s32 %s300, %s298
      %s302 = sadd.s32 %s301, %s296
      %s303 = smul.addr %s302, 4
      %s304 = scalar_lea.vmem %s3, %s303
      %v306 = vld [vmem:[%s274] sm:$0xf]
      %v307 = vld [vmem:[%s283] sm:$0xf]
      %v308 = vld [vmem:[%s293] sm:$0xf]
      %vm309 = vcmask 261120
      %v311 = vsel %vm309, %v306, 0
      %v314 = vsel %vm309, %v307, 0
      %316 = vmatprep.subr.bf16.mxu0 0
      %317 = vmatpush1.bf16.xpose.msra.mxu0 0
      %318 = vmatprep.subr.bf16.mxu0 0
      %319 = vmatpush1.bf16.xpose.msra.mxu0 0
      %320 = vmatprep.subr.bf16.mxu0 0
      %321 = vmatpush1.bf16.xpose.msra.mxu0 0
      %322 = vmatprep.subr.bf16.mxu0 0
      %323 = vmatpush1.bf16.xpose.msra.mxu0 0
      %324 = vmatprep.subr.bf16.mxu0 0
      %325 = vmatpush1.bf16.xpose.msra.mxu0 0
      %326 = vmatprep.subr.bf16.mxu0 0
      %327 = vmatpush1.bf16.xpose.msra.mxu0 0
      %328 = vmatprep.subr.bf16.mxu0 0
      %329 = vmatpush1.bf16.xpose.msra.mxu0 0
      %330 = vmatprep.subr.bf16.mxu0 0
      %331 = vmatpush1.bf16.xpose.msra.mxu0 %v314
      %332 = vmatprep.subr.bf16.mxu0 0
      %333 = vmatpush2.bf16.xpose.msra.mxu0 0
      %334 = vmatprep.subr.bf16.mxu0 0
      %335 = vmatpush2.bf16.xpose.msra.mxu0 0
      %336 = vmatprep.subr.bf16.mxu0 0
      %337 = vmatpush2.bf16.xpose.msra.mxu0 0
      %338 = vmatprep.subr.bf16.mxu0 0
      %339 = vmatpush2.bf16.xpose.msra.mxu0 0
      %340 = vmatprep.subr.bf16.mxu0 0
      %341 = vmatpush2.bf16.xpose.msra.mxu0 0
      %342 = vmatprep.subr.bf16.mxu0 0
      %343 = vmatpush2.bf16.xpose.msra.mxu0 0
      %344 = vmatprep.subr.bf16.mxu0 0
      %345 = vmatpush2.bf16.xpose.msra.mxu0 0
      %346 = vmatprep.subr.bf16.mxu0 0
      %347 = vmatpush2.bf16.xpose.msra.mxu0 0
      %348 = vmatprep.mubr.bf16.mxu0 0
      %349 = vmatmul.mubr.bf16.gmra.mxu0 %v311
      %v350 = vpop.f32.mrf.mxu0
      %v351 = vadd.f32 0.0, %v350
      %v352 = vpop.f32.mrf.mxu0
      %v353 = vpop.f32.mrf.mxu0
      %v354 = vpop.f32.mrf.mxu0
      %355 = vdwg.mxu0
      %v356 = vmul.f32 %v351, 0.17677669
      %vm357 = vcmask 64512
      %v358 = vsel %vm357, %v356, -inf
      %359 = vmax.xlane.f32.xlu0 %v358
      %v360 = vpop.xlane.xlu0 %359
      %v361 = vsub.f32 %v356, %v360
      %v362 = vmul.f32 %v361, 1.442695
      %v363 = vpow.pop %v362
      %v364 = vsel %vm357, %v363, 0.0
      %365 = vadd.xlane.f32.xlu0 %v364
      %v366 = vpop.xlane.xlu0 %365
      %v367 = vrcp.pop %v366
      %v368 = vmul.f32 %v363, %v367
      %v369 = vpack.c.bf16 %v368, %v368
      %v371 = vsel %vm357, %v369, 0
      %vm373 = vcmask 1043456
      %v375 = vsel %vm373, %v308, 0
      %377 = vmatprep.subr.bf16.mxu0 0
      %378 = vmatpush1.bf16.msra.mxu0 0
      %379 = vmatprep.subr.bf16.mxu0 0
      %380 = vmatpush1.bf16.msra.mxu0 0
      %381 = vmatprep.subr.bf16.mxu0 0
      %382 = vmatpush1.bf16.msra.mxu0 0
      %383 = vmatprep.subr.bf16.mxu0 0
      %384 = vmatpush1.bf16.msra.mxu0 0
      %385 = vmatprep.subr.bf16.mxu0 0
      %386 = vmatpush1.bf16.msra.mxu0 0
      %387 = vmatprep.subr.bf16.mxu0 0
      %388 = vmatpush1.bf16.msra.mxu0 0
      %389 = vmatprep.subr.bf16.mxu0 0
      %390 = vmatpush1.bf16.msra.mxu0 0
      %391 = vmatprep.subr.bf16.mxu0 0
      %392 = vmatpush1.bf16.msra.mxu0 %v375
      %393 = vmatprep.subr.bf16.mxu0 0
      %394 = vmatpush2.bf16.msra.mxu0 0
      %395 = vmatprep.subr.bf16.mxu0 0
      %396 = vmatpush2.bf16.msra.mxu0 0
      %397 = vmatprep.subr.bf16.mxu0 0
      %398 = vmatpush2.bf16.msra.mxu0 0
      %399 = vmatprep.subr.bf16.mxu0 0
      %400 = vmatpush2.bf16.msra.mxu0 0
      %401 = vmatprep.subr.bf16.mxu0 0
      %402 = vmatpush2.bf16.msra.mxu0 0
      %403 = vmatprep.subr.bf16.mxu0 0
      %404 = vmatpush2.bf16.msra.mxu0 0
      %405 = vmatprep.subr.bf16.mxu0 0
      %406 = vmatpush2.bf16.msra.mxu0 0
      %407 = vmatprep.subr.bf16.mxu0 0
      %408 = vmatpush2.bf16.msra.mxu0 0
      %409 = vmatprep.mubr.bf16.mxu0 0
      %410 = vmatmul.mubr.bf16.gmra.mxu0 %v371
      %v411 = vpop.f32.mrf.mxu0
      %v412 = vadd.f32 0.0, %v411
      %v413 = vpop.f32.mrf.mxu0
      %v414 = vpop.f32.mrf.mxu0
      %v415 = vpop.f32.mrf.mxu0
      %416 = vdwg.mxu0
      %v417 = vpack.c.bf16 %v412, %v412
      %vm418 = vcmask 257024
      %419 = vst.msk [vmem:[%s304] sm:$0xf] %vm418, %v417
      %v421 = vunpack.c.l.b16 %v306
      %v422 = vpack.c.b16 %v421, %v421
      %423 = vrot.lane.b32.xlu0 %v422, 96
      %v424 = vpop.permute.xlu0 %423
      %v426 = vunpack.c.l.b16 %v307
      %v427 = vpack.c.b16 %v426, %v426
      %428 = vrot.lane.b32.xlu0 %v427, 96
      %v429 = vpop.permute.xlu0 %428
      %v431 = vsel %vm309, %v424, 0
      %v434 = vsel %vm309, %v429, 0
      %436 = vmatprep.subr.bf16.mxu0 0
      %437 = vmatpush1.bf16.xpose.msra.mxu0 0
      %438 = vmatprep.subr.bf16.mxu0 0
      %439 = vmatpush1.bf16.xpose.msra.mxu0 0
      %440 = vmatprep.subr.bf16.mxu0 0
      %441 = vmatpush1.bf16.xpose.msra.mxu0 0
      %442 = vmatprep.subr.bf16.mxu0 0
      %443 = vmatpush1.bf16.xpose.msra.mxu0 0
      %444 = vmatprep.subr.bf16.mxu0 0
      %445 = vmatpush1.bf16.xpose.msra.mxu0 0
      %446 = vmatprep.subr.bf16.mxu0 0
      %447 = vmatpush1.bf16.xpose.msra.mxu0 0
      %448 = vmatprep.subr.bf16.mxu0 0
      %449 = vmatpush1.bf16.xpose.msra.mxu0 0
      %450 = vmatprep.subr.bf16.mxu0 0
      %451 = vmatpush1.bf16.xpose.msra.mxu0 %v434
      %452 = vmatprep.subr.bf16.mxu0 0
      %453 = vmatpush2.bf16.xpose.msra.mxu0 0
      %454 = vmatprep.subr.bf16.mxu0 0
      %455 = vmatpush2.bf16.xpose.msra.mxu0 0
      %456 = vmatprep.subr.bf16.mxu0 0
      %457 = vmatpush2.bf16.xpose.msra.mxu0 0
      %458 = vmatprep.subr.bf16.mxu0 0
      %459 = vmatpush2.bf16.xpose.msra.mxu0 0
      %460 = vmatprep.subr.bf16.mxu0 0
      %461 = vmatpush2.bf16.xpose.msra.mxu0 0
      %462 = vmatprep.subr.bf16.mxu0 0
      %463 = vmatpush2.bf16.xpose.msra.mxu0 0
      %464 = vmatprep.subr.bf16.mxu0 0
      %465 = vmatpush2.bf16.xpose.msra.mxu0 0
      %466 = vmatprep.subr.bf16.mxu0 0
      %467 = vmatpush2.bf16.xpose.msra.mxu0 0
      %468 = vmatprep.mubr.bf16.mxu0 0
      %469 = vmatmul.mubr.bf16.gmra.mxu0 %v431
      %v470 = vpop.f32.mrf.mxu0
      %v471 = vadd.f32 0.0, %v470
      %v472 = vpop.f32.mrf.mxu0
      %v473 = vpop.f32.mrf.mxu0
      %v474 = vpop.f32.mrf.mxu0
      %475 = vdwg.mxu0
      %v476 = vmul.f32 %v471, 0.17677669
      %v477 = vsel %vm357, %v476, -inf
      %478 = vmax.xlane.f32.xlu0 %v477
      %v479 = vpop.xlane.xlu0 %478
      %v480 = vsub.f32 %v476, %v479
      %v481 = vmul.f32 %v480, 1.442695
      %v482 = vpow.pop %v481
      %v483 = vsel %vm357, %v482, 0.0
      %484 = vadd.xlane.f32.xlu0 %v483
      %v485 = vpop.xlane.xlu0 %484
      %v486 = vrcp.pop %v485
      %v487 = vmul.f32 %v482, %v486
      %v488 = vpack.c.bf16 %v487, %v487
      %v490 = vunpack.c.l.b16 %v308
      %v491 = vpack.c.b16 %v490, %v490
      %492 = vrot.lane.b32.xlu0 %v491, 96
      %v493 = vpop.permute.xlu0 %492
      %v495 = vsel %vm357, %v488, 0
      %v498 = vsel %vm373, %v493, 0
      %500 = vmatprep.subr.bf16.mxu0 0
      %501 = vmatpush1.bf16.msra.mxu0 0
      %502 = vmatprep.subr.bf16.mxu0 0
      %503 = vmatpush1.bf16.msra.mxu0 0
      %504 = vmatprep.subr.bf16.mxu0 0
      %505 = vmatpush1.bf16.msra.mxu0 0
      %506 = vmatprep.subr.bf16.mxu0 0
      %507 = vmatpush1.bf16.msra.mxu0 0
      %508 = vmatprep.subr.bf16.mxu0 0
      %509 = vmatpush1.bf16.msra.mxu0 0
      %510 = vmatprep.subr.bf16.mxu0 0
      %511 = vmatpush1.bf16.msra.mxu0 0
      %512 = vmatprep.subr.bf16.mxu0 0
      %513 = vmatpush1.bf16.msra.mxu0 0
      %514 = vmatprep.subr.bf16.mxu0 0
      %515 = vmatpush1.bf16.msra.mxu0 %v498
      %516 = vmatprep.subr.bf16.mxu0 0
      %517 = vmatpush2.bf16.msra.mxu0 0
      %518 = vmatprep.subr.bf16.mxu0 0
      %519 = vmatpush2.bf16.msra.mxu0 0
      %520 = vmatprep.subr.bf16.mxu0 0
      %521 = vmatpush2.bf16.msra.mxu0 0
      %522 = vmatprep.subr.bf16.mxu0 0
      %523 = vmatpush2.bf16.msra.mxu0 0
      %524 = vmatprep.subr.bf16.mxu0 0
      %525 = vmatpush2.bf16.msra.mxu0 0
      %526 = vmatprep.subr.bf16.mxu0 0
      %527 = vmatpush2.bf16.msra.mxu0 0
      %528 = vmatprep.subr.bf16.mxu0 0
      %529 = vmatpush2.bf16.msra.mxu0 0
      %530 = vmatprep.subr.bf16.mxu0 0
      %531 = vmatpush2.bf16.msra.mxu0 0
      %532 = vmatprep.mubr.bf16.mxu0 0
      %533 = vmatmul.mubr.bf16.gmra.mxu0 %v495
      %v534 = vpop.f32.mrf.mxu0
      %v535 = vadd.f32 0.0, %v534
      %v536 = vpop.f32.mrf.mxu0
      %v537 = vpop.f32.mrf.mxu0
      %v538 = vpop.f32.mrf.mxu0
      %539 = vdwg.mxu0
      %v540 = vpack.c.bf16 %v535, %v535
      %v542 = vunpack.c.l.b16 %v540
      %v543 = vpack.c.b16 %v542, %v542
      %544 = vrot.lane.b32.xlu0 %v543, 32
      %v545 = vpop.permute.xlu0 %544
      %vm547 = vcmask 519424
      %548 = vst.msk [vmem:[%s304] sm:$0xf] %vm547, %v545
      %549 = vrot.lane.b32.xlu0 %v422, 64
      %v550 = vpop.permute.xlu0 %549
      %551 = vrot.lane.b32.xlu0 %v427, 64
      %v552 = vpop.permute.xlu0 %551
      %v554 = vsel %vm309, %v550, 0
      %v557 = vsel %vm309, %v552, 0
      %559 = vmatprep.subr.bf16.mxu0 0
      %560 = vmatpush1.bf16.xpose.msra.mxu0 0
      %561 = vmatprep.subr.bf16.mxu0 0
      %562 = vmatpush1.bf16.xpose.msra.mxu0 0
      %563 = vmatprep.subr.bf16.mxu0 0
      %564 = vmatpush1.bf16.xpose.msra.mxu0 0
      %565 = vmatprep.subr.bf16.mxu0 0
      %566 = vmatpush1.bf16.xpose.msra.mxu0 0
      %567 = vmatprep.subr.bf16.mxu0 0
      %568 = vmatpush1.bf16.xpose.msra.mxu0 0
      %569 = vmatprep.subr.bf16.mxu0 0
      %570 = vmatpush1.bf16.xpose.msra.mxu0 0
      %571 = vmatprep.subr.bf16.mxu0 0
      %572 = vmatpush1.bf16.xpose.msra.mxu0 0
      %573 = vmatprep.subr.bf16.mxu0 0
      %574 = vmatpush1.bf16.xpose.msra.mxu0 %v557
      %575 = vmatprep.subr.bf16.mxu0 0
      %576 = vmatpush2.bf16.xpose.msra.mxu0 0
      %577 = vmatprep.subr.bf16.mxu0 0
      %578 = vmatpush2.bf16.xpose.msra.mxu0 0
      %579 = vmatprep.subr.bf16.mxu0 0
      %580 = vmatpush2.bf16.xpose.msra.mxu0 0
      %581 = vmatprep.subr.bf16.mxu0 0
      %582 = vmatpush2.bf16.xpose.msra.mxu0 0
      %583 = vmatprep.subr.bf16.mxu0 0
      %584 = vmatpush2.bf16.xpose.msra.mxu0 0
      %585 = vmatprep.subr.bf16.mxu0 0
      %586 = vmatpush2.bf16.xpose.msra.mxu0 0
      %587 = vmatprep.subr.bf16.mxu0 0
      %588 = vmatpush2.bf16.xpose.msra.mxu0 0
      %589 = vmatprep.subr.bf16.mxu0 0
      %590 = vmatpush2.bf16.xpose.msra.mxu0 0
      %591 = vmatprep.mubr.bf16.mxu0 0
      %592 = vmatmul.mubr.bf16.gmra.mxu0 %v554
      %v593 = vpop.f32.mrf.mxu0
      %v594 = vadd.f32 0.0, %v593
      %v595 = vpop.f32.mrf.mxu0
      %v596 = vpop.f32.mrf.mxu0
      %v597 = vpop.f32.mrf.mxu0
      %598 = vdwg.mxu0
      %v599 = vmul.f32 %v594, 0.17677669
      %v600 = vsel %vm357, %v599, -inf
      %601 = vmax.xlane.f32.xlu0 %v600
      %v602 = vpop.xlane.xlu0 %601
      %v603 = vsub.f32 %v599, %v602
      %v604 = vmul.f32 %v603, 1.442695
      %v605 = vpow.pop %v604
      %v606 = vsel %vm357, %v605, 0.0
      %607 = vadd.xlane.f32.xlu0 %v606
      %v608 = vpop.xlane.xlu0 %607
      %v609 = vrcp.pop %v608
      %v610 = vmul.f32 %v605, %v609
      %v611 = vpack.c.bf16 %v610, %v610
      %612 = vrot.lane.b32.xlu0 %v491, 64
      %v613 = vpop.permute.xlu0 %612
      %v615 = vsel %vm357, %v611, 0
      %v618 = vsel %vm373, %v613, 0
      %620 = vmatprep.subr.bf16.mxu0 0
      %621 = vmatpush1.bf16.msra.mxu0 0
      %622 = vmatprep.subr.bf16.mxu0 0
      %623 = vmatpush1.bf16.msra.mxu0 0
      %624 = vmatprep.subr.bf16.mxu0 0
      %625 = vmatpush1.bf16.msra.mxu0 0
      %626 = vmatprep.subr.bf16.mxu0 0
      %627 = vmatpush1.bf16.msra.mxu0 0
      %628 = vmatprep.subr.bf16.mxu0 0
      %629 = vmatpush1.bf16.msra.mxu0 0
      %630 = vmatprep.subr.bf16.mxu0 0
      %631 = vmatpush1.bf16.msra.mxu0 0
      %632 = vmatprep.subr.bf16.mxu0 0
      %633 = vmatpush1.bf16.msra.mxu0 0
      %634 = vmatprep.subr.bf16.mxu0 0
      %635 = vmatpush1.bf16.msra.mxu0 %v618
      %636 = vmatprep.subr.bf16.mxu0 0
      %637 = vmatpush2.bf16.msra.mxu0 0
      %638 = vmatprep.subr.bf16.mxu0 0
      %639 = vmatpush2.bf16.msra.mxu0 0
      %640 = vmatprep.subr.bf16.mxu0 0
      %641 = vmatpush2.bf16.msra.mxu0 0
      %642 = vmatprep.subr.bf16.mxu0 0
      %643 = vmatpush2.bf16.msra.mxu0 0
      %644 = vmatprep.subr.bf16.mxu0 0
      %645 = vmatpush2.bf16.msra.mxu0 0
      %646 = vmatprep.subr.bf16.mxu0 0
      %647 = vmatpush2.bf16.msra.mxu0 0
      %648 = vmatprep.subr.bf16.mxu0 0
      %649 = vmatpush2.bf16.msra.mxu0 0
      %650 = vmatprep.subr.bf16.mxu0 0
      %651 = vmatpush2.bf16.msra.mxu0 0
      %652 = vmatprep.mubr.bf16.mxu0 0
      %653 = vmatmul.mubr.bf16.gmra.mxu0 %v615
      %v654 = vpop.f32.mrf.mxu0
      %v655 = vadd.f32 0.0, %v654
      %v656 = vpop.f32.mrf.mxu0
      %v657 = vpop.f32.mrf.mxu0
      %v658 = vpop.f32.mrf.mxu0
      %659 = vdwg.mxu0
      %v660 = vpack.c.bf16 %v655, %v655
      %v662 = vunpack.c.l.b16 %v660
      %v663 = vpack.c.b16 %v662, %v662
      %664 = vrot.lane.b32.xlu0 %v663, 64
      %v665 = vpop.permute.xlu0 %664
      %vm667 = vcmask 781824
      %668 = vst.msk [vmem:[%s304] sm:$0xf] %vm667, %v665
      %669 = vrot.lane.b32.xlu0 %v422, 32
      %v670 = vpop.permute.xlu0 %669
      %671 = vrot.lane.b32.xlu0 %v427, 32
      %v672 = vpop.permute.xlu0 %671
      %v674 = vsel %vm309, %v670, 0
      %v677 = vsel %vm309, %v672, 0
      %679 = vmatprep.subr.bf16.mxu0 0
      %680 = vmatpush1.bf16.xpose.msra.mxu0 0
      %681 = vmatprep.subr.bf16.mxu0 0
      %682 = vmatpush1.bf16.xpose.msra.mxu0 0
      %683 = vmatprep.subr.bf16.mxu0 0
      %684 = vmatpush1.bf16.xpose.msra.mxu0 0
      %685 = vmatprep.subr.bf16.mxu0 0
      %686 = vmatpush1.bf16.xpose.msra.mxu0 0
      %687 = vmatprep.subr.bf16.mxu0 0
      %688 = vmatpush1.bf16.xpose.msra.mxu0 0
      %689 = vmatprep.subr.bf16.mxu0 0
      %690 = vmatpush1.bf16.xpose.msra.mxu0 0
      %691 = vmatprep.subr.bf16.mxu0 0
      %692 = vmatpush1.bf16.xpose.msra.mxu0 0
      %693 = vmatprep.subr.bf16.mxu0 0
      %694 = vmatpush1.bf16.xpose.msra.mxu0 %v677
      %695 = vmatprep.subr.bf16.mxu0 0
      %696 = vmatpush2.bf16.xpose.msra.mxu0 0
      %697 = vmatprep.subr.bf16.mxu0 0
      %698 = vmatpush2.bf16.xpose.msra.mxu0 0
      %699 = vmatprep.subr.bf16.mxu0 0
      %700 = vmatpush2.bf16.xpose.msra.mxu0 0
      %701 = vmatprep.subr.bf16.mxu0 0
      %702 = vmatpush2.bf16.xpose.msra.mxu0 0
      %703 = vmatprep.subr.bf16.mxu0 0
      %704 = vmatpush2.bf16.xpose.msra.mxu0 0
      %705 = vmatprep.subr.bf16.mxu0 0
      %706 = vmatpush2.bf16.xpose.msra.mxu0 0
      %707 = vmatprep.subr.bf16.mxu0 0
      %708 = vmatpush2.bf16.xpose.msra.mxu0 0
      %709 = vmatprep.subr.bf16.mxu0 0
      %710 = vmatpush2.bf16.xpose.msra.mxu0 0
      %711 = vmatprep.mubr.bf16.mxu0 0
      %712 = vmatmul.mubr.bf16.gmra.mxu0 %v674
      %v713 = vpop.f32.mrf.mxu0
      %v714 = vadd.f32 0.0, %v713
      %v715 = vpop.f32.mrf.mxu0
      %v716 = vpop.f32.mrf.mxu0
      %v717 = vpop.f32.mrf.mxu0
      %718 = vdwg.mxu0
      %v719 = vmul.f32 %v714, 0.17677669
      %v720 = vsel %vm357, %v719, -inf
      %721 = vmax.xlane.f32.xlu0 %v720
      %v722 = vpop.xlane.xlu0 %721
      %v723 = vsub.f32 %v719, %v722
      %v724 = vmul.f32 %v723, 1.442695
      %v725 = vpow.pop %v724
      %v726 = vsel %vm357, %v725, 0.0
      %727 = vadd.xlane.f32.xlu0 %v726
      %v728 = vpop.xlane.xlu0 %727
      %v729 = vrcp.pop %v728
      %v730 = vmul.f32 %v725, %v729
      %v731 = vpack.c.bf16 %v730, %v730
      %732 = vrot.lane.b32.xlu0 %v491, 32
      %v733 = vpop.permute.xlu0 %732
      %v735 = vsel %vm357, %v731, 0
      %v738 = vsel %vm373, %v733, 0
      %740 = vmatprep.subr.bf16.mxu0 0
      %741 = vmatpush1.bf16.msra.mxu0 0
      %742 = vmatprep.subr.bf16.mxu0 0
      %743 = vmatpush1.bf16.msra.mxu0 0
      %744 = vmatprep.subr.bf16.mxu0 0
      %745 = vmatpush1.bf16.msra.mxu0 0
      %746 = vmatprep.subr.bf16.mxu0 0
      %747 = vmatpush1.bf16.msra.mxu0 0
      %748 = vmatprep.subr.bf16.mxu0 0
      %749 = vmatpush1.bf16.msra.mxu0 0
      %750 = vmatprep.subr.bf16.mxu0 0
      %751 = vmatpush1.bf16.msra.mxu0 0
      %752 = vmatprep.subr.bf16.mxu0 0
      %753 = vmatpush1.bf16.msra.mxu0 0
      %754 = vmatprep.subr.bf16.mxu0 0
      %755 = vmatpush1.bf16.msra.mxu0 %v738
      %756 = vmatprep.subr.bf16.mxu0 0
      %757 = vmatpush2.bf16.msra.mxu0 0
      %758 = vmatprep.subr.bf16.mxu0 0
      %759 = vmatpush2.bf16.msra.mxu0 0
      %760 = vmatprep.subr.bf16.mxu0 0
      %761 = vmatpush2.bf16.msra.mxu0 0
      %762 = vmatprep.subr.bf16.mxu0 0
      %763 = vmatpush2.bf16.msra.mxu0 0
      %764 = vmatprep.subr.bf16.mxu0 0
      %765 = vmatpush2.bf16.msra.mxu0 0
      %766 = vmatprep.subr.bf16.mxu0 0
      %767 = vmatpush2.bf16.msra.mxu0 0
      %768 = vmatprep.subr.bf16.mxu0 0
      %769 = vmatpush2.bf16.msra.mxu0 0
      %770 = vmatprep.subr.bf16.mxu0 0
      %771 = vmatpush2.bf16.msra.mxu0 0
      %772 = vmatprep.mubr.bf16.mxu0 0
      %773 = vmatmul.mubr.bf16.gmra.mxu0 %v735
      %v774 = vpop.f32.mrf.mxu0
      %v775 = vadd.f32 0.0, %v774
      %v776 = vpop.f32.mrf.mxu0
      %v777 = vpop.f32.mrf.mxu0
      %v778 = vpop.f32.mrf.mxu0
      %779 = vdwg.mxu0
      %v780 = vpack.c.bf16 %v775, %v775
      %v782 = vunpack.c.l.b16 %v780
      %v783 = vpack.c.b16 %v782, %v782
      %784 = vrot.lane.b32.xlu0 %v783, 96
      %v785 = vpop.permute.xlu0 %784
      %vm787 = vcmask 1044224
      %788 = vst.msk [vmem:[%s304] sm:$0xf] %vm787, %v785
      %p789 = scmp.lt.s32.totalorder %s19, 1
      %s790 = scalar_select %p789, %s19, 1
      %p791 = scmp.lt.s32.totalorder %s21, 0
      %s792 = scalar_select %p791, %s21, 0
      %p793 = scmp.lt.s32.totalorder %s20, 0
      %s794 = scalar_select %p793, %s20, 0
      %s795 = sadd.s32 %s794, %s792
      %s796 = sadd.s32 %s795, %s790
      %s797 = smul.addr %s796, 4
      %s798 = scalar_lea.vmem %s3, %s797
      // Predicated region
      $region33: #{encoder_wrapper_forward.33} parent=31 // pred_check
        %p799 = pneg %p145
      $region34: #{encoder_wrapper_forward.33} parent=31 // pred_check_branch
        %801 = sbr.rel (%p799) target = $region36
      $region35: #{encoder_wrapper_forward.33} parent=31 // pred_region
        _
      $region36: #{encoder_wrapper_forward.33} parent=31 // pred_fallthru
        _
    $region32: #{encoder_wrapper_forward.33} parent=5 // pred_fallthru
      _
    %p802 = scmp.le.s32.totalorder 2, %s9
    // Predicated region
    $region37: #{encoder_wrapper_forward.33} parent=5 // pred_check
      %p803 = pneg %p802
    $region38: #{encoder_wrapper_forward.33} parent=5 // pred_check_branch
      %805 = sbr.rel (%p803) target = $region40
    $region39: #{encoder_wrapper_forward.33} parent=5 // pred_region
      %s806 = ssub.s32 %s9, 2
      // Predicated region
      $region41: #{encoder_wrapper_forward.33} parent=39 // pred_check
        %p807 = pneg %p151
      $region42: #{encoder_wrapper_forward.33} parent=39 // pred_check_branch
        %809 = sbr.rel (%p807) target = $region44
      $region43: #{encoder_wrapper_forward.33} parent=39 // pred_region
        %p810 = scmp.lt.s32.totalorder %s22, 1
        %s811 = scalar_select %p810, %s22, 1
        %p812 = scmp.lt.s32.totalorder %s24, 0
        %s813 = scalar_select %p812, %s24, 0
        %p814 = scmp.lt.s32.totalorder %s23, 0
        %s815 = scalar_select %p814, %s23, 0
        %s816 = sadd.s32 %s815, %s813
        %s817 = sadd.s32 %s816, %s811
        %s818 = smul.addr %s817, 4
        %s819 = scalar_lea.vmem %s3, %s818
      $region44: #{encoder_wrapper_forward.33} parent=39 // pred_fallthru
        _
    $region40: #{encoder_wrapper_forward.33} parent=5 // pred_fallthru
      _
  $region6: #{encoder_wrapper_forward.33} parent=0 // loop_footer
    %s13 = sadd.s32 1, %s9
  $region7: #{encoder_wrapper_forward.33} parent=0 // loop_footer_branch
    %8 = sbr.rel target = $region3
  $region8: #{encoder_wrapper_forward.33} parent=0 // loop_exit
    _

// kernel: encoder_wrapper_forward.34
$region0: #{encoder_wrapper_forward.34}
  #allocation0 [shape = 'u32[]', space=smem, size = 0x4, offset = 0x4, fixed_abs, tag = 'smem constant byte address 0x4 - core index']
  #allocation1 [shape = 'u32[144,128]{1,0:T(1,128)}', space=vmem, size = 0x12000, scoped, tag = 'internal scratch']
  %s0 = inlined_call_operand.vmem [shape: bf16[16,128], index: 0, kind: input, shape index: {}]
  %s1 = inlined_call_operand.vmem [shape: bf16[128,128], index: 1, kind: input, shape index: {}]
  %s2 = inlined_call_operand.vmem [shape: f32[1,128], index: 2, kind: input, shape index: {}]
  %s3 = inlined_call_operand.vmem [shape: bf16[16,128], index: 3, kind: input, shape index: {}]
  %s4 = inlined_call_operand.vmem [shape: bf16[16,128], index: 4, kind: output, shape index: {}]
  %s5 = sld [smem:[#allocation0]]
  $region26: #{encoder_wrapper_forward.34} parent=0
    _
  %s7 = ssub.s32 1, %s5
  %s8 = scalar_select 0, %s7, %s5
  // Predicated region
  $region2: #{encoder_wrapper_forward.34} parent=0 // pred_check
    _
  $region3: #{encoder_wrapper_forward.34} parent=0 // pred_check_branch
    %10 = sbr.rel (0) target = $region5
  $region4: #{encoder_wrapper_forward.34} parent=0 // pred_region
    _
  $region5: #{encoder_wrapper_forward.34} parent=0 // pred_fallthru
    _
  // Predicated region
  $region6: #{encoder_wrapper_forward.34} parent=0 // pred_check
    _
  $region7: #{encoder_wrapper_forward.34} parent=0 // pred_check_branch
    %12 = sbr.rel (0) target = $region9
  $region8: #{encoder_wrapper_forward.34} parent=0 // pred_region
    _
  $region9: #{encoder_wrapper_forward.34} parent=0 // pred_fallthru
    _
  // Predicated region
  $region10: #{encoder_wrapper_forward.34} parent=0 // pred_check
    _
  $region11: #{encoder_wrapper_forward.34} parent=0 // pred_check_branch
    %14 = sbr.rel (0) target = $region13
  $region12: #{encoder_wrapper_forward.34} parent=0 // pred_region
    _
  $region13: #{encoder_wrapper_forward.34} parent=0 // pred_fallthru
    _
  // Predicated region
  $region14: #{encoder_wrapper_forward.34} parent=0 // pred_check
    _
  $region15: #{encoder_wrapper_forward.34} parent=0 // pred_check_branch
    %16 = sbr.rel (0) target = $region17
  $region16: #{encoder_wrapper_forward.34} parent=0 // pred_region
    _
  $region17: #{encoder_wrapper_forward.34} parent=0 // pred_fallthru
    _
  %v18 = vld [vmem:[%s0] sm:$0xf]
  %v19 = vld [vmem:[%s0 + $0x4] sm:$0xf]
  %v20 = vld [vmem:[%s1] sm:$0xf]
  %v21 = vld [vmem:[%s1 + $0x4] sm:$0xf]
  %v22 = vld [vmem:[%s1 + $0x8] sm:$0xf]
  %v23 = vld [vmem:[%s1 + $0xc] sm:$0xf]
  %v24 = vld [vmem:[%s1 + $0x10] sm:$0xf]
  %v25 = vld [vmem:[%s1 + $0x14] sm:$0xf]
  %v26 = vld [vmem:[%s1 + $0x18] sm:$0xf]
  %v27 = vld [vmem:[%s1 + $0x1c] sm:$0xf]
  %v28 = vld [vmem:[%s1 + $0x20] sm:$0xf]
  %v29 = vld [vmem:[%s1 + $0x24] sm:$0xf]
  %v30 = vld [vmem:[%s1 + $0x28] sm:$0xf]
  %v31 = vld [vmem:[%s1 + $0x2c] sm:$0xf]
  %v32 = vld [vmem:[%s1 + $0x30] sm:$0xf]
  %v33 = vld [vmem:[%s1 + $0x34] sm:$0xf]
  %v34 = vld [vmem:[%s1 + $0x38] sm:$0xf]
  %v35 = vld [vmem:[%s1 + $0x3c] sm:$0xf]
  %v36 = vld [vmem:[%s2] sm:$0x1]
  %v38 = vlaneseq
  %v39 = vshrl.u32 %v38, 7
  %v40 = vsub.s32 0, %v39
  %v41 = vrot.slane %v36, %v40
  %v45 = vunpack.c.l.b16 %v18
  %v46 = vunpack.c.l.b16 %v19
  %v47 = vpack.c.b16 %v46, %v45
  %v65 = vunpack.c.l.b16 %v20
  %v66 = vunpack.c.l.b16 %v21
  %v67 = vunpack.c.l.b16 %v22
  %v68 = vunpack.c.l.b16 %v23
  %v69 = vunpack.c.l.b16 %v24
  %v70 = vunpack.c.l.b16 %v25
  %v71 = vunpack.c.l.b16 %v26
  %v72 = vunpack.c.l.b16 %v27
  %v73 = vunpack.c.l.b16 %v28
  %v74 = vunpack.c.l.b16 %v29
  %v75 = vunpack.c.l.b16 %v30
  %v76 = vunpack.c.l.b16 %v31
  %v77 = vunpack.c.l.b16 %v32
  %v78 = vunpack.c.l.b16 %v33
  %v79 = vunpack.c.l.b16 %v34
  %v80 = vunpack.c.l.b16 %v35
  %v81 = vpack.c.b16 %v66, %v65
  %v82 = vpack.c.b16 %v68, %v67
  %v83 = vpack.c.b16 %v70, %v69
  %v84 = vpack.c.b16 %v72, %v71
  %v85 = vpack.c.b16 %v74, %v73
  %v86 = vpack.c.b16 %v76, %v75
  %v87 = vpack.c.b16 %v78, %v77
  %v88 = vpack.c.b16 %v80, %v79
  %97 = vmatprep.subr.bf16.mxu0 0
  %98 = vmatpush1.bf16.msra.mxu0 %v88
  %99 = vmatprep.subr.bf16.mxu0 0
  %100 = vmatpush1.bf16.msra.mxu0 %v87
  %101 = vmatprep.subr.bf16.mxu0 0
  %102 = vmatpush1.bf16.msra.mxu0 %v86
  %103 = vmatprep.subr.bf16.mxu0 0
  %104 = vmatpush1.bf16.msra.mxu0 %v85
  %105 = vmatprep.subr.bf16.mxu0 0
  %106 = vmatpush1.bf16.msra.mxu0 %v84
  %107 = vmatprep.subr.bf16.mxu0 0
  %108 = vmatpush1.bf16.msra.mxu0 %v83
  %109 = vmatprep.subr.bf16.mxu0 0
  %110 = vmatpush1.bf16.msra.mxu0 %v82
  %111 = vmatprep.subr.bf16.mxu0 0
  %112 = vmatpush1.bf16.msra.mxu0 %v81
  %113 = vmatprep.subr.bf16.mxu0 0
  %114 = vmatpush2.bf16.msra.mxu0 0
  %115 = vmatprep.subr.bf16.mxu0 0
  %116 = vmatpush2.bf16.msra.mxu0 0
  %117 = vmatprep.subr.bf16.mxu0 0
  %118 = vmatpush2.bf16.msra.mxu0 0
  %119 = vmatprep.subr.bf16.mxu0 0
  %120 = vmatpush2.bf16.msra.mxu0 0
  %121 = vmatprep.subr.bf16.mxu0 0
  %122 = vmatpush2.bf16.msra.mxu0 0
  %123 = vmatprep.subr.bf16.mxu0 0
  %124 = vmatpush2.bf16.msra.mxu0 0
  %125 = vmatprep.subr.bf16.mxu0 0
  %126 = vmatpush2.bf16.msra.mxu0 0
  %127 = vmatprep.subr.bf16.mxu0 0
  %128 = vmatpush2.bf16.msra.mxu0 0
  %129 = vmatprep.mubr.bf16.mxu0 0
  %130 = vmatmul.mubr.bf16.gmra.mxu0 %v47
  %v131 = vpop.f32.mrf.mxu0
  %v132 = vadd.f32 %v41, %v131
  %v133 = vpop.f32.mrf.mxu0
  %v134 = vpop.f32.mrf.mxu0
  %v135 = vadd.f32 %v41, %v134
  %v136 = vpop.f32.mrf.mxu0
  %137 = vdwg.mxu0
  %v138 = vld [vmem:[%s3] sm:$0xf]
  %v139 = vld [vmem:[%s3 + $0x4] sm:$0xf]
  %v140 = vunpack.c.l.bf16 %v138
  %v141 = vunpack.c.l.bf16 %v139
  %v142 = vadd.f32 %v132, %v140
  %v143 = vadd.f32 %v135, %v141
  %v144 = vpack.c.bf16 %v143, %v142
  %v146 = vunpack.c.l.b16 %v144
  %v147 = vunpack.c.h.b16 %v144
  %v148 = vpack.c.b16 %v146, %v146
  %v149 = vpack.c.b16 %v147, %v147
  %152 = vst [vmem:[%s4] sm:$0xf] %v148
  %153 = vst [vmem:[%s4 + $0x4] sm:$0xf] %v149
  // Predicated region
  $region18: #{encoder_wrapper_forward.34} parent=0 // pred_check
    _
  $region19: #{encoder_wrapper_forward.34} parent=0 // pred_check_branch
    %155 = sbr.rel (0) target = $region21
  $region20: #{encoder_wrapper_forward.34} parent=0 // pred_region
    _
  $region21: #{encoder_wrapper_forward.34} parent=0 // pred_fallthru
    _
  // Predicated region
  $region22: #{encoder_wrapper_forward.34} parent=0 // pred_check
    _
  $region23: #{encoder_wrapper_forward.34} parent=0 // pred_check_branch
    %157 = sbr.rel (0) target = $region25
  $region24: #{encoder_wrapper_forward.34} parent=0 // pred_region
    _
  $region25: #{encoder_wrapper_forward.34} parent=0 // pred_fallthru
    _

// kernel: encoder_wrapper_forward.35
$region0: #{encoder_wrapper_forward.35}
  #allocation0 [shape = 'u32[]', space=smem, size = 0x4, offset = 0x4, fixed_abs, tag = 'smem constant byte address 0x4 - core index']
  #allocation1 [shape = 'u32[144,128]{1,0:T(1,128)}', space=vmem, size = 0x12000, scoped, tag = 'internal scratch']
  %s0 = inlined_call_operand.vmem [shape: bf16[16,128], index: 0, kind: input, shape index: {}]
  %s1 = inlined_call_operand.vmem [shape: f32[1,128], index: 1, kind: input, shape index: {}]
  %s2 = inlined_call_operand.vmem [shape: f32[1,128], index: 2, kind: input, shape index: {}]
  %s3 = inlined_call_operand.vmem [shape: bf16[128,256], index: 3, kind: input, shape index: {}]
  %s4 = inlined_call_operand.vmem [shape: f32[1,256], index: 4, kind: input, shape index: {}]
  %s5 = inlined_call_operand.vmem [shape: bf16[16,256], index: 5, kind: output, shape index: {}]
  %s6 = sld [smem:[#allocation0]]
  $region30: #{encoder_wrapper_forward.35} parent=0
    _
  %s8 = ssub.s32 1, %s6
  %s9 = scalar_select 0, %s8, %s6
  // Predicated region
  $region2: #{encoder_wrapper_forward.35} parent=0 // pred_check
    _
  $region3: #{encoder_wrapper_forward.35} parent=0 // pred_check_branch
    %11 = sbr.rel (0) target = $region5
  $region4: #{encoder_wrapper_forward.35} parent=0 // pred_region
    _
  $region5: #{encoder_wrapper_forward.35} parent=0 // pred_fallthru
    _
  // Predicated region
  $region6: #{encoder_wrapper_forward.35} parent=0 // pred_check
    _
  $region7: #{encoder_wrapper_forward.35} parent=0 // pred_check_branch
    %13 = sbr.rel (0) target = $region9
  $region8: #{encoder_wrapper_forward.35} parent=0 // pred_region
    _
  $region9: #{encoder_wrapper_forward.35} parent=0 // pred_fallthru
    _
  // Predicated region
  $region10: #{encoder_wrapper_forward.35} parent=0 // pred_check
    _
  $region11: #{encoder_wrapper_forward.35} parent=0 // pred_check_branch
    %15 = sbr.rel (0) target = $region13
  $region12: #{encoder_wrapper_forward.35} parent=0 // pred_region
    _
  $region13: #{encoder_wrapper_forward.35} parent=0 // pred_fallthru
    _
  // Predicated region
  $region14: #{encoder_wrapper_forward.35} parent=0 // pred_check
    _
  $region15: #{encoder_wrapper_forward.35} parent=0 // pred_check_branch
    %17 = sbr.rel (0) target = $region17
  $region16: #{encoder_wrapper_forward.35} parent=0 // pred_region
    _
  $region17: #{encoder_wrapper_forward.35} parent=0 // pred_fallthru
    _
  // Predicated region
  $region18: #{encoder_wrapper_forward.35} parent=0 // pred_check
    _
  $region19: #{encoder_wrapper_forward.35} parent=0 // pred_check_branch
    %19 = sbr.rel (0) target = $region21
  $region20: #{encoder_wrapper_forward.35} parent=0 // pred_region
    _
  $region21: #{encoder_wrapper_forward.35} parent=0 // pred_fallthru
    _
  %v21 = vld [vmem:[%s0] sm:$0xf]
  %v22 = vld [vmem:[%s0 + $0x4] sm:$0xf]
  %v23 = vunpack.c.l.bf16 %v21
  %v24 = vunpack.c.l.bf16 %v22
  %25 = vadd.xlane.f32.xlu0 %v23
  %v26 = vpop.xlane.xlu0 %25
  %27 = vadd.xlane.f32.xlu0 %v24
  %v28 = vpop.xlane.xlu0 %27
  %v29 = vmul.f32 %v23, %v23
  %v30 = vmul.f32 %v24, %v24
  %31 = vadd.xlane.f32.xlu0 %v29
  %v32 = vpop.xlane.xlu0 %31
  %33 = vadd.xlane.f32.xlu0 %v30
  %v34 = vpop.xlane.xlu0 %33
  %v35 = vmul.f32 %v26, 0.0078125
  %v36 = vmul.f32 %v28, 0.0078125
  %v37 = vmul.f32 %v32, 0.0078125
  %v38 = vmul.f32 %v34, 0.0078125
  %v39 = vmul.f32 %v35, %v35
  %v40 = vmul.f32 %v36, %v36
  %v41 = vsub.f32 %v37, %v39
  %v42 = vsub.f32 %v38, %v40
  %v43 = vmax.f32 %v41, 0.0
  %v44 = vmax.f32 %v42, 0.0
  %v45 = vsub.f32 %v23, %v35
  %v46 = vsub.f32 %v24, %v36
  %v47 = vadd.f32 %v43, 1e-06
  %v48 = vadd.f32 %v44, 1e-06
  %v49 = vrsqrt.pop %v47
  %v50 = vrsqrt.pop %v48
  %v51 = vmul.f32 %v45, %v49
  %v52 = vmul.f32 %v46, %v50
  %v53 = vld [vmem:[%s1] sm:$0x1]
  %v55 = vlaneseq
  %v56 = vshrl.u32 %v55, 7
  %v57 = vsub.s32 0, %v56
  %v58 = vrot.slane %v53, %v57
  %v60 = vmul.f32 %v51, %v58
  %v61 = vmul.f32 %v52, %v58
  %v62 = vld [vmem:[%s2] sm:$0x1]
  %v64 = vlaneseq
  %v65 = vshrl.u32 %v64, 7
  %v66 = vsub.s32 0, %v65
  %v67 = vrot.slane %v62, %v66
  %v69 = vadd.f32 %v60, %v67
  %v70 = vadd.f32 %v61, %v67
  %v71 = vpack.c.bf16 %v70, %v69
  %v72 = vld [vmem:[%s3] sm:$0xff]
  %v73 = vld [vmem:[%s3 + $0x8] sm:$0xff]
  %v74 = vld [vmem:[%s3 + $0x10] sm:$0xff]
  %v75 = vld [vmem:[%s3 + $0x18] sm:$0xff]
  %v76 = vld [vmem:[%s3 + $0x20] sm:$0xff]
  %v77 = vld [vmem:[%s3 + $0x28] sm:$0xff]
  %v78 = vld [vmem:[%s3 + $0x30] sm:$0xff]
  %v79 = vld [vmem:[%s3 + $0x38] sm:$0xff]
  %v80 = vld [vmem:[%s3 + $0x40] sm:$0xff]
  %v81 = vld [vmem:[%s3 + $0x48] sm:$0xff]
  %v82 = vld [vmem:[%s3 + $0x50] sm:$0xff]
  %v83 = vld [vmem:[%s3 + $0x58] sm:$0xff]
  %v84 = vld [vmem:[%s3 + $0x60] sm:$0xff]
  %v85 = vld [vmem:[%s3 + $0x68] sm:$0xff]
  %v86 = vld [vmem:[%s3 + $0x70] sm:$0xff]
  %v87 = vld [vmem:[%s3 + $0x78] sm:$0xff]
  %v88 = vld [vmem:[%s4] sm:$0x3]
  %v90 = vlaneseq
  %v91 = vshrl.u32 %v90, 7
  %v92 = vsub.s32 0, %v91
  %v93 = vrot.slane %v88, %v92
  %v94 = vlaneseq
  %v95 = vshrl.u32 %v94, 7
  %v96 = vsub.s32 1, %v95
  %v97 = vrot.slane %v88, %v96
  %v116 = vunpack.c.l.b16 %v72
  %v117 = vunpack.c.h.b16 %v72
  %v118 = vunpack.c.l.b16 %v73
  %v119 = vunpack.c.h.b16 %v73
  %v120 = vunpack.c.l.b16 %v74
  %v121 = vunpack.c.h.b16 %v74
  %v122 = vunpack.c.l.b16 %v75
  %v123 = vunpack.c.h.b16 %v75
  %v124 = vunpack.c.l.b16 %v76
  %v125 = vunpack.c.h.b16 %v76
  %v126 = vunpack.c.l.b16 %v77
  %v127 = vunpack.c.h.b16 %v77
  %v128 = vunpack.c.l.b16 %v78
  %v129 = vunpack.c.h.b16 %v78
  %v130 = vunpack.c.l.b16 %v79
  %v131 = vunpack.c.h.b16 %v79
  %v132 = vunpack.c.l.b16 %v80
  %v133 = vunpack.c.h.b16 %v80
  %v134 = vunpack.c.l.b16 %v81
  %v135 = vunpack.c.h.b16 %v81
  %v136 = vunpack.c.l.b16 %v82
  %v137 = vunpack.c.h.b16 %v82
  %v138 = vunpack.c.l.b16 %v83
  %v139 = vunpack.c.h.b16 %v83
  %v140 = vunpack.c.l.b16 %v84
  %v141 = vunpack.c.h.b16 %v84
  %v142 = vunpack.c.l.b16 %v85
  %v143 = vunpack.c.h.b16 %v85
  %v144 = vunpack.c.l.b16 %v86
  %v145 = vunpack.c.h.b16 %v86
  %v146 = vunpack.c.l.b16 %v87
  %v147 = vunpack.c.h.b16 %v87
  %v148 = vpack.c.b16 %v118, %v116
  %v149 = vpack.c.b16 %v119, %v117
  %v150 = vpack.c.b16 %v122, %v120
  %v151 = vpack.c.b16 %v123, %v121
  %v152 = vpack.c.b16 %v126, %v124
  %v153 = vpack.c.b16 %v127, %v125
  %v154 = vpack.c.b16 %v130, %v128
  %v155 = vpack.c.b16 %v131, %v129
  %v156 = vpack.c.b16 %v134, %v132
  %v157 = vpack.c.b16 %v135, %v133
  %v158 = vpack.c.b16 %v138, %v136
  %v159 = vpack.c.b16 %v139, %v137
  %v160 = vpack.c.b16 %v142, %v140
  %v161 = vpack.c.b16 %v143, %v141
  %v162 = vpack.c.b16 %v146, %v144
  %v163 = vpack.c.b16 %v147, %v145
  %180 = vmatprep.subr.bf16.mxu0 %v163
  %181 = vmatpush1.bf16.msra.mxu0 %v162
  %182 = vmatprep.subr.bf16.mxu0 %v161
  %183 = vmatpush1.bf16.msra.mxu0 %v160
  %184 = vmatprep.subr.bf16.mxu0 %v159
  %185 = vmatpush1.bf16.msra.mxu0 %v158
  %186 = vmatprep.subr.bf16.mxu0 %v157
  %187 = vmatpush1.bf16.msra.mxu0 %v156
  %188 = vmatprep.subr.bf16.mxu0 %v155
  %189 = vmatpush1.bf16.msra.mxu0 %v154
  %190 = vmatprep.subr.bf16.mxu0 %v153
  %191 = vmatpush1.bf16.msra.mxu0 %v152
  %192 = vmatprep.subr.bf16.mxu0 %v151
  %193 = vmatpush1.bf16.msra.mxu0 %v150
  %194 = vmatprep.subr.bf16.mxu0 %v149
  %195 = vmatpush1.bf16.msra.mxu0 %v148
  %196 = vmatprep.subr.bf16.mxu0 0
  %197 = vmatpush2.bf16.msra.mxu0 0
  %198 = vmatprep.subr.bf16.mxu0 0
  %199 = vmatpush2.bf16.msra.mxu0 0
  %200 = vmatprep.subr.bf16.mxu0 0
  %201 = vmatpush2.bf16.msra.mxu0 0
  %202 = vmatprep.subr.bf16.mxu0 0
  %203 = vmatpush2.bf16.msra.mxu0 0
  %204 = vmatprep.subr.bf16.mxu0 0
  %205 = vmatpush2.bf16.msra.mxu0 0
  %206 = vmatprep.subr.bf16.mxu0 0
  %207 = vmatpush2.bf16.msra.mxu0 0
  %208 = vmatprep.subr.bf16.mxu0 0
  %209 = vmatpush2.bf16.msra.mxu0 0
  %210 = vmatprep.subr.bf16.mxu0 0
  %211 = vmatpush2.bf16.msra.mxu0 0
  %212 = vmatprep.mubr.bf16.mxu0 0
  %213 = vmatmul.mubr.bf16.gmra.mxu0 %v71
  %v214 = vpop.f32.mrf.mxu0
  %v215 = vadd.f32 %v93, %v214
  %v216 = vpop.f32.mrf.mxu0
  %v217 = vadd.f32 %v97, %v216
  %v218 = vpop.f32.mrf.mxu0
  %v219 = vadd.f32 %v93, %v218
  %v220 = vpop.f32.mrf.mxu0
  %v221 = vadd.f32 %v97, %v220
  %222 = vdwg.mxu0
  %v223 = vmax.f32 %v215, 0.0
  %v224 = vmax.f32 %v217, 0.0
  %v225 = vmax.f32 %v219, 0.0
  %v226 = vmax.f32 %v221, 0.0
  %v227 = vpack.c.bf16 %v225, %v223
  %v228 = vpack.c.bf16 %v226, %v224
  %v231 = vunpack.c.l.b16 %v227
  %v232 = vunpack.c.l.b16 %v228
  %v233 = vunpack.c.h.b16 %v227
  %v234 = vunpack.c.h.b16 %v228
  %v235 = vpack.c.b16 %v232, %v231
  %v236 = vpack.c.b16 %v234, %v233
  %239 = vst [vmem:[%s5] sm:$0xff] %v235
  %240 = vst [vmem:[%s5 + $0x8] sm:$0xff] %v236
  // Predicated region
  $region22: #{encoder_wrapper_forward.35} parent=0 // pred_check
    _
  $region23: #{encoder_wrapper_forward.35} parent=0 // pred_check_branch
    %242 = sbr.rel (0) target = $region25
  $region24: #{encoder_wrapper_forward.35} parent=0 // pred_region
    _
  $region25: #{encoder_wrapper_forward.35} parent=0 // pred_fallthru
    _
  // Predicated region
  $region26: #{encoder_wrapper_forward.35} parent=0 // pred_check
    _
  $region27: #{encoder_wrapper_forward.35} parent=0 // pred_check_branch
    %244 = sbr.rel (0) target = $region29
  $region28: #{encoder_wrapper_forward.35} parent=0 // pred_region
    _
  $region29: #{encoder_wrapper_forward.35} parent=0 // pred_fallthru
    _

// kernel: encoder_wrapper_forward.36
$region0: #{encoder_wrapper_forward.36}
  #allocation0 [shape = 'u32[]', space=smem, size = 0x4, offset = 0x4, fixed_abs, tag = 'smem constant byte address 0x4 - core index']
  #allocation1 [shape = 'u32[144,128]{1,0:T(1,128)}', space=vmem, size = 0x12000, scoped, tag = 'internal scratch']
  %s0 = inlined_call_operand.vmem [shape: bf16[16,256], index: 0, kind: input, shape index: {}]
  %s1 = inlined_call_operand.vmem [shape: bf16[256,128], index: 1, kind: input, shape index: {}]
  %s2 = inlined_call_operand.vmem [shape: f32[1,128], index: 2, kind: input, shape index: {}]
  %s3 = inlined_call_operand.vmem [shape: bf16[16,128], index: 3, kind: input, shape index: {}]
  %s4 = inlined_call_operand.vmem [shape: bf16[16,128], index: 4, kind: output, shape index: {}]
  %s5 = sld [smem:[#allocation0]]
  $region26: #{encoder_wrapper_forward.36} parent=0
    _
  %s7 = ssub.s32 1, %s5
  %s8 = scalar_select 0, %s7, %s5
  // Predicated region
  $region2: #{encoder_wrapper_forward.36} parent=0 // pred_check
    _
  $region3: #{encoder_wrapper_forward.36} parent=0 // pred_check_branch
    %10 = sbr.rel (0) target = $region5
  $region4: #{encoder_wrapper_forward.36} parent=0 // pred_region
    _
  $region5: #{encoder_wrapper_forward.36} parent=0 // pred_fallthru
    _
  // Predicated region
  $region6: #{encoder_wrapper_forward.36} parent=0 // pred_check
    _
  $region7: #{encoder_wrapper_forward.36} parent=0 // pred_check_branch
    %12 = sbr.rel (0) target = $region9
  $region8: #{encoder_wrapper_forward.36} parent=0 // pred_region
    _
  $region9: #{encoder_wrapper_forward.36} parent=0 // pred_fallthru
    _
  // Predicated region
  $region10: #{encoder_wrapper_forward.36} parent=0 // pred_check
    _
  $region11: #{encoder_wrapper_forward.36} parent=0 // pred_check_branch
    %14 = sbr.rel (0) target = $region13
  $region12: #{encoder_wrapper_forward.36} parent=0 // pred_region
    _
  $region13: #{encoder_wrapper_forward.36} parent=0 // pred_fallthru
    _
  // Predicated region
  $region14: #{encoder_wrapper_forward.36} parent=0 // pred_check
    _
  $region15: #{encoder_wrapper_forward.36} parent=0 // pred_check_branch
    %16 = sbr.rel (0) target = $region17
  $region16: #{encoder_wrapper_forward.36} parent=0 // pred_region
    _
  $region17: #{encoder_wrapper_forward.36} parent=0 // pred_fallthru
    _
  %v18 = vld [vmem:[%s0] sm:$0xff]
  %v19 = vld [vmem:[%s0 + $0x8] sm:$0xff]
  %v20 = vld [vmem:[%s1] sm:$0xf]
  %v21 = vld [vmem:[%s1 + $0x4] sm:$0xf]
  %v22 = vld [vmem:[%s1 + $0x8] sm:$0xf]
  %v23 = vld [vmem:[%s1 + $0xc] sm:$0xf]
  %v24 = vld [vmem:[%s1 + $0x10] sm:$0xf]
  %v25 = vld [vmem:[%s1 + $0x14] sm:$0xf]
  %v26 = vld [vmem:[%s1 + $0x18] sm:$0xf]
  %v27 = vld [vmem:[%s1 + $0x1c] sm:$0xf]
  %v28 = vld [vmem:[%s1 + $0x20] sm:$0xf]
  %v29 = vld [vmem:[%s1 + $0x24] sm:$0xf]
  %v30 = vld [vmem:[%s1 + $0x28] sm:$0xf]
  %v31 = vld [vmem:[%s1 + $0x2c] sm:$0xf]
  %v32 = vld [vmem:[%s1 + $0x30] sm:$0xf]
  %v33 = vld [vmem:[%s1 + $0x34] sm:$0xf]
  %v34 = vld [vmem:[%s1 + $0x38] sm:$0xf]
  %v35 = vld [vmem:[%s1 + $0x3c] sm:$0xf]
  %v36 = vld [vmem:[%s1 + $0x40] sm:$0xf]
  %v37 = vld [vmem:[%s1 + $0x44] sm:$0xf]
  %v38 = vld [vmem:[%s1 + $0x48] sm:$0xf]
  %v39 = vld [vmem:[%s1 + $0x4c] sm:$0xf]
  %v40 = vld [vmem:[%s1 + $0x50] sm:$0xf]
  %v41 = vld [vmem:[%s1 + $0x54] sm:$0xf]
  %v42 = vld [vmem:[%s1 + $0x58] sm:$0xf]
  %v43 = vld [vmem:[%s1 + $0x5c] sm:$0xf]
  %v44 = vld [vmem:[%s1 + $0x60] sm:$0xf]
  %v45 = vld [vmem:[%s1 + $0x64] sm:$0xf]
  %v46 = vld [vmem:[%s1 + $0x68] sm:$0xf]
  %v47 = vld [vmem:[%s1 + $0x6c] sm:$0xf]
  %v48 = vld [vmem:[%s1 + $0x70] sm:$0xf]
  %v49 = vld [vmem:[%s1 + $0x74] sm:$0xf]
  %v50 = vld [vmem:[%s1 + $0x78] sm:$0xf]
  %v51 = vld [vmem:[%s1 + $0x7c] sm:$0xf]
  %v52 = vld [vmem:[%s2] sm:$0x1]
  %v54 = vlaneseq
  %v55 = vshrl.u32 %v54, 7
  %v56 = vsub.s32 0, %v55
  %v57 = vrot.slane %v52, %v56
  %v61 = vunpack.c.l.b16 %v18
  %v62 = vunpack.c.h.b16 %v18
  %v63 = vunpack.c.l.b16 %v19
  %v64 = vunpack.c.h.b16 %v19
  %v65 = vpack.c.b16 %v63, %v61
  %v66 = vpack.c.b16 %v64, %v62
  %v101 = vunpack.c.l.b16 %v20
  %v102 = vunpack.c.l.b16 %v21
  %v103 = vunpack.c.l.b16 %v22
  %v104 = vunpack.c.l.b16 %v23
  %v105 = vunpack.c.l.b16 %v24
  %v106 = vunpack.c.l.b16 %v25
  %v107 = vunpack.c.l.b16 %v26
  %v108 = vunpack.c.l.b16 %v27
  %v109 = vunpack.c.l.b16 %v28
  %v110 = vunpack.c.l.b16 %v29
  %v111 = vunpack.c.l.b16 %v30
  %v112 = vunpack.c.l.b16 %v31
  %v113 = vunpack.c.l.b16 %v32
  %v114 = vunpack.c.l.b16 %v33
  %v115 = vunpack.c.l.b16 %v34
  %v116 = vunpack.c.l.b16 %v35
  %v117 = vunpack.c.l.b16 %v36
  %v118 = vunpack.c.l.b16 %v37
  %v119 = vunpack.c.l.b16 %v38
  %v120 = vunpack.c.l.b16 %v39
  %v121 = vunpack.c.l.b16 %v40
  %v122 = vunpack.c.l.b16 %v41
  %v123 = vunpack.c.l.b16 %v42
  %v124 = vunpack.c.l.b16 %v43
  %v125 = vunpack.c.l.b16 %v44
  %v126 = vunpack.c.l.b16 %v45
  %v127 = vunpack.c.l.b16 %v46
  %v128 = vunpack.c.l.b16 %v47
  %v129 = vunpack.c.l.b16 %v48
  %v130 = vunpack.c.l.b16 %v49
  %v131 = vunpack.c.l.b16 %v50
  %v132 = vunpack.c.l.b16 %v51
  %v133 = vpack.c.b16 %v102, %v101
  %v134 = vpack.c.b16 %v104, %v103
  %v135 = vpack.c.b16 %v106, %v105
  %v136 = vpack.c.b16 %v108, %v107
  %v137 = vpack.c.b16 %v110, %v109
  %v138 = vpack.c.b16 %v112, %v111
  %v139 = vpack.c.b16 %v114, %v113
  %v140 = vpack.c.b16 %v116, %v115
  %v141 = vpack.c.b16 %v118, %v117
  %v142 = vpack.c.b16 %v120, %v119
  %v143 = vpack.c.b16 %v122, %v121
  %v144 = vpack.c.b16 %v124, %v123
  %v145 = vpack.c.b16 %v126, %v125
  %v146 = vpack.c.b16 %v128, %v127
  %v147 = vpack.c.b16 %v130, %v129
  %v148 = vpack.c.b16 %v132, %v131
  %165 = vmatprep.subr.bf16.mxu0 0
  %166 = vmatpush1.bf16.msra.mxu0 %v140
  %167 = vmatprep.subr.bf16.mxu0 0
  %168 = vmatpush1.bf16.msra.mxu0 %v139
  %169 = vmatprep.subr.bf16.mxu0 0
  %170 = vmatpush1.bf16.msra.mxu0 %v138
  %171 = vmatprep.subr.bf16.mxu0 0
  %172 = vmatpush1.bf16.msra.mxu0 %v137
  %173 = vmatprep.subr.bf16.mxu0 0
  %174 = vmatpush1.bf16.msra.mxu0 %v136
  %175 = vmatprep.subr.bf16.mxu0 0
  %176 = vmatpush1.bf16.msra.mxu0 %v135
  %177 = vmatprep.subr.bf16.mxu0 0
  %178 = vmatpush1.bf16.msra.mxu0 %v134
  %179 = vmatprep.subr.bf16.mxu0 0
  %180 = vmatpush1.bf16.msra.mxu0 %v133
  %181 = vmatprep.subr.bf16.mxu0 0
  %182 = vmatpush2.bf16.msra.mxu0 %v148
  %183 = vmatprep.subr.bf16.mxu0 0
  %184 = vmatpush2.bf16.msra.mxu0 %v147
  %185 = vmatprep.subr.bf16.mxu0 0
  %186 = vmatpush2.bf16.msra.mxu0 %v146
  %187 = vmatprep.subr.bf16.mxu0 0
  %188 = vmatpush2.bf16.msra.mxu0 %v145
  %189 = vmatprep.subr.bf16.mxu0 0
  %190 = vmatpush2.bf16.msra.mxu0 %v144
  %191 = vmatprep.subr.bf16.mxu0 0
  %192 = vmatpush2.bf16.msra.mxu0 %v143
  %193 = vmatprep.subr.bf16.mxu0 0
  %194 = vmatpush2.bf16.msra.mxu0 %v142
  %195 = vmatprep.subr.bf16.mxu0 0
  %196 = vmatpush2.bf16.msra.mxu0 %v141
  %197 = vmatprep.mubr.bf16.mxu0 %v66
  %198 = vmatmul.mubr.bf16.gmra.mxu0 %v65
  %v199 = vpop.f32.mrf.mxu0
  %v200 = vadd.f32 %v57, %v199
  %v201 = vpop.f32.mrf.mxu0
  %v202 = vpop.f32.mrf.mxu0
  %v203 = vadd.f32 %v57, %v202
  %v204 = vpop.f32.mrf.mxu0
  %205 = vdwg.mxu0
  %v206 = vld [vmem:[%s3] sm:$0xf]
  %v207 = vld [vmem:[%s3 + $0x4] sm:$0xf]
  %v208 = vunpack.c.l.bf16 %v206
  %v209 = vunpack.c.l.bf16 %v207
  %v210 = vadd.f32 %v200, %v208
  %v211 = vadd.f32 %v203, %v209
  %v212 = vpack.c.bf16 %v211, %v210
  %v214 = vunpack.c.l.b16 %v212
  %v215 = vunpack.c.h.b16 %v212
  %v216 = vpack.c.b16 %v214, %v214
  %v217 = vpack.c.b16 %v215, %v215
  %220 = vst [vmem:[%s4] sm:$0xf] %v216
  %221 = vst [vmem:[%s4 + $0x4] sm:$0xf] %v217
  // Predicated region
  $region18: #{encoder_wrapper_forward.36} parent=0 // pred_check
    _
  $region19: #{encoder_wrapper_forward.36} parent=0 // pred_check_branch
    %223 = sbr.rel (0) target = $region21
  $region20: #{encoder_wrapper_forward.36} parent=0 // pred_region
    _
  $region21: #{encoder_wrapper_forward.36} parent=0 // pred_fallthru
    _
  // Predicated region
  $region22: #{encoder_wrapper_forward.36} parent=0 // pred_check
    _
  $region23: #{encoder_wrapper_forward.36} parent=0 // pred_check_branch
    %225 = sbr.rel (0) target = $region25
  $region24: #{encoder_wrapper_forward.36} parent=0 // pred_region
    _
  $region25: #{encoder_wrapper_forward.36} parent=0 // pred_fallthru
    _

</llo_original>
